<compile_context>
chip_gen: v6e
topology: v6e:2x2x1
jax: 0.10.0
libtpu: 0.0.40
codegen_flags: <defaults>
</compile_context>

<pallas_src>
import jax
import jax.numpy as jnp
from jax.experimental import pallas as pl
from jax.experimental.pallas import tpu as pltpu


IN_DIM = 28 * 28          # 784
H1, H2, H3 = 1024, 512, 256
OUT_PAD = 128             # final layer padded from N=1 to lane-dense N=128
NEG_SLOPE = 0.2           # nn.LeakyReLU(0.2) in gan.py


def _round_up(x, m):
    return ((x + m - 1) // m) * m


def _leaky_relu(x, negative_slope=NEG_SLOPE):
    return jnp.where(x > 0, x, negative_slope * x)


def discriminator_kernel(x_ref,
                         w1_ref, b1_ref,
                         w2_ref, b2_ref,
                         w3_ref, b3_ref,
                         w4_ref, b4_ref,
                         o_ref):
    # fp32 -> bf16 cast fused into the kernel (review item 1).
    x = x_ref[...].astype(jnp.bfloat16)

    # Layer 1: (TB, 784) @ (784, 1024), bf16 MXU inputs, fp32 accumulate.
    # TODO(synk): K=784 is not a multiple of 128; padding K to 896/1024 was
    # deliberately skipped (few-% MXU win, would reintroduce a wrapper pad pass).
    h = jnp.dot(x, w1_ref[...], preferred_element_type=jnp.float32)
    h = _leaky_relu(h + b1_ref[...]).astype(jnp.bfloat16)

    # Layer 2: (TB, 1024) @ (1024, 512)
    h = jnp.dot(h, w2_ref[...], preferred_element_type=jnp.float32)
    h = _leaky_relu(h + b2_ref[...]).astype(jnp.bfloat16)

    # Layer 3: (TB, 512) @ (512, 256)
    h = jnp.dot(h, w3_ref[...], preferred_element_type=jnp.float32)
    h = _leaky_relu(h + b3_ref[...]).astype(jnp.bfloat16)

    # Layer 4 (padded to 128 output lanes; real logit lives in column 0).
    logits = jnp.dot(h, w4_ref[...], preferred_element_type=jnp.float32)
    logits = logits + b4_ref[...]

    # Sigmoid: exp and approximate reciprocal both run on the EUP slot.
    sig = pl.reciprocal(1.0 + jnp.exp(-logits), approx=True)
    o_ref[...] = sig.astype(o_ref.dtype)          # lane-dense bf16 store


def discriminator_forward(x_nchw, params, block_b=512):
    """x_nchw: (B, 1, 28, 28) float32. Returns (B, 1) float32 probabilities."""
    B = x_nchw.shape[0]
    # No dtype cast here: fp32 goes straight into the kernel DMA (cast is fused).
    x = x_nchw.reshape(B, IN_DIM)

    # Batch tile selection: multiple of 16 (bf16 sublane packing), capped at
    # block_b, and always >= 2 grid blocks so the "parallel" axis can use both
    # v7x TensorCores even at small batch (review items 2 & 4).
    b16 = _round_up(B, 16)
    if b16 <= block_b:
        b_pad = max(_round_up(B, 32), 32)
        tb = b_pad // 2
    else:
        tb = block_b
        b_pad = _round_up(B, tb)
    if b_pad != B:
        x = jnp.pad(x, ((0, b_pad - B), (0, 0)))
    num_blocks = b_pad // tb

    (w1, b1), (w2, b2), (w3, b3), (w4, b4) = params

    def resident_spec(shape):
        # Constant index_map -> block stays VMEM-resident across grid steps;
        # Buffered(1) drops the useless second pipeline buffer (review item 3).
        return pl.BlockSpec(shape, lambda i: (0, 0), pipeline_mode=pl.Buffered(1))

    out = pl.pallas_call(
        discriminator_kernel,
        out_shape=jax.ShapeDtypeStruct((b_pad, OUT_PAD), jnp.bfloat16),
        grid=(num_blocks,),
        in_specs=[
            pl.BlockSpec((tb, IN_DIM), lambda i: (i, 0)),
            resident_spec(w1.shape), resident_spec(b1.shape),
            resident_spec(w2.shape), resident_spec(b2.shape),
            resident_spec(w3.shape), resident_spec(b3.shape),
            resident_spec(w4.shape), resident_spec(b4.shape),
        ],
        out_specs=pl.BlockSpec((tb, OUT_PAD), lambda i: (i, 0)),
        compiler_params=pltpu.CompilerParams(
            dimension_semantics=("parallel",),
            vmem_limit_bytes=32 << 20,
        ),
    )(x, w1, b1, w2, b2, w3, b3, w4, b4)

    return out[:B, :1].astype(jnp.float32)


def init_params(key):
    """Deterministic init mimicking nn.Linear's uniform(-1/sqrt(in), 1/sqrt(in)).

    Weights stored as bf16 (in, out) == W.T of PyTorch's (out, in); biases as
    fp32 (1, out).  The final layer is zero-padded from 1 to 128 output lanes.
    """
    dims = [(IN_DIM, H1), (H1, H2), (H2, H3), (H3, 1)]
    params = []
    for layer_idx, (fan_in, fan_out) in enumerate(dims):
        key, kw, kb = jax.random.split(key, 3)
        bound = 1.0 / jnp.sqrt(jnp.float32(fan_in))
        w = jax.random.uniform(kw, (fan_in, fan_out), jnp.float32, -bound, bound)
        b = jax.random.uniform(kb, (1, fan_out), jnp.float32, -bound, bound)
        if layer_idx == len(dims) - 1:
            # Pad N=1 -> N=128 so the last matmul and the output store are lane-dense.
            w = jnp.pad(w, ((0, 0), (0, OUT_PAD - fan_out)))
            b = jnp.pad(b, ((0, 0), (0, OUT_PAD - fan_out)))
        params.append((w.astype(jnp.bfloat16), b.astype(jnp.float32)))
    return params


def reference_forward(x_nchw, params):
    """Pure-JAX reference with the same bf16-weight / fp32-accumulate / bf16-output numerics."""
    x = x_nchw.reshape(x_nchw.shape[0], IN_DIM).astype(jnp.bfloat16)
    (w1, b1), (w2, b2), (w3, b3), (w4, b4) = params

    def layer(h, w, b):
        a = jnp.dot(h, w, preferred_element_type=jnp.float32) + b
        return _leaky_relu(a).astype(jnp.bfloat16)

    h = layer(x, w1, b1)
    h = layer(h, w2, b2)
    h = layer(h, w3, b3)
    logits = jnp.dot(h, w4, preferred_element_type=jnp.float32) + b4
    probs = jax.nn.sigmoid(logits).astype(jnp.bfloat16).astype(jnp.float32)
    return probs[:, :1]


if __name__ == "__main__":
    key = jax.random.PRNGKey(0)
    kx, kp = jax.random.split(key)

    B = 2
    x = jax.random.normal(kx, (B, 1, 28, 28), dtype=jnp.float32)  # NCHW like PyTorch
    params = init_params(kp)

    out = discriminator_forward(x, params)
    out = jax.block_until_ready(out)

    ref = reference_forward(x, params)
    assert out.shape == (B, 1)
    # bf16 matmuls/output match the reference; tolerance covers the EUP
    # approximate reciprocal in the sigmoid plus bf16 output rounding.
    assert jnp.allclose(out, ref, atol=1e-2, rtol=1e-2), (out, ref)

    print("KERNEL_OK")
</pallas_src>

<mosaic_0001>
module attributes {stable_mosaic.version = 11 : i64} {
  func.func @discriminator_kernel(%arg0: i32, %arg1: memref<16x784xf32, #tpu.memory_space<vmem>>, %arg2: memref<784x1024xbf16, #tpu.memory_space<vmem>>, %arg3: memref<1x1024xf32, #tpu.memory_space<vmem>>, %arg4: memref<1024x512xbf16, #tpu.memory_space<vmem>>, %arg5: memref<1x512xf32, #tpu.memory_space<vmem>>, %arg6: memref<512x256xbf16, #tpu.memory_space<vmem>>, %arg7: memref<1x256xf32, #tpu.memory_space<vmem>>, %arg8: memref<256x128xbf16, #tpu.memory_space<vmem>>, %arg9: memref<1x128xf32, #tpu.memory_space<vmem>>, %arg10: memref<16x128xbf16, #tpu.memory_space<vmem>>) attributes {dimension_semantics = [#tpu.dimension_semantics<parallel>], iteration_bounds = array<i64: 2>, scalar_prefetch = 0 : i64, scratch_operands = 0 : i64, tpu.core_type = #tpu.core_type<tc>, window_params = [{transform_indices = @transform_0, window_bounds = array<i64: 16, 784>}, {pipeline_mode = #tpu.pipeline_mode<synchronous>, transform_indices = @transform_1, window_bounds = array<i64: 784, 1024>}, {pipeline_mode = #tpu.pipeline_mode<synchronous>, transform_indices = @transform_2, window_bounds = array<i64: 1, 1024>}, {pipeline_mode = #tpu.pipeline_mode<synchronous>, transform_indices = @transform_3, window_bounds = array<i64: 1024, 512>}, {pipeline_mode = #tpu.pipeline_mode<synchronous>, transform_indices = @transform_4, window_bounds = array<i64: 1, 512>}, {pipeline_mode = #tpu.pipeline_mode<synchronous>, transform_indices = @transform_5, window_bounds = array<i64: 512, 256>}, {pipeline_mode = #tpu.pipeline_mode<synchronous>, transform_indices = @transform_6, window_bounds = array<i64: 1, 256>}, {pipeline_mode = #tpu.pipeline_mode<synchronous>, transform_indices = @transform_7, window_bounds = array<i64: 256, 128>}, {pipeline_mode = #tpu.pipeline_mode<synchronous>, transform_indices = @transform_8, window_bounds = array<i64: 1, 128>}, {transform_indices = @transform_9, window_bounds = array<i64: 16, 128>}]} {
    %c0 = arith.constant 0 : index
    %c0_0 = arith.constant 0 : index
    %0 = vector.load %arg1[%c0, %c0_0] : memref<16x784xf32, #tpu.memory_space<vmem>>, vector<16x784xf32>
    %1 = arith.truncf %0 : vector<16x784xf32> to vector<16x784xbf16>
    %c0_1 = arith.constant 0 : index
    %c0_2 = arith.constant 0 : index
    %2 = vector.load %arg2[%c0_1, %c0_2] : memref<784x1024xbf16, #tpu.memory_space<vmem>>, vector<784x1024xbf16>
    %cst = arith.constant dense<0.000000e+00> : vector<16x1024xf32>
    %3 = tpu.matmul %1, %2, %cst {dimension_numbers = #tpu.dot_dimension_numbers<[1], [0], [0], [1], [0, 0, 1, 1], [], []>} : vector<16x784xbf16>, vector<784x1024xbf16>, vector<16x1024xf32> -> vector<16x1024xf32>
    %c0_3 = arith.constant 0 : index
    %c0_4 = arith.constant 0 : index
    %4 = vector.load %arg3[%c0_3, %c0_4] : memref<1x1024xf32, #tpu.memory_space<vmem>>, vector<1x1024xf32>
    %5 = vector.broadcast %4 : vector<1x1024xf32> to vector<16x1024xf32>
    %6 = arith.addf %3, %5 : vector<16x1024xf32>
    %cst_5 = arith.constant 0.000000e+00 : f32
    %7 = vector.broadcast %cst_5 : f32 to vector<16x1024xf32>
    %8 = arith.cmpf ogt, %6, %7 : vector<16x1024xf32>
    %cst_6 = arith.constant 2.000000e-01 : f32
    %9 = vector.broadcast %cst_6 : f32 to vector<16x1024xf32>
    %10 = arith.mulf %9, %6 : vector<16x1024xf32>
    %11 = arith.select %8, %6, %10 : vector<16x1024xi1>, vector<16x1024xf32>
    %12 = arith.truncf %11 : vector<16x1024xf32> to vector<16x1024xbf16>
    %c0_7 = arith.constant 0 : index
    %c0_8 = arith.constant 0 : index
    %13 = vector.load %arg4[%c0_7, %c0_8] : memref<1024x512xbf16, #tpu.memory_space<vmem>>, vector<1024x512xbf16>
    %cst_9 = arith.constant dense<0.000000e+00> : vector<16x512xf32>
    %14 = tpu.matmul %12, %13, %cst_9 {dimension_numbers = #tpu.dot_dimension_numbers<[1], [0], [0], [1], [0, 0, 1, 1], [], []>} : vector<16x1024xbf16>, vector<1024x512xbf16>, vector<16x512xf32> -> vector<16x512xf32>
    %c0_10 = arith.constant 0 : index
    %c0_11 = arith.constant 0 : index
    %15 = vector.load %arg5[%c0_10, %c0_11] : memref<1x512xf32, #tpu.memory_space<vmem>>, vector<1x512xf32>
    %16 = vector.broadcast %15 : vector<1x512xf32> to vector<16x512xf32>
    %17 = arith.addf %14, %16 : vector<16x512xf32>
    %cst_12 = arith.constant 0.000000e+00 : f32
    %18 = vector.broadcast %cst_12 : f32 to vector<16x512xf32>
    %19 = arith.cmpf ogt, %17, %18 : vector<16x512xf32>
    %cst_13 = arith.constant 2.000000e-01 : f32
    %20 = vector.broadcast %cst_13 : f32 to vector<16x512xf32>
    %21 = arith.mulf %20, %17 : vector<16x512xf32>
    %22 = arith.select %19, %17, %21 : vector<16x512xi1>, vector<16x512xf32>
    %23 = arith.truncf %22 : vector<16x512xf32> to vector<16x512xbf16>
    %c0_14 = arith.constant 0 : index
    %c0_15 = arith.constant 0 : index
    %24 = vector.load %arg6[%c0_14, %c0_15] : memref<512x256xbf16, #tpu.memory_space<vmem>>, vector<512x256xbf16>
    %cst_16 = arith.constant dense<0.000000e+00> : vector<16x256xf32>
    %25 = tpu.matmul %23, %24, %cst_16 {dimension_numbers = #tpu.dot_dimension_numbers<[1], [0], [0], [1], [0, 0, 1, 1], [], []>} : vector<16x512xbf16>, vector<512x256xbf16>, vector<16x256xf32> -> vector<16x256xf32>
    %c0_17 = arith.constant 0 : index
    %c0_18 = arith.constant 0 : index
    %26 = vector.load %arg7[%c0_17, %c0_18] : memref<1x256xf32, #tpu.memory_space<vmem>>, vector<1x256xf32>
    %27 = vector.broadcast %26 : vector<1x256xf32> to vector<16x256xf32>
    %28 = arith.addf %25, %27 : vector<16x256xf32>
    %cst_19 = arith.constant 0.000000e+00 : f32
    %29 = vector.broadcast %cst_19 : f32 to vector<16x256xf32>
    %30 = arith.cmpf ogt, %28, %29 : vector<16x256xf32>
    %cst_20 = arith.constant 2.000000e-01 : f32
    %31 = vector.broadcast %cst_20 : f32 to vector<16x256xf32>
    %32 = arith.mulf %31, %28 : vector<16x256xf32>
    %33 = arith.select %30, %28, %32 : vector<16x256xi1>, vector<16x256xf32>
    %34 = arith.truncf %33 : vector<16x256xf32> to vector<16x256xbf16>
    %c0_21 = arith.constant 0 : index
    %c0_22 = arith.constant 0 : index
    %35 = vector.load %arg8[%c0_21, %c0_22] : memref<256x128xbf16, #tpu.memory_space<vmem>>, vector<256x128xbf16>
    %cst_23 = arith.constant dense<0.000000e+00> : vector<16x128xf32>
    %36 = tpu.matmul %34, %35, %cst_23 {dimension_numbers = #tpu.dot_dimension_numbers<[1], [0], [0], [1], [0, 0, 1, 1], [], []>} : vector<16x256xbf16>, vector<256x128xbf16>, vector<16x128xf32> -> vector<16x128xf32>
    %c0_24 = arith.constant 0 : index
    %c0_25 = arith.constant 0 : index
    %37 = vector.load %arg9[%c0_24, %c0_25] : memref<1x128xf32, #tpu.memory_space<vmem>>, vector<1x128xf32>
    %38 = vector.broadcast %37 : vector<1x128xf32> to vector<16x128xf32>
    %39 = arith.addf %36, %38 : vector<16x128xf32>
    %cst_26 = arith.constant 0.000000e+00 : f32
    %40 = vector.broadcast %cst_26 : f32 to vector<16x128xf32>
    %41 = arith.subf %40, %39 : vector<16x128xf32>
    %42 = math.exp %41 : vector<16x128xf32>
    %cst_27 = arith.constant 1.000000e+00 : f32
    %43 = vector.broadcast %cst_27 : f32 to vector<16x128xf32>
    %44 = arith.addf %43, %42 : vector<16x128xf32>
    %45 = tpu.reciprocal %44 {approx = true} : vector<16x128xf32> -> vector<16x128xf32>
    %46 = arith.truncf %45 : vector<16x128xf32> to vector<16x128xbf16>
    %c0_28 = arith.constant 0 : index
    %c0_29 = arith.constant 0 : index
    %47 = vector.load %arg10[%c0_28, %c0_29] : memref<16x128xbf16, #tpu.memory_space<vmem>>, vector<16x128xbf16>
    tpu.vector_store %arg10[%c0_28, %c0_29], %46 {strides = array<i32>} : memref<16x128xbf16, #tpu.memory_space<vmem>>, vector<16x128xbf16>,
    return
  }
  func.func @transform_0(%arg0: i32) -> (i32, i32) {
    %c0_i32 = arith.constant 0 : i32
    %c0_i32_0 = arith.constant 0 : i32
    return %arg0, %c0_i32 : i32, i32
  }
  func.func @transform_1(%arg0: i32) -> (i32, i32) {
    %c0_i32 = arith.constant 0 : i32
    %c0_i32_0 = arith.constant 0 : i32
    %c0_i32_1 = arith.constant 0 : i32
    return %c0_i32, %c0_i32_0 : i32, i32
  }
  func.func @transform_2(%arg0: i32) -> (i32, i32) {
    %c0_i32 = arith.constant 0 : i32
    %c0_i32_0 = arith.constant 0 : i32
    %c0_i32_1 = arith.constant 0 : i32
    return %c0_i32, %c0_i32_0 : i32, i32
  }
  func.func @transform_3(%arg0: i32) -> (i32, i32) {
    %c0_i32 = arith.constant 0 : i32
    %c0_i32_0 = arith.constant 0 : i32
    %c0_i32_1 = arith.constant 0 : i32
    return %c0_i32, %c0_i32_0 : i32, i32
  }
  func.func @transform_4(%arg0: i32) -> (i32, i32) {
    %c0_i32 = arith.constant 0 : i32
    %c0_i32_0 = arith.constant 0 : i32
    %c0_i32_1 = arith.constant 0 : i32
    return %c0_i32, %c0_i32_0 : i32, i32
  }
  func.func @transform_5(%arg0: i32) -> (i32, i32) {
    %c0_i32 = arith.constant 0 : i32
    %c0_i32_0 = arith.constant 0 : i32
    %c0_i32_1 = arith.constant 0 : i32
    return %c0_i32, %c0_i32_0 : i32, i32
  }
  func.func @transform_6(%arg0: i32) -> (i32, i32) {
    %c0_i32 = arith.constant 0 : i32
    %c0_i32_0 = arith.constant 0 : i32
    %c0_i32_1 = arith.constant 0 : i32
    return %c0_i32, %c0_i32_0 : i32, i32
  }
  func.func @transform_7(%arg0: i32) -> (i32, i32) {
    %c0_i32 = arith.constant 0 : i32
    %c0_i32_0 = arith.constant 0 : i32
    %c0_i32_1 = arith.constant 0 : i32
    return %c0_i32, %c0_i32_0 : i32, i32
  }
  func.func @transform_8(%arg0: i32) -> (i32, i32) {
    %c0_i32 = arith.constant 0 : i32
    %c0_i32_0 = arith.constant 0 : i32
    %c0_i32_1 = arith.constant 0 : i32
    return %c0_i32, %c0_i32_0 : i32, i32
  }
  func.func @transform_9(%arg0: i32) -> (i32, i32) {
    %c0_i32 = arith.constant 0 : i32
    %c0_i32_0 = arith.constant 0 : i32
    return %arg0, %c0_i32 : i32, i32
  }
}

</mosaic_0001>

<llo_original>
// kernel: tpu_custom_call.1
$region0: #{tpu_custom_call.1}
  #allocation0 [shape = 'u32[]', space=smem, size = 0x4, offset = 0x4, fixed_abs, tag = 'smem constant byte address 0x4 - core index']
  #allocation1 [shape = 'u32[144,128]{1,0:T(1,128)}', space=vmem, size = 0x12000, scoped, tag = 'internal scratch']
  %s0 = inlined_call_operand.hbm [shape: f32[32,784], index: 0, kind: input, shape index: {}]
  %s1 = inlined_call_operand.hbm [shape: bf16[784,1024], index: 1, kind: input, shape index: {}]
  %s2 = inlined_call_operand.hbm [shape: f32[1,1024], index: 2, kind: input, shape index: {}]
  %s3 = inlined_call_operand.hbm [shape: bf16[1024,512], index: 3, kind: input, shape index: {}]
  %s4 = inlined_call_operand.hbm [shape: f32[1,512], index: 4, kind: input, shape index: {}]
  %s5 = inlined_call_operand.hbm [shape: bf16[512,256], index: 5, kind: input, shape index: {}]
  %s6 = inlined_call_operand.hbm [shape: f32[1,256], index: 6, kind: input, shape index: {}]
  %s7 = inlined_call_operand.hbm [shape: bf16[256,128], index: 7, kind: input, shape index: {}]
  %s8 = inlined_call_operand.hbm [shape: f32[1,128], index: 8, kind: input, shape index: {}]
  %s9 = inlined_call_operand.hbm [shape: bf16[32,128], index: 9, kind: output, shape index: {}]
  %s10 = sld [smem:[#allocation0]]
  $region105: #{tpu_custom_call.1} parent=0
    _
  %s12 = ssub.s32 1, %s10
  %s13 = scalar_select 0, %s12, %s10
  $region1: #{tpu_custom_call.1} parent=0
    #allocation2 [shape = 'u8[114688]{0}', space=vmem, size = 0x1c000, scoped, tag = 'input window, operand 0']
    #allocation3 [shape = 's32[2]{0}', space=sflag, size = 0x8, scoped, tag = 'scoped memory for tpu_custom_call.1']
    #allocation4 [shape = 's32[2]{0}', space=sflag, size = 0x8, scoped, tag = 'scoped memory for tpu_custom_call.1']
    #allocation5 [shape = 'u8[1605632]{0}', space=vmem, size = 0x188000, scoped, tag = 'input window, operand 1, single buffered']
    #allocation6 [shape = 's32[1]{0}', space=sflag, size = 0x4, scoped, tag = 'scoped memory for tpu_custom_call.1']
    #allocation7 [shape = 'u8[4096]{0}', space=vmem, size = 0x1000, scoped, tag = 'input window, operand 2, single buffered']
    #allocation8 [shape = 'u8[1048576]{0}', space=vmem, size = 0x100000, scoped, tag = 'input window, operand 3, single buffered']
    #allocation9 [shape = 's32[1]{0}', space=sflag, size = 0x4, scoped, tag = 'scoped memory for tpu_custom_call.1']
    #allocation10 [shape = 'u8[2048]{0}', space=vmem, size = 0x800, scoped, tag = 'input window, operand 4, single buffered']
    #allocation11 [shape = 'u8[262144]{0}', space=vmem, size = 0x40000, scoped, tag = 'input window, operand 5, single buffered']
    #allocation12 [shape = 's32[1]{0}', space=sflag, size = 0x4, scoped, tag = 'scoped memory for tpu_custom_call.1']
    #allocation13 [shape = 'u8[1024]{0}', space=vmem, size = 0x400, scoped, tag = 'input window, operand 6, single buffered']
    #allocation14 [shape = 'u8[65536]{0}', space=vmem, size = 0x10000, scoped, tag = 'input window, operand 7, single buffered']
    #allocation15 [shape = 's32[1]{0}', space=sflag, size = 0x4, scoped, tag = 'scoped memory for tpu_custom_call.1']
    #allocation16 [shape = 'u8[512]{0}', space=vmem, size = 0x400, scoped, tag = 'input window, operand 8, single buffered']
    #allocation17 [shape = 'u8[8192]{0}', space=vmem, size = 0x2000, scoped, tag = 'output window, operand 0']
    %14 = vsyncpa [#allocation3], 0
    %s15 = scalar_lea.sflag [#allocation3], 1
    %16 = vsyncpa %s15, 0
    %17 = vsyncpa [#allocation6], 0
    %18 = vsyncpa [#allocation9], 0
    %19 = vsyncpa [#allocation12], 0
    %20 = vsyncpa [#allocation15], 0
    %21 = vsyncpa [#allocation4], 0
    %s22 = scalar_lea.sflag [#allocation4], 1
    %23 = vsyncpa %s22, 0
    loop: start=0, step=1, limit=4
    $region2: #{tpu_custom_call.1} parent=1 // loop_pre_header
      _
    $region3: #{tpu_custom_call.1} parent=1 // loop_header
      %s25 = sphi 0, %s29
      %p26 = scmp.ge.s32.totalorder %s25, 4
      %s35 = sphi 0, %s37
      %s38 = sphi 0, %s35
      %s39 = sphi 0, %s38
      %s55 = sphi 0, %s39
      %s59 = sphi 0, %s59
      %s61 = sphi 0, %s59
      %s62 = sphi 0, %s61
      %s76 = sphi 0, %s62
      %s80 = sphi 0, %s80
      %s82 = sphi 0, %s80
      %s83 = sphi 0, %s82
      %s97 = sphi 0, %s83
      %s101 = sphi 0, %s101
      %s103 = sphi 0, %s101
      %s104 = sphi 0, %s103
      %s118 = sphi 0, %s104
      %s122 = sphi 0, %s122
      %s124 = sphi 0, %s122
      %s125 = sphi 0, %s124
      %s139 = sphi 0, %s125
      %s143 = sphi 0, %s143
      %s145 = sphi 0, %s143
      %s146 = sphi 0, %s145
      %s160 = sphi 0, %s146
      %s164 = sphi 0, %s164
      %s166 = sphi 0, %s164
      %s167 = sphi 0, %s166
      %s181 = sphi 0, %s167
      %s185 = sphi 0, %s185
      %s187 = sphi 0, %s185
      %s188 = sphi 0, %s187
      %s202 = sphi 0, %s188
      %s206 = sphi 0, %s206
      %s208 = sphi 0, %s206
      %s209 = sphi 0, %s208
      %s223 = sphi 0, %s209
      %s229 = sphi 0, %s231
      %s232 = sphi 0, %s229
      %s233 = sphi 0, %s232
      %s249 = sphi 0, %s233
    $region4: #{tpu_custom_call.1} parent=1 // loop_header_branch
      %28 = sbr.rel (%p26) target = $region8
    $region5: #{tpu_custom_call.1} parent=1 // loop_body
      %s30 = ssub.s32 %s25, 1
      %s31 = ssub.s32 %s25, 2
      %s32 = sadd.s32 %s25, 1
      %s33 = ssub.s32 %s25, %s32
      %p34 = scmp.eq.s32.totalorder %s33, 0
      %s36 = sadd.s32 %s35, 1
      %s37 = scalar_select %p34, %s35, %s36
      %p40 = pneg %p34
      %p41 = scmp.eq.s32.totalorder %s25, 1
      %p42 = por %p40, %p41
      %p43 = scmp.ne.s32.totalorder %s35, %s38
      %p44 = scmp.eq.s32.totalorder %s25, 0
      %p45 = por %p43, %p44
      %p46 = scmp.ne.s32.totalorder %s35, %s38
      %p47 = scmp.eq.s32.totalorder %s30, 1
      %p48 = por %p46, %p47
      %p49 = scmp.ne.s32.totalorder %s38, %s39
      %p50 = scmp.eq.s32.totalorder %s30, 0
      %p51 = por %p49, %p50
      %p52 = scmp.ne.s32.totalorder %s38, %s39
      %p53 = scmp.eq.s32.totalorder %s31, 1
      %p54 = por %p52, %p53
      %p56 = scmp.ne.s32.totalorder %s39, %s55
      %p57 = scmp.eq.s32.totalorder %s31, 0
      %p58 = por %p56, %p57
      %s60 = sadd.s32 %s59, 1
      %p63 = scmp.eq.s32.totalorder %s25, 1
      %p64 = scmp.ne.s32.totalorder %s59, %s61
      %p65 = scmp.eq.s32.totalorder %s25, 0
      %p66 = por %p64, %p65
      %p67 = scmp.ne.s32.totalorder %s59, %s61
      %p68 = scmp.eq.s32.totalorder %s30, 1
      %p69 = por %p67, %p68
      %p70 = scmp.ne.s32.totalorder %s61, %s62
      %p71 = scmp.eq.s32.totalorder %s30, 0
      %p72 = por %p70, %p71
      %p73 = scmp.ne.s32.totalorder %s61, %s62
      %p74 = scmp.eq.s32.totalorder %s31, 1
      %p75 = por %p73, %p74
      %p77 = scmp.ne.s32.totalorder %s62, %s76
      %p78 = scmp.eq.s32.totalorder %s31, 0
      %p79 = por %p77, %p78
      %s81 = sadd.s32 %s80, 1
      %p84 = scmp.eq.s32.totalorder %s25, 1
      %p85 = scmp.ne.s32.totalorder %s80, %s82
      %p86 = scmp.eq.s32.totalorder %s25, 0
      %p87 = por %p85, %p86
      %p88 = scmp.ne.s32.totalorder %s80, %s82
      %p89 = scmp.eq.s32.totalorder %s30, 1
      %p90 = por %p88, %p89
      %p91 = scmp.ne.s32.totalorder %s82, %s83
      %p92 = scmp.eq.s32.totalorder %s30, 0
      %p93 = por %p91, %p92
      %p94 = scmp.ne.s32.totalorder %s82, %s83
      %p95 = scmp.eq.s32.totalorder %s31, 1
      %p96 = por %p94, %p95
      %p98 = scmp.ne.s32.totalorder %s83, %s97
      %p99 = scmp.eq.s32.totalorder %s31, 0
      %p100 = por %p98, %p99
      %s102 = sadd.s32 %s101, 1
      %p105 = scmp.eq.s32.totalorder %s25, 1
      %p106 = scmp.ne.s32.totalorder %s101, %s103
      %p107 = scmp.eq.s32.totalorder %s25, 0
      %p108 = por %p106, %p107
      %p109 = scmp.ne.s32.totalorder %s101, %s103
      %p110 = scmp.eq.s32.totalorder %s30, 1
      %p111 = por %p109, %p110
      %p112 = scmp.ne.s32.totalorder %s103, %s104
      %p113 = scmp.eq.s32.totalorder %s30, 0
      %p114 = por %p112, %p113
      %p115 = scmp.ne.s32.totalorder %s103, %s104
      %p116 = scmp.eq.s32.totalorder %s31, 1
      %p117 = por %p115, %p116
      %p119 = scmp.ne.s32.totalorder %s104, %s118
      %p120 = scmp.eq.s32.totalorder %s31, 0
      %p121 = por %p119, %p120
      %s123 = sadd.s32 %s122, 1
      %p126 = scmp.eq.s32.totalorder %s25, 1
      %p127 = scmp.ne.s32.totalorder %s122, %s124
      %p128 = scmp.eq.s32.totalorder %s25, 0
      %p129 = por %p127, %p128
      %p130 = scmp.ne.s32.totalorder %s122, %s124
      %p131 = scmp.eq.s32.totalorder %s30, 1
      %p132 = por %p130, %p131
      %p133 = scmp.ne.s32.totalorder %s124, %s125
      %p134 = scmp.eq.s32.totalorder %s30, 0
      %p135 = por %p133, %p134
      %p136 = scmp.ne.s32.totalorder %s124, %s125
      %p137 = scmp.eq.s32.totalorder %s31, 1
      %p138 = por %p136, %p137
      %p140 = scmp.ne.s32.totalorder %s125, %s139
      %p141 = scmp.eq.s32.totalorder %s31, 0
      %p142 = por %p140, %p141
      %s144 = sadd.s32 %s143, 1
      %p147 = scmp.eq.s32.totalorder %s25, 1
      %p148 = scmp.ne.s32.totalorder %s143, %s145
      %p149 = scmp.eq.s32.totalorder %s25, 0
      %p150 = por %p148, %p149
      %p151 = scmp.ne.s32.totalorder %s143, %s145
      %p152 = scmp.eq.s32.totalorder %s30, 1
      %p153 = por %p151, %p152
      %p154 = scmp.ne.s32.totalorder %s145, %s146
      %p155 = scmp.eq.s32.totalorder %s30, 0
      %p156 = por %p154, %p155
      %p157 = scmp.ne.s32.totalorder %s145, %s146
      %p158 = scmp.eq.s32.totalorder %s31, 1
      %p159 = por %p157, %p158
      %p161 = scmp.ne.s32.totalorder %s146, %s160
      %p162 = scmp.eq.s32.totalorder %s31, 0
      %p163 = por %p161, %p162
      %s165 = sadd.s32 %s164, 1
      %p168 = scmp.eq.s32.totalorder %s25, 1
      %p169 = scmp.ne.s32.totalorder %s164, %s166
      %p170 = scmp.eq.s32.totalorder %s25, 0
      %p171 = por %p169, %p170
      %p172 = scmp.ne.s32.totalorder %s164, %s166
      %p173 = scmp.eq.s32.totalorder %s30, 1
      %p174 = por %p172, %p173
      %p175 = scmp.ne.s32.totalorder %s166, %s167
      %p176 = scmp.eq.s32.totalorder %s30, 0
      %p177 = por %p175, %p176
      %p178 = scmp.ne.s32.totalorder %s166, %s167
      %p179 = scmp.eq.s32.totalorder %s31, 1
      %p180 = por %p178, %p179
      %p182 = scmp.ne.s32.totalorder %s167, %s181
      %p183 = scmp.eq.s32.totalorder %s31, 0
      %p184 = por %p182, %p183
      %s186 = sadd.s32 %s185, 1
      %p189 = scmp.eq.s32.totalorder %s25, 1
      %p190 = scmp.ne.s32.totalorder %s185, %s187
      %p191 = scmp.eq.s32.totalorder %s25, 0
      %p192 = por %p190, %p191
      %p193 = scmp.ne.s32.totalorder %s185, %s187
      %p194 = scmp.eq.s32.totalorder %s30, 1
      %p195 = por %p193, %p194
      %p196 = scmp.ne.s32.totalorder %s187, %s188
      %p197 = scmp.eq.s32.totalorder %s30, 0
      %p198 = por %p196, %p197
      %p199 = scmp.ne.s32.totalorder %s187, %s188
      %p200 = scmp.eq.s32.totalorder %s31, 1
      %p201 = por %p199, %p200
      %p203 = scmp.ne.s32.totalorder %s188, %s202
      %p204 = scmp.eq.s32.totalorder %s31, 0
      %p205 = por %p203, %p204
      %s207 = sadd.s32 %s206, 1
      %p210 = scmp.eq.s32.totalorder %s25, 1
      %p211 = scmp.ne.s32.totalorder %s206, %s208
      %p212 = scmp.eq.s32.totalorder %s25, 0
      %p213 = por %p211, %p212
      %p214 = scmp.ne.s32.totalorder %s206, %s208
      %p215 = scmp.eq.s32.totalorder %s30, 1
      %p216 = por %p214, %p215
      %p217 = scmp.ne.s32.totalorder %s208, %s209
      %p218 = scmp.eq.s32.totalorder %s30, 0
      %p219 = por %p217, %p218
      %p220 = scmp.ne.s32.totalorder %s208, %s209
      %p221 = scmp.eq.s32.totalorder %s31, 1
      %p222 = por %p220, %p221
      %p224 = scmp.ne.s32.totalorder %s209, %s223
      %p225 = scmp.eq.s32.totalorder %s31, 0
      %p226 = por %p224, %p225
      %s227 = ssub.s32 %s25, %s32
      %p228 = scmp.eq.s32.totalorder %s227, 0
      %s230 = sadd.s32 %s229, 1
      %s231 = scalar_select %p228, %s229, %s230
      %p234 = pneg %p228
      %p235 = scmp.eq.s32.totalorder %s25, 1
      %p236 = por %p234, %p235
      %p237 = scmp.ne.s32.totalorder %s229, %s232
      %p238 = scmp.eq.s32.totalorder %s25, 0
      %p239 = por %p237, %p238
      %p240 = scmp.ne.s32.totalorder %s229, %s232
      %p241 = scmp.eq.s32.totalorder %s30, 1
      %p242 = por %p240, %p241
      %p243 = scmp.ne.s32.totalorder %s232, %s233
      %p244 = scmp.eq.s32.totalorder %s30, 0
      %p245 = por %p243, %p244
      %p246 = scmp.ne.s32.totalorder %s232, %s233
      %p247 = scmp.eq.s32.totalorder %s31, 1
      %p248 = por %p246, %p247
      %p250 = scmp.ne.s32.totalorder %s233, %s249
      %p251 = scmp.eq.s32.totalorder %s31, 0
      %p252 = por %p250, %p251
      %p253 = scmp.le.s32.totalorder 1, %s25
      %p254 = scmp.lt.s32.totalorder %s25, 3
      %p255 = pnand %p253, %p254
      %p256 = pneg %p255
      // Predicated region
      $region9: #{tpu_custom_call.1} parent=5 // pred_check
        _
      $region10: #{tpu_custom_call.1} parent=5 // pred_check_branch
        %258 = sbr.rel (%p255) target = $region12
      $region11: #{tpu_custom_call.1} parent=5 // pred_region
        %s259 = ssub.s32 %s25, 1
        // Predicated region
        $region13: #{tpu_custom_call.1} parent=11 // pred_check
          %p260 = pneg %p72
        $region14: #{tpu_custom_call.1} parent=11 // pred_check_branch
          %262 = sbr.rel (%p260) target = $region16
        $region15: #{tpu_custom_call.1} parent=11 // pred_region
          %s264 = ssub.s32 50176, 50176
          %265 = vsyncadd [#allocation6], %s264
          %s266 = sshll.u32 [#allocation5], 4
          %s267 = int_to_ptr.vmem [resolvable:$true] %s266
          %272 = dma.hbm_to_vmem [thread:$0]  %s1, 50176, %s267, [#allocation6], 512, 512, 32
        $region16: #{tpu_custom_call.1} parent=11 // pred_fallthru
          _
        // Predicated region
        $region17: #{tpu_custom_call.1} parent=11 // pred_check
          %p273 = pneg %p93
        $region18: #{tpu_custom_call.1} parent=11 // pred_check_branch
          %275 = sbr.rel (%p273) target = $region20
        $region19: #{tpu_custom_call.1} parent=11 // pred_region
          %s277 = ssub.s32 128, 128
          %278 = vsyncadd [#allocation6], %s277
          %s280 = sshll.u32 [#allocation7], 4
          %s281 = int_to_ptr.vmem [resolvable:$true] %s280
          %283 = dma.hbm_to_vmem [thread:$0]  %s2, 128, %s281, [#allocation6]
        $region20: #{tpu_custom_call.1} parent=11 // pred_fallthru
          _
        // Predicated region
        $region21: #{tpu_custom_call.1} parent=11 // pred_check
          %p284 = pneg %p114
        $region22: #{tpu_custom_call.1} parent=11 // pred_check_branch
          %286 = sbr.rel (%p284) target = $region24
        $region23: #{tpu_custom_call.1} parent=11 // pred_region
          %s288 = ssub.s32 32768, 32768
          %289 = vsyncadd [#allocation9], %s288
          %s290 = sshll.u32 [#allocation8], 4
          %s291 = int_to_ptr.vmem [resolvable:$true] %s290
          %296 = dma.hbm_to_vmem [thread:$0]  %s3, 32768, %s291, [#allocation9], 256, 256, 16
        $region24: #{tpu_custom_call.1} parent=11 // pred_fallthru
          _
        // Predicated region
        $region25: #{tpu_custom_call.1} parent=11 // pred_check
          %p297 = pneg %p135
        $region26: #{tpu_custom_call.1} parent=11 // pred_check_branch
          %299 = sbr.rel (%p297) target = $region28
        $region27: #{tpu_custom_call.1} parent=11 // pred_region
          %s301 = ssub.s32 64, 64
          %302 = vsyncadd [#allocation9], %s301
          %s304 = sshll.u32 [#allocation10], 4
          %s305 = int_to_ptr.vmem [resolvable:$true] %s304
          %307 = dma.hbm_to_vmem [thread:$0]  %s4, 64, %s305, [#allocation9]
        $region28: #{tpu_custom_call.1} parent=11 // pred_fallthru
          _
        // Predicated region
        $region29: #{tpu_custom_call.1} parent=11 // pred_check
          %p308 = pneg %p156
        $region30: #{tpu_custom_call.1} parent=11 // pred_check_branch
          %310 = sbr.rel (%p308) target = $region32
        $region31: #{tpu_custom_call.1} parent=11 // pred_region
          %s312 = ssub.s32 8192, 8192
          %313 = vsyncadd [#allocation12], %s312
          %s314 = sshll.u32 [#allocation11], 4
          %s315 = int_to_ptr.vmem [resolvable:$true] %s314
          %320 = dma.hbm_to_vmem [thread:$0]  %s5, 8192, %s315, [#allocation12], 128, 128, 8
        $region32: #{tpu_custom_call.1} parent=11 // pred_fallthru
          _
        // Predicated region
        $region33: #{tpu_custom_call.1} parent=11 // pred_check
          %p321 = pneg %p177
        $region34: #{tpu_custom_call.1} parent=11 // pred_check_branch
          %323 = sbr.rel (%p321) target = $region36
        $region35: #{tpu_custom_call.1} parent=11 // pred_region
          %s325 = ssub.s32 32, 32
          %326 = vsyncadd [#allocation12], %s325
          %s328 = sshll.u32 [#allocation13], 4
          %s329 = int_to_ptr.vmem [resolvable:$true] %s328
          %331 = dma.hbm_to_vmem [thread:$0]  %s6, 32, %s329, [#allocation12]
        $region36: #{tpu_custom_call.1} parent=11 // pred_fallthru
          _
        // Predicated region
        $region37: #{tpu_custom_call.1} parent=11 // pred_check
          %p332 = pneg %p198
        $region38: #{tpu_custom_call.1} parent=11 // pred_check_branch
          %334 = sbr.rel (%p332) target = $region40
        $region39: #{tpu_custom_call.1} parent=11 // pred_region
          %s336 = ssub.s32 2048, 2048
          %337 = vsyncadd [#allocation15], %s336
          %s338 = sshll.u32 [#allocation14], 4
          %s339 = int_to_ptr.vmem [resolvable:$true] %s338
          %344 = dma.hbm_to_vmem [thread:$0]  %s7, 2048, %s339, [#allocation15], 64, 64, 4
        $region40: #{tpu_custom_call.1} parent=11 // pred_fallthru
          _
        // Predicated region
        $region41: #{tpu_custom_call.1} parent=11 // pred_check
          %p345 = pneg %p219
        $region42: #{tpu_custom_call.1} parent=11 // pred_check_branch
          %347 = sbr.rel (%p345) target = $region44
        $region43: #{tpu_custom_call.1} parent=11 // pred_region
          %s349 = ssub.s32 16, 16
          %350 = vsyncadd [#allocation15], %s349
          %s352 = sshll.u32 [#allocation16], 4
          %s353 = int_to_ptr.vmem [resolvable:$true] %s352
          %355 = dma.hbm_to_vmem [thread:$0]  %s8, 16, %s353, [#allocation15]
        $region44: #{tpu_custom_call.1} parent=11 // pred_fallthru
          _
      $region12: #{tpu_custom_call.1} parent=5 // pred_fallthru
        _
      %p356 = scmp.lt.s32.totalorder %s25, 2
      // Predicated region
      $region45: #{tpu_custom_call.1} parent=5 // pred_check
        %p357 = pneg %p356
      $region46: #{tpu_custom_call.1} parent=5 // pred_check_branch
        %359 = sbr.rel (%p357) target = $region48
      $region47: #{tpu_custom_call.1} parent=5 // pred_region
        // Predicated region
        $region49: #{tpu_custom_call.1} parent=47 // pred_check
          %p360 = pneg %p45
        $region50: #{tpu_custom_call.1} parent=47 // pred_check_branch
          %362 = sbr.rel (%p360) target = $region52
        $region51: #{tpu_custom_call.1} parent=47 // pred_region
          %s363 = sand.u32 %s35, 1
          %s364 = scalar_lea.sflag [#allocation3], %s363
          %s365 = sand.u32 %s35, 1
          %s366 = smul.addr %s365, 112
          %s367 = scalar_lea.vmem [#allocation2], %s366
          %s368 = smul.u32 2, %s25
          %s370 = ssub.s32 1792, 1792
          %371 = vsyncadd %s364, %s370
          %s372 = smul.addr %s368, 7
          %s373 = smul.addr %s372, 128
          %s374 = scalar_lea.hbm %s0, %s373
          %s375 = sshll.u32 %s367, 4
          %s376 = int_to_ptr.vmem [resolvable:$true] %s375
          %381 = dma.hbm_to_vmem [thread:$0]  %s374, 1792, %s376, %s364, 896, 896, 56
        $region52: #{tpu_custom_call.1} parent=47 // pred_fallthru
          _
      $region48: #{tpu_custom_call.1} parent=5 // pred_fallthru
        _
      %p382 = scmp.le.s32.totalorder 1, %s25
      %p383 = scmp.lt.s32.totalorder %s25, 3
      %p384 = pnand %p382, %p383
      %p385 = pneg %p384
      // Predicated region
      $region53: #{tpu_custom_call.1} parent=5 // pred_check
        _
      $region54: #{tpu_custom_call.1} parent=5 // pred_check_branch
        %387 = sbr.rel (%p384) target = $region56
      $region55: #{tpu_custom_call.1} parent=5 // pred_region
        %s388 = ssub.s32 %s25, 1
        %s389 = sand.u32 %s38, 1
        %s390 = scalar_lea.sflag [#allocation3], %s389
        %s391 = sand.u32 %s38, 1
        %s392 = smul.addr %s391, 112
        %s393 = scalar_lea.vmem [#allocation2], %s392
        // Predicated region
        $region57: #{tpu_custom_call.1} parent=55 // pred_check
          %p394 = pneg %p51
        $region58: #{tpu_custom_call.1} parent=55 // pred_check_branch
          %396 = sbr.rel (%p394) target = $region60
        $region59: #{tpu_custom_call.1} parent=55 // pred_region
          %397 = dma.done %s390, 1792
        $region60: #{tpu_custom_call.1} parent=55 // pred_fallthru
          _
        // Predicated region
        $region61: #{tpu_custom_call.1} parent=55 // pred_check
          %p398 = pneg %p72
        $region62: #{tpu_custom_call.1} parent=55 // pred_check_branch
          %400 = sbr.rel (%p398) target = $region64
        $region63: #{tpu_custom_call.1} parent=55 // pred_region
          %401 = dma.done [#allocation6], 50176
        $region64: #{tpu_custom_call.1} parent=55 // pred_fallthru
          _
        // Predicated region
        $region65: #{tpu_custom_call.1} parent=55 // pred_check
          %p402 = pneg %p93
        $region66: #{tpu_custom_call.1} parent=55 // pred_check_branch
          %404 = sbr.rel (%p402) target = $region68
        $region67: #{tpu_custom_call.1} parent=55 // pred_region
          %405 = dma.done [#allocation6], 128
        $region68: #{tpu_custom_call.1} parent=55 // pred_fallthru
          _
        // Predicated region
        $region69: #{tpu_custom_call.1} parent=55 // pred_check
          %p406 = pneg %p114
        $region70: #{tpu_custom_call.1} parent=55 // pred_check_branch
          %408 = sbr.rel (%p406) target = $region72
        $region71: #{tpu_custom_call.1} parent=55 // pred_region
          %409 = dma.done [#allocation9], 32768
        $region72: #{tpu_custom_call.1} parent=55 // pred_fallthru
          _
        // Predicated region
        $region73: #{tpu_custom_call.1} parent=55 // pred_check
          %p410 = pneg %p135
        $region74: #{tpu_custom_call.1} parent=55 // pred_check_branch
          %412 = sbr.rel (%p410) target = $region76
        $region75: #{tpu_custom_call.1} parent=55 // pred_region
          %413 = dma.done [#allocation9], 64
        $region76: #{tpu_custom_call.1} parent=55 // pred_fallthru
          _
        // Predicated region
        $region77: #{tpu_custom_call.1} parent=55 // pred_check
          %p414 = pneg %p156
        $region78: #{tpu_custom_call.1} parent=55 // pred_check_branch
          %416 = sbr.rel (%p414) target = $region80
        $region79: #{tpu_custom_call.1} parent=55 // pred_region
          %417 = dma.done [#allocation12], 8192
        $region80: #{tpu_custom_call.1} parent=55 // pred_fallthru
          _
        // Predicated region
        $region81: #{tpu_custom_call.1} parent=55 // pred_check
          %p418 = pneg %p177
        $region82: #{tpu_custom_call.1} parent=55 // pred_check_branch
          %420 = sbr.rel (%p418) target = $region84
        $region83: #{tpu_custom_call.1} parent=55 // pred_region
          %421 = dma.done [#allocation12], 32
        $region84: #{tpu_custom_call.1} parent=55 // pred_fallthru
          _
        // Predicated region
        $region85: #{tpu_custom_call.1} parent=55 // pred_check
          %p422 = pneg %p198
        $region86: #{tpu_custom_call.1} parent=55 // pred_check_branch
          %424 = sbr.rel (%p422) target = $region88
        $region87: #{tpu_custom_call.1} parent=55 // pred_region
          %425 = dma.done [#allocation15], 2048
        $region88: #{tpu_custom_call.1} parent=55 // pred_fallthru
          _
        // Predicated region
        $region89: #{tpu_custom_call.1} parent=55 // pred_check
          %p426 = pneg %p219
        $region90: #{tpu_custom_call.1} parent=55 // pred_check_branch
          %428 = sbr.rel (%p426) target = $region92
        $region91: #{tpu_custom_call.1} parent=55 // pred_region
          %429 = dma.done [#allocation15], 16
        $region92: #{tpu_custom_call.1} parent=55 // pred_fallthru
          _
        %s430 = sand.u32 %s38, 1
        %s431 = scalar_lea.sflag [#allocation3], %s430
        %s432 = sand.u32 %s38, 1
        %s433 = smul.addr %s432, 112
        %s434 = scalar_lea.vmem [#allocation2], %s433
        %p435 = pneg %p51
        %p436 = pneg %p48
        %p437 = pneg %p72
        %p438 = pneg %p69
        %p439 = pneg %p93
        %p440 = pneg %p90
        %p441 = pneg %p114
        %p442 = pneg %p111
        %p443 = pneg %p135
        %p444 = pneg %p132
        %p445 = pneg %p156
        %p446 = pneg %p153
        %p447 = pneg %p177
        %p448 = pneg %p174
        %p449 = pneg %p198
        %p450 = pneg %p195
        %p451 = pneg %p219
        %p452 = pneg %p216
        %p453 = pneg %p245
        %p454 = pneg %p242
        %s455 = sand.u32 %s232, 1
        %s456 = scalar_lea.sflag [#allocation4], %s455
        %s457 = sand.u32 %s232, 1
        %s458 = smul.addr %s457, 8
        %s459 = scalar_lea.vmem [#allocation17], %s458
        %s460 = smul.u32 2, %s30
        %s461 = smul.u32 2, %s30
        %v463 = vld [vmem:[%s393] sm:$0xff]
        %v464 = vld [vmem:[%s393 + $0x8] sm:$0xff]
        %v465 = vld [vmem:[%s393 + $0x10] sm:$0xff]
        %v466 = vld [vmem:[%s393 + $0x18] sm:$0xff]
        %v467 = vld [vmem:[%s393 + $0x20] sm:$0xff]
        %v468 = vld [vmem:[%s393 + $0x28] sm:$0xff]
        %v469 = vld [vmem:[%s393 + $0x30] sm:$0xff]
        %v470 = vld [vmem:[%s393 + $0x38] sm:$0xff]
        %v471 = vld [vmem:[%s393 + $0x40] sm:$0xff]
        %v472 = vld [vmem:[%s393 + $0x48] sm:$0xff]
        %v473 = vld [vmem:[%s393 + $0x50] sm:$0xff]
        %v474 = vld [vmem:[%s393 + $0x58] sm:$0xff]
        %v475 = vld [vmem:[%s393 + $0x60] sm:$0xff]
        %v476 = vld [vmem:[%s393 + $0x68] sm:$0xff]
        %v477 = vpack.c.bf16 %v470, %v463
        %v478 = vpack.c.bf16 %v471, %v464
        %v479 = vpack.c.bf16 %v472, %v465
        %v480 = vpack.c.bf16 %v473, %v466
        %v481 = vpack.c.bf16 %v474, %v467
        %v482 = vpack.c.bf16 %v475, %v468
        %v483 = vpack.c.bf16 %v476, %v469
        %v484 = vld [vmem:[#allocation5] sm:$0xff]
        %v485 = vld [vmem:[#allocation5 + $0x8] sm:$0xff]
        %v486 = vld [vmem:[#allocation5 + $0x10] sm:$0xff]
        %v487 = vld [vmem:[#allocation5 + $0x18] sm:$0xff]
        %v488 = vld [vmem:[#allocation5 + $0x20] sm:$0xff]
        %v489 = vld [vmem:[#allocation5 + $0x28] sm:$0xff]
        %v490 = vld [vmem:[#allocation5 + $0x30] sm:$0xff]
        %v491 = vld [vmem:[#allocation5 + $0x38] sm:$0xff]
        %v492 = vld [vmem:[#allocation5 + $0x40] sm:$0xff]
        %v493 = vld [vmem:[#allocation5 + $0x48] sm:$0xff]
        %v494 = vld [vmem:[#allocation5 + $0x50] sm:$0xff]
        %v495 = vld [vmem:[#allocation5 + $0x58] sm:$0xff]
        %v496 = vld [vmem:[#allocation5 + $0x60] sm:$0xff]
        %v497 = vld [vmem:[#allocation5 + $0x68] sm:$0xff]
        %v498 = vld [vmem:[#allocation5 + $0x70] sm:$0xff]
        %v499 = vld [vmem:[#allocation5 + $0x78] sm:$0xff]
        %v500 = vld [vmem:[#allocation5 + $0x80] sm:$0xff]
        %v501 = vld [vmem:[#allocation5 + $0x88] sm:$0xff]
        %v502 = vld [vmem:[#allocation5 + $0x90] sm:$0xff]
        %v503 = vld [vmem:[#allocation5 + $0x98] sm:$0xff]
        %v504 = vld [vmem:[#allocation5 + $0xa0] sm:$0xff]
        %v505 = vld [vmem:[#allocation5 + $0xa8] sm:$0xff]
        %v506 = vld [vmem:[#allocation5 + $0xb0] sm:$0xff]
        %v507 = vld [vmem:[#allocation5 + $0xb8] sm:$0xff]
        %v508 = vld [vmem:[#allocation5 + $0xc0] sm:$0xff]
        %v509 = vld [vmem:[#allocation5 + $0xc8] sm:$0xff]
        %v510 = vld [vmem:[#allocation5 + $0xd0] sm:$0xff]
        %v511 = vld [vmem:[#allocation5 + $0xd8] sm:$0xff]
        %v512 = vld [vmem:[#allocation5 + $0xe0] sm:$0xff]
        %v513 = vld [vmem:[#allocation5 + $0xe8] sm:$0xff]
        %v514 = vld [vmem:[#allocation5 + $0xf0] sm:$0xff]
        %v515 = vld [vmem:[#allocation5 + $0xf8] sm:$0xff]
        %v516 = vld [vmem:[#allocation5 + $0x100] sm:$0xff]
        %v517 = vld [vmem:[#allocation5 + $0x108] sm:$0xff]
        %v518 = vld [vmem:[#allocation5 + $0x110] sm:$0xff]
        %v519 = vld [vmem:[#allocation5 + $0x118] sm:$0xff]
        %v520 = vld [vmem:[#allocation5 + $0x120] sm:$0xff]
        %v521 = vld [vmem:[#allocation5 + $0x128] sm:$0xff]
        %v522 = vld [vmem:[#allocation5 + $0x130] sm:$0xff]
        %v523 = vld [vmem:[#allocation5 + $0x138] sm:$0xff]
        %v524 = vld [vmem:[#allocation5 + $0x140] sm:$0xff]
        %v525 = vld [vmem:[#allocation5 + $0x148] sm:$0xff]
        %v526 = vld [vmem:[#allocation5 + $0x150] sm:$0xff]
        %v527 = vld [vmem:[#allocation5 + $0x158] sm:$0xff]
        %v528 = vld [vmem:[#allocation5 + $0x160] sm:$0xff]
        %v529 = vld [vmem:[#allocation5 + $0x168] sm:$0xff]
        %v530 = vld [vmem:[#allocation5 + $0x170] sm:$0xff]
        %v531 = vld [vmem:[#allocation5 + $0x178] sm:$0xff]
        %v532 = vld [vmem:[#allocation5 + $0x180] sm:$0xff]
        %v533 = vld [vmem:[#allocation5 + $0x188] sm:$0xff]
        %v534 = vld [vmem:[#allocation5 + $0x190] sm:$0xff]
        %v535 = vld [vmem:[#allocation5 + $0x198] sm:$0xff]
        %v536 = vld [vmem:[#allocation5 + $0x1a0] sm:$0xff]
        %v537 = vld [vmem:[#allocation5 + $0x1a8] sm:$0xff]
        %v538 = vld [vmem:[#allocation5 + $0x1b0] sm:$0xff]
        %v539 = vld [vmem:[#allocation5 + $0x1b8] sm:$0xff]
        %v540 = vld [vmem:[#allocation5 + $0x1c0] sm:$0xff]
        %v541 = vld [vmem:[#allocation5 + $0x1c8] sm:$0xff]
        %v542 = vld [vmem:[#allocation5 + $0x1d0] sm:$0xff]
        %v543 = vld [vmem:[#allocation5 + $0x1d8] sm:$0xff]
        %v544 = vld [vmem:[#allocation5 + $0x1e0] sm:$0xff]
        %v545 = vld [vmem:[#allocation5 + $0x1e8] sm:$0xff]
        %v546 = vld [vmem:[#allocation5 + $0x1f0] sm:$0xff]
        %v547 = vld [vmem:[#allocation5 + $0x1f8] sm:$0xff]
        %v548 = vld [vmem:[#allocation5 + $0x200] sm:$0xff]
        %v549 = vld [vmem:[#allocation5 + $0x208] sm:$0xff]
        %v550 = vld [vmem:[#allocation5 + $0x210] sm:$0xff]
        %v551 = vld [vmem:[#allocation5 + $0x218] sm:$0xff]
        %v552 = vld [vmem:[#allocation5 + $0x220] sm:$0xff]
        %v553 = vld [vmem:[#allocation5 + $0x228] sm:$0xff]
        %v554 = vld [vmem:[#allocation5 + $0x230] sm:$0xff]
        %v555 = vld [vmem:[#allocation5 + $0x238] sm:$0xff]
        %v556 = vld [vmem:[#allocation5 + $0x240] sm:$0xff]
        %v557 = vld [vmem:[#allocation5 + $0x248] sm:$0xff]
        %v558 = vld [vmem:[#allocation5 + $0x250] sm:$0xff]
        %v559 = vld [vmem:[#allocation5 + $0x258] sm:$0xff]
        %v560 = vld [vmem:[#allocation5 + $0x260] sm:$0xff]
        %v561 = vld [vmem:[#allocation5 + $0x268] sm:$0xff]
        %v562 = vld [vmem:[#allocation5 + $0x270] sm:$0xff]
        %v563 = vld [vmem:[#allocation5 + $0x278] sm:$0xff]
        %v564 = vld [vmem:[#allocation5 + $0x280] sm:$0xff]
        %v565 = vld [vmem:[#allocation5 + $0x288] sm:$0xff]
        %v566 = vld [vmem:[#allocation5 + $0x290] sm:$0xff]
        %v567 = vld [vmem:[#allocation5 + $0x298] sm:$0xff]
        %v568 = vld [vmem:[#allocation5 + $0x2a0] sm:$0xff]
        %v569 = vld [vmem:[#allocation5 + $0x2a8] sm:$0xff]
        %v570 = vld [vmem:[#allocation5 + $0x2b0] sm:$0xff]
        %v571 = vld [vmem:[#allocation5 + $0x2b8] sm:$0xff]
        %v572 = vld [vmem:[#allocation5 + $0x2c0] sm:$0xff]
        %v573 = vld [vmem:[#allocation5 + $0x2c8] sm:$0xff]
        %v574 = vld [vmem:[#allocation5 + $0x2d0] sm:$0xff]
        %v575 = vld [vmem:[#allocation5 + $0x2d8] sm:$0xff]
        %v576 = vld [vmem:[#allocation5 + $0x2e0] sm:$0xff]
        %v577 = vld [vmem:[#allocation5 + $0x2e8] sm:$0xff]
        %v578 = vld [vmem:[#allocation5 + $0x2f0] sm:$0xff]
        %v579 = vld [vmem:[#allocation5 + $0x2f8] sm:$0xff]
        %v580 = vld [vmem:[#allocation5 + $0x300] sm:$0xff]
        %v581 = vld [vmem:[#allocation5 + $0x308] sm:$0xff]
        %v582 = vld [vmem:[#allocation5 + $0x310] sm:$0xff]
        %v583 = vld [vmem:[#allocation5 + $0x318] sm:$0xff]
        %v584 = vld [vmem:[#allocation5 + $0x320] sm:$0xff]
        %v585 = vld [vmem:[#allocation5 + $0x328] sm:$0xff]
        %v586 = vld [vmem:[#allocation5 + $0x330] sm:$0xff]
        %v587 = vld [vmem:[#allocation5 + $0x338] sm:$0xff]
        %v588 = vld [vmem:[#allocation5 + $0x340] sm:$0xff]
        %v589 = vld [vmem:[#allocation5 + $0x348] sm:$0xff]
        %v590 = vld [vmem:[#allocation5 + $0x350] sm:$0xff]
        %v591 = vld [vmem:[#allocation5 + $0x358] sm:$0xff]
        %v592 = vld [vmem:[#allocation5 + $0x360] sm:$0xff]
        %v593 = vld [vmem:[#allocation5 + $0x368] sm:$0xff]
        %v594 = vld [vmem:[#allocation5 + $0x370] sm:$0xff]
        %v595 = vld [vmem:[#allocation5 + $0x378] sm:$0xff]
        %v596 = vld [vmem:[#allocation5 + $0x380] sm:$0xff]
        %v597 = vld [vmem:[#allocation5 + $0x388] sm:$0xff]
        %v598 = vld [vmem:[#allocation5 + $0x390] sm:$0xff]
        %v599 = vld [vmem:[#allocation5 + $0x398] sm:$0xff]
        %v600 = vld [vmem:[#allocation5 + $0x3a0] sm:$0xff]
        %v601 = vld [vmem:[#allocation5 + $0x3a8] sm:$0xff]
        %v602 = vld [vmem:[#allocation5 + $0x3b0] sm:$0xff]
        %v603 = vld [vmem:[#allocation5 + $0x3b8] sm:$0xff]
        %v604 = vld [vmem:[#allocation5 + $0x3c0] sm:$0xff]
        %v605 = vld [vmem:[#allocation5 + $0x3c8] sm:$0xff]
        %v606 = vld [vmem:[#allocation5 + $0x3d0] sm:$0xff]
        %v607 = vld [vmem:[#allocation5 + $0x3d8] sm:$0xff]
        %v608 = vld [vmem:[#allocation5 + $0x3e0] sm:$0xff]
        %v609 = vld [vmem:[#allocation5 + $0x3e8] sm:$0xff]
        %v610 = vld [vmem:[#allocation5 + $0x3f0] sm:$0xff]
        %v611 = vld [vmem:[#allocation5 + $0x3f8] sm:$0xff]
        %v612 = vld [vmem:[#allocation5 + $0x400] sm:$0xff]
        %v613 = vld [vmem:[#allocation5 + $0x408] sm:$0xff]
        %v614 = vld [vmem:[#allocation5 + $0x410] sm:$0xff]
        %v615 = vld [vmem:[#allocation5 + $0x418] sm:$0xff]
        %v616 = vld [vmem:[#allocation5 + $0x420] sm:$0xff]
        %v617 = vld [vmem:[#allocation5 + $0x428] sm:$0xff]
        %v618 = vld [vmem:[#allocation5 + $0x430] sm:$0xff]
        %v619 = vld [vmem:[#allocation5 + $0x438] sm:$0xff]
        %v620 = vld [vmem:[#allocation5 + $0x440] sm:$0xff]
        %v621 = vld [vmem:[#allocation5 + $0x448] sm:$0xff]
        %v622 = vld [vmem:[#allocation5 + $0x450] sm:$0xff]
        %v623 = vld [vmem:[#allocation5 + $0x458] sm:$0xff]
        %v624 = vld [vmem:[#allocation5 + $0x460] sm:$0xff]
        %v625 = vld [vmem:[#allocation5 + $0x468] sm:$0xff]
        %v626 = vld [vmem:[#allocation5 + $0x470] sm:$0xff]
        %v627 = vld [vmem:[#allocation5 + $0x478] sm:$0xff]
        %v628 = vld [vmem:[#allocation5 + $0x480] sm:$0xff]
        %v629 = vld [vmem:[#allocation5 + $0x488] sm:$0xff]
        %v630 = vld [vmem:[#allocation5 + $0x490] sm:$0xff]
        %v631 = vld [vmem:[#allocation5 + $0x498] sm:$0xff]
        %v632 = vld [vmem:[#allocation5 + $0x4a0] sm:$0xff]
        %v633 = vld [vmem:[#allocation5 + $0x4a8] sm:$0xff]
        %v634 = vld [vmem:[#allocation5 + $0x4b0] sm:$0xff]
        %v635 = vld [vmem:[#allocation5 + $0x4b8] sm:$0xff]
        %v636 = vld [vmem:[#allocation5 + $0x4c0] sm:$0xff]
        %v637 = vld [vmem:[#allocation5 + $0x4c8] sm:$0xff]
        %v638 = vld [vmem:[#allocation5 + $0x4d0] sm:$0xff]
        %v639 = vld [vmem:[#allocation5 + $0x4d8] sm:$0xff]
        %v640 = vld [vmem:[#allocation5 + $0x4e0] sm:$0xff]
        %v641 = vld [vmem:[#allocation5 + $0x4e8] sm:$0xff]
        %v642 = vld [vmem:[#allocation5 + $0x4f0] sm:$0xff]
        %v643 = vld [vmem:[#allocation5 + $0x4f8] sm:$0xff]
        %v644 = vld [vmem:[#allocation5 + $0x500] sm:$0xff]
        %v645 = vld [vmem:[#allocation5 + $0x508] sm:$0xff]
        %v646 = vld [vmem:[#allocation5 + $0x510] sm:$0xff]
        %v647 = vld [vmem:[#allocation5 + $0x518] sm:$0xff]
        %v648 = vld [vmem:[#allocation5 + $0x520] sm:$0xff]
        %v649 = vld [vmem:[#allocation5 + $0x528] sm:$0xff]
        %v650 = vld [vmem:[#allocation5 + $0x530] sm:$0xff]
        %v651 = vld [vmem:[#allocation5 + $0x538] sm:$0xff]
        %v652 = vld [vmem:[#allocation5 + $0x540] sm:$0xff]
        %v653 = vld [vmem:[#allocation5 + $0x548] sm:$0xff]
        %v654 = vld [vmem:[#allocation5 + $0x550] sm:$0xff]
        %v655 = vld [vmem:[#allocation5 + $0x558] sm:$0xff]
        %v656 = vld [vmem:[#allocation5 + $0x560] sm:$0xff]
        %v657 = vld [vmem:[#allocation5 + $0x568] sm:$0xff]
        %v658 = vld [vmem:[#allocation5 + $0x570] sm:$0xff]
        %v659 = vld [vmem:[#allocation5 + $0x578] sm:$0xff]
        %v660 = vld [vmem:[#allocation5 + $0x580] sm:$0xff]
        %v661 = vld [vmem:[#allocation5 + $0x588] sm:$0xff]
        %v662 = vld [vmem:[#allocation5 + $0x590] sm:$0xff]
        %v663 = vld [vmem:[#allocation5 + $0x598] sm:$0xff]
        %v664 = vld [vmem:[#allocation5 + $0x5a0] sm:$0xff]
        %v665 = vld [vmem:[#allocation5 + $0x5a8] sm:$0xff]
        %v666 = vld [vmem:[#allocation5 + $0x5b0] sm:$0xff]
        %v667 = vld [vmem:[#allocation5 + $0x5b8] sm:$0xff]
        %v668 = vld [vmem:[#allocation5 + $0x5c0] sm:$0xff]
        %v669 = vld [vmem:[#allocation5 + $0x5c8] sm:$0xff]
        %v670 = vld [vmem:[#allocation5 + $0x5d0] sm:$0xff]
        %v671 = vld [vmem:[#allocation5 + $0x5d8] sm:$0xff]
        %v672 = vld [vmem:[#allocation5 + $0x5e0] sm:$0xff]
        %v673 = vld [vmem:[#allocation5 + $0x5e8] sm:$0xff]
        %v674 = vld [vmem:[#allocation5 + $0x5f0] sm:$0xff]
        %v675 = vld [vmem:[#allocation5 + $0x5f8] sm:$0xff]
        %v676 = vld [vmem:[#allocation5 + $0x600] sm:$0xff]
        %v677 = vld [vmem:[#allocation5 + $0x608] sm:$0xff]
        %v678 = vld [vmem:[#allocation5 + $0x610] sm:$0xff]
        %v679 = vld [vmem:[#allocation5 + $0x618] sm:$0xff]
        %v680 = vld [vmem:[#allocation5 + $0x620] sm:$0xff]
        %v681 = vld [vmem:[#allocation5 + $0x628] sm:$0xff]
        %v682 = vld [vmem:[#allocation5 + $0x630] sm:$0xff]
        %v683 = vld [vmem:[#allocation5 + $0x638] sm:$0xff]
        %v684 = vld [vmem:[#allocation5 + $0x640] sm:$0xff]
        %v685 = vld [vmem:[#allocation5 + $0x648] sm:$0xff]
        %v686 = vld [vmem:[#allocation5 + $0x650] sm:$0xff]
        %v687 = vld [vmem:[#allocation5 + $0x658] sm:$0xff]
        %v688 = vld [vmem:[#allocation5 + $0x660] sm:$0xff]
        %v689 = vld [vmem:[#allocation5 + $0x668] sm:$0xff]
        %v690 = vld [vmem:[#allocation5 + $0x670] sm:$0xff]
        %v691 = vld [vmem:[#allocation5 + $0x678] sm:$0xff]
        %v692 = vld [vmem:[#allocation5 + $0x680] sm:$0xff]
        %v693 = vld [vmem:[#allocation5 + $0x688] sm:$0xff]
        %v694 = vld [vmem:[#allocation5 + $0x690] sm:$0xff]
        %v695 = vld [vmem:[#allocation5 + $0x698] sm:$0xff]
        %v696 = vld [vmem:[#allocation5 + $0x6a0] sm:$0xff]
        %v697 = vld [vmem:[#allocation5 + $0x6a8] sm:$0xff]
        %v698 = vld [vmem:[#allocation5 + $0x6b0] sm:$0xff]
        %v699 = vld [vmem:[#allocation5 + $0x6b8] sm:$0xff]
        %v700 = vld [vmem:[#allocation5 + $0x6c0] sm:$0xff]
        %v701 = vld [vmem:[#allocation5 + $0x6c8] sm:$0xff]
        %v702 = vld [vmem:[#allocation5 + $0x6d0] sm:$0xff]
        %v703 = vld [vmem:[#allocation5 + $0x6d8] sm:$0xff]
        %v704 = vld [vmem:[#allocation5 + $0x6e0] sm:$0xff]
        %v705 = vld [vmem:[#allocation5 + $0x6e8] sm:$0xff]
        %v706 = vld [vmem:[#allocation5 + $0x6f0] sm:$0xff]
        %v707 = vld [vmem:[#allocation5 + $0x6f8] sm:$0xff]
        %v708 = vld [vmem:[#allocation5 + $0x700] sm:$0xff]
        %v709 = vld [vmem:[#allocation5 + $0x708] sm:$0xff]
        %v710 = vld [vmem:[#allocation5 + $0x710] sm:$0xff]
        %v711 = vld [vmem:[#allocation5 + $0x718] sm:$0xff]
        %v712 = vld [vmem:[#allocation5 + $0x720] sm:$0xff]
        %v713 = vld [vmem:[#allocation5 + $0x728] sm:$0xff]
        %v714 = vld [vmem:[#allocation5 + $0x730] sm:$0xff]
        %v715 = vld [vmem:[#allocation5 + $0x738] sm:$0xff]
        %v716 = vld [vmem:[#allocation5 + $0x740] sm:$0xff]
        %v717 = vld [vmem:[#allocation5 + $0x748] sm:$0xff]
        %v718 = vld [vmem:[#allocation5 + $0x750] sm:$0xff]
        %v719 = vld [vmem:[#allocation5 + $0x758] sm:$0xff]
        %v720 = vld [vmem:[#allocation5 + $0x760] sm:$0xff]
        %v721 = vld [vmem:[#allocation5 + $0x768] sm:$0xff]
        %v722 = vld [vmem:[#allocation5 + $0x770] sm:$0xff]
        %v723 = vld [vmem:[#allocation5 + $0x778] sm:$0xff]
        %v724 = vld [vmem:[#allocation5 + $0x780] sm:$0xff]
        %v725 = vld [vmem:[#allocation5 + $0x788] sm:$0xff]
        %v726 = vld [vmem:[#allocation5 + $0x790] sm:$0xff]
        %v727 = vld [vmem:[#allocation5 + $0x798] sm:$0xff]
        %v728 = vld [vmem:[#allocation5 + $0x7a0] sm:$0xff]
        %v729 = vld [vmem:[#allocation5 + $0x7a8] sm:$0xff]
        %v730 = vld [vmem:[#allocation5 + $0x7b0] sm:$0xff]
        %v731 = vld [vmem:[#allocation5 + $0x7b8] sm:$0xff]
        %v732 = vld [vmem:[#allocation5 + $0x7c0] sm:$0xff]
        %v733 = vld [vmem:[#allocation5 + $0x7c8] sm:$0xff]
        %v734 = vld [vmem:[#allocation5 + $0x7d0] sm:$0xff]
        %v735 = vld [vmem:[#allocation5 + $0x7d8] sm:$0xff]
        %v736 = vld [vmem:[#allocation5 + $0x7e0] sm:$0xff]
        %v737 = vld [vmem:[#allocation5 + $0x7e8] sm:$0xff]
        %v738 = vld [vmem:[#allocation5 + $0x7f0] sm:$0xff]
        %v739 = vld [vmem:[#allocation5 + $0x7f8] sm:$0xff]
        %v740 = vld [vmem:[#allocation5 + $0x800] sm:$0xff]
        %v741 = vld [vmem:[#allocation5 + $0x808] sm:$0xff]
        %v742 = vld [vmem:[#allocation5 + $0x810] sm:$0xff]
        %v743 = vld [vmem:[#allocation5 + $0x818] sm:$0xff]
        %v744 = vld [vmem:[#allocation5 + $0x820] sm:$0xff]
        %v745 = vld [vmem:[#allocation5 + $0x828] sm:$0xff]
        %v746 = vld [vmem:[#allocation5 + $0x830] sm:$0xff]
        %v747 = vld [vmem:[#allocation5 + $0x838] sm:$0xff]
        %v748 = vld [vmem:[#allocation5 + $0x840] sm:$0xff]
        %v749 = vld [vmem:[#allocation5 + $0x848] sm:$0xff]
        %v750 = vld [vmem:[#allocation5 + $0x850] sm:$0xff]
        %v751 = vld [vmem:[#allocation5 + $0x858] sm:$0xff]
        %v752 = vld [vmem:[#allocation5 + $0x860] sm:$0xff]
        %v753 = vld [vmem:[#allocation5 + $0x868] sm:$0xff]
        %v754 = vld [vmem:[#allocation5 + $0x870] sm:$0xff]
        %v755 = vld [vmem:[#allocation5 + $0x878] sm:$0xff]
        %v756 = vld [vmem:[#allocation5 + $0x880] sm:$0xff]
        %v757 = vld [vmem:[#allocation5 + $0x888] sm:$0xff]
        %v758 = vld [vmem:[#allocation5 + $0x890] sm:$0xff]
        %v759 = vld [vmem:[#allocation5 + $0x898] sm:$0xff]
        %v760 = vld [vmem:[#allocation5 + $0x8a0] sm:$0xff]
        %v761 = vld [vmem:[#allocation5 + $0x8a8] sm:$0xff]
        %v762 = vld [vmem:[#allocation5 + $0x8b0] sm:$0xff]
        %v763 = vld [vmem:[#allocation5 + $0x8b8] sm:$0xff]
        %v764 = vld [vmem:[#allocation5 + $0x8c0] sm:$0xff]
        %v765 = vld [vmem:[#allocation5 + $0x8c8] sm:$0xff]
        %v766 = vld [vmem:[#allocation5 + $0x8d0] sm:$0xff]
        %v767 = vld [vmem:[#allocation5 + $0x8d8] sm:$0xff]
        %v768 = vld [vmem:[#allocation5 + $0x8e0] sm:$0xff]
        %v769 = vld [vmem:[#allocation5 + $0x8e8] sm:$0xff]
        %v770 = vld [vmem:[#allocation5 + $0x8f0] sm:$0xff]
        %v771 = vld [vmem:[#allocation5 + $0x8f8] sm:$0xff]
        %v772 = vld [vmem:[#allocation5 + $0x900] sm:$0xff]
        %v773 = vld [vmem:[#allocation5 + $0x908] sm:$0xff]
        %v774 = vld [vmem:[#allocation5 + $0x910] sm:$0xff]
        %v775 = vld [vmem:[#allocation5 + $0x918] sm:$0xff]
        %v776 = vld [vmem:[#allocation5 + $0x920] sm:$0xff]
        %v777 = vld [vmem:[#allocation5 + $0x928] sm:$0xff]
        %v778 = vld [vmem:[#allocation5 + $0x930] sm:$0xff]
        %v779 = vld [vmem:[#allocation5 + $0x938] sm:$0xff]
        %v780 = vld [vmem:[#allocation5 + $0x940] sm:$0xff]
        %v781 = vld [vmem:[#allocation5 + $0x948] sm:$0xff]
        %v782 = vld [vmem:[#allocation5 + $0x950] sm:$0xff]
        %v783 = vld [vmem:[#allocation5 + $0x958] sm:$0xff]
        %v784 = vld [vmem:[#allocation5 + $0x960] sm:$0xff]
        %v785 = vld [vmem:[#allocation5 + $0x968] sm:$0xff]
        %v786 = vld [vmem:[#allocation5 + $0x970] sm:$0xff]
        %v787 = vld [vmem:[#allocation5 + $0x978] sm:$0xff]
        %v788 = vld [vmem:[#allocation5 + $0x980] sm:$0xff]
        %v789 = vld [vmem:[#allocation5 + $0x988] sm:$0xff]
        %v790 = vld [vmem:[#allocation5 + $0x990] sm:$0xff]
        %v791 = vld [vmem:[#allocation5 + $0x998] sm:$0xff]
        %v792 = vld [vmem:[#allocation5 + $0x9a0] sm:$0xff]
        %v793 = vld [vmem:[#allocation5 + $0x9a8] sm:$0xff]
        %v794 = vld [vmem:[#allocation5 + $0x9b0] sm:$0xff]
        %v795 = vld [vmem:[#allocation5 + $0x9b8] sm:$0xff]
        %v796 = vld [vmem:[#allocation5 + $0x9c0] sm:$0xff]
        %v797 = vld [vmem:[#allocation5 + $0x9c8] sm:$0xff]
        %v798 = vld [vmem:[#allocation5 + $0x9d0] sm:$0xff]
        %v799 = vld [vmem:[#allocation5 + $0x9d8] sm:$0xff]
        %v800 = vld [vmem:[#allocation5 + $0x9e0] sm:$0xff]
        %v801 = vld [vmem:[#allocation5 + $0x9e8] sm:$0xff]
        %v802 = vld [vmem:[#allocation5 + $0x9f0] sm:$0xff]
        %v803 = vld [vmem:[#allocation5 + $0x9f8] sm:$0xff]
        %v804 = vld [vmem:[#allocation5 + $0xa00] sm:$0xff]
        %v805 = vld [vmem:[#allocation5 + $0xa08] sm:$0xff]
        %v806 = vld [vmem:[#allocation5 + $0xa10] sm:$0xff]
        %v807 = vld [vmem:[#allocation5 + $0xa18] sm:$0xff]
        %v808 = vld [vmem:[#allocation5 + $0xa20] sm:$0xff]
        %v809 = vld [vmem:[#allocation5 + $0xa28] sm:$0xff]
        %v810 = vld [vmem:[#allocation5 + $0xa30] sm:$0xff]
        %v811 = vld [vmem:[#allocation5 + $0xa38] sm:$0xff]
        %v812 = vld [vmem:[#allocation5 + $0xa40] sm:$0xff]
        %v813 = vld [vmem:[#allocation5 + $0xa48] sm:$0xff]
        %v814 = vld [vmem:[#allocation5 + $0xa50] sm:$0xff]
        %v815 = vld [vmem:[#allocation5 + $0xa58] sm:$0xff]
        %v816 = vld [vmem:[#allocation5 + $0xa60] sm:$0xff]
        %v817 = vld [vmem:[#allocation5 + $0xa68] sm:$0xff]
        %v818 = vld [vmem:[#allocation5 + $0xa70] sm:$0xff]
        %v819 = vld [vmem:[#allocation5 + $0xa78] sm:$0xff]
        %v820 = vld [vmem:[#allocation5 + $0xa80] sm:$0xff]
        %v821 = vld [vmem:[#allocation5 + $0xa88] sm:$0xff]
        %v822 = vld [vmem:[#allocation5 + $0xa90] sm:$0xff]
        %v823 = vld [vmem:[#allocation5 + $0xa98] sm:$0xff]
        %v824 = vld [vmem:[#allocation5 + $0xaa0] sm:$0xff]
        %v825 = vld [vmem:[#allocation5 + $0xaa8] sm:$0xff]
        %v826 = vld [vmem:[#allocation5 + $0xab0] sm:$0xff]
        %v827 = vld [vmem:[#allocation5 + $0xab8] sm:$0xff]
        %v828 = vld [vmem:[#allocation5 + $0xac0] sm:$0xff]
        %v829 = vld [vmem:[#allocation5 + $0xac8] sm:$0xff]
        %v830 = vld [vmem:[#allocation5 + $0xad0] sm:$0xff]
        %v831 = vld [vmem:[#allocation5 + $0xad8] sm:$0xff]
        %v832 = vld [vmem:[#allocation5 + $0xae0] sm:$0xff]
        %v833 = vld [vmem:[#allocation5 + $0xae8] sm:$0xff]
        %v834 = vld [vmem:[#allocation5 + $0xaf0] sm:$0xff]
        %v835 = vld [vmem:[#allocation5 + $0xaf8] sm:$0xff]
        %v836 = vld [vmem:[#allocation5 + $0xb00] sm:$0xff]
        %v837 = vld [vmem:[#allocation5 + $0xb08] sm:$0xff]
        %v838 = vld [vmem:[#allocation5 + $0xb10] sm:$0xff]
        %v839 = vld [vmem:[#allocation5 + $0xb18] sm:$0xff]
        %v840 = vld [vmem:[#allocation5 + $0xb20] sm:$0xff]
        %v841 = vld [vmem:[#allocation5 + $0xb28] sm:$0xff]
        %v842 = vld [vmem:[#allocation5 + $0xb30] sm:$0xff]
        %v843 = vld [vmem:[#allocation5 + $0xb38] sm:$0xff]
        %v844 = vld [vmem:[#allocation5 + $0xb40] sm:$0xff]
        %v845 = vld [vmem:[#allocation5 + $0xb48] sm:$0xff]
        %v846 = vld [vmem:[#allocation5 + $0xb50] sm:$0xff]
        %v847 = vld [vmem:[#allocation5 + $0xb58] sm:$0xff]
        %v848 = vld [vmem:[#allocation5 + $0xb60] sm:$0xff]
        %v849 = vld [vmem:[#allocation5 + $0xb68] sm:$0xff]
        %v850 = vld [vmem:[#allocation5 + $0xb70] sm:$0xff]
        %v851 = vld [vmem:[#allocation5 + $0xb78] sm:$0xff]
        %v852 = vld [vmem:[#allocation5 + $0xb80] sm:$0xff]
        %v853 = vld [vmem:[#allocation5 + $0xb88] sm:$0xff]
        %v854 = vld [vmem:[#allocation5 + $0xb90] sm:$0xff]
        %v855 = vld [vmem:[#allocation5 + $0xb98] sm:$0xff]
        %v856 = vld [vmem:[#allocation5 + $0xba0] sm:$0xff]
        %v857 = vld [vmem:[#allocation5 + $0xba8] sm:$0xff]
        %v858 = vld [vmem:[#allocation5 + $0xbb0] sm:$0xff]
        %v859 = vld [vmem:[#allocation5 + $0xbb8] sm:$0xff]
        %v860 = vld [vmem:[#allocation5 + $0xbc0] sm:$0xff]
        %v861 = vld [vmem:[#allocation5 + $0xbc8] sm:$0xff]
        %v862 = vld [vmem:[#allocation5 + $0xbd0] sm:$0xff]
        %v863 = vld [vmem:[#allocation5 + $0xbd8] sm:$0xff]
        %v864 = vld [vmem:[#allocation5 + $0xbe0] sm:$0xff]
        %v865 = vld [vmem:[#allocation5 + $0xbe8] sm:$0xff]
        %v866 = vld [vmem:[#allocation5 + $0xbf0] sm:$0xff]
        %v867 = vld [vmem:[#allocation5 + $0xbf8] sm:$0xff]
        %v868 = vld [vmem:[#allocation5 + $0xc00] sm:$0xff]
        %v869 = vld [vmem:[#allocation5 + $0xc08] sm:$0xff]
        %v870 = vld [vmem:[#allocation5 + $0xc10] sm:$0xff]
        %v871 = vld [vmem:[#allocation5 + $0xc18] sm:$0xff]
        %v872 = vld [vmem:[#allocation5 + $0xc20] sm:$0xff]
        %v873 = vld [vmem:[#allocation5 + $0xc28] sm:$0xff]
        %v874 = vld [vmem:[#allocation5 + $0xc30] sm:$0xff]
        %v875 = vld [vmem:[#allocation5 + $0xc38] sm:$0xff]
        %v876 = vld [vmem:[#allocation7] sm:$0xff]
        %v878 = vlaneseq
        %v879 = vshrl.u32 %v878, 7
        %v880 = vsub.s32 0, %v879
        %v881 = vrot.slane %v876, %v880
        %v882 = vlaneseq
        %v883 = vshrl.u32 %v882, 7
        %v884 = vsub.s32 1, %v883
        %v885 = vrot.slane %v876, %v884
        %v886 = vlaneseq
        %v887 = vshrl.u32 %v886, 7
        %v888 = vsub.s32 2, %v887
        %v889 = vrot.slane %v876, %v888
        %v890 = vlaneseq
        %v891 = vshrl.u32 %v890, 7
        %v892 = vsub.s32 3, %v891
        %v893 = vrot.slane %v876, %v892
        %v894 = vlaneseq
        %v895 = vshrl.u32 %v894, 7
        %v896 = vsub.s32 4, %v895
        %v897 = vrot.slane %v876, %v896
        %v898 = vlaneseq
        %v899 = vshrl.u32 %v898, 7
        %v900 = vsub.s32 5, %v899
        %v901 = vrot.slane %v876, %v900
        %v902 = vlaneseq
        %v903 = vshrl.u32 %v902, 7
        %v904 = vsub.s32 6, %v903
        %v905 = vrot.slane %v876, %v904
        %v906 = vlaneseq
        %v907 = vshrl.u32 %v906, 7
        %v908 = vsub.s32 7, %v907
        %v909 = vrot.slane %v876, %v908
        %v1310 = vunpack.c.l.b16 %v484
        %v1311 = vunpack.c.h.b16 %v484
        %v1312 = vunpack.c.l.b16 %v485
        %v1313 = vunpack.c.h.b16 %v485
        %v1314 = vunpack.c.l.b16 %v486
        %v1315 = vunpack.c.h.b16 %v486
        %v1316 = vunpack.c.l.b16 %v487
        %v1317 = vunpack.c.h.b16 %v487
        %v1318 = vunpack.c.l.b16 %v488
        %v1319 = vunpack.c.h.b16 %v488
        %v1320 = vunpack.c.l.b16 %v489
        %v1321 = vunpack.c.h.b16 %v489
        %v1322 = vunpack.c.l.b16 %v490
        %v1323 = vunpack.c.h.b16 %v490
        %v1324 = vunpack.c.l.b16 %v491
        %v1325 = vunpack.c.h.b16 %v491
        %v1326 = vunpack.c.l.b16 %v492
        %v1327 = vunpack.c.h.b16 %v492
        %v1328 = vunpack.c.l.b16 %v493
        %v1329 = vunpack.c.h.b16 %v493
        %v1330 = vunpack.c.l.b16 %v494
        %v1331 = vunpack.c.h.b16 %v494
        %v1332 = vunpack.c.l.b16 %v495
        %v1333 = vunpack.c.h.b16 %v495
        %v1334 = vunpack.c.l.b16 %v496
        %v1335 = vunpack.c.h.b16 %v496
        %v1336 = vunpack.c.l.b16 %v497
        %v1337 = vunpack.c.h.b16 %v497
        %v1338 = vunpack.c.l.b16 %v498
        %v1339 = vunpack.c.h.b16 %v498
        %v1340 = vunpack.c.l.b16 %v499
        %v1341 = vunpack.c.h.b16 %v499
        %v1342 = vunpack.c.l.b16 %v500
        %v1343 = vunpack.c.h.b16 %v500
        %v1344 = vunpack.c.l.b16 %v501
        %v1345 = vunpack.c.h.b16 %v501
        %v1346 = vunpack.c.l.b16 %v502
        %v1347 = vunpack.c.h.b16 %v502
        %v1348 = vunpack.c.l.b16 %v503
        %v1349 = vunpack.c.h.b16 %v503
        %v1350 = vunpack.c.l.b16 %v504
        %v1351 = vunpack.c.h.b16 %v504
        %v1352 = vunpack.c.l.b16 %v505
        %v1353 = vunpack.c.h.b16 %v505
        %v1354 = vunpack.c.l.b16 %v506
        %v1355 = vunpack.c.h.b16 %v506
        %v1356 = vunpack.c.l.b16 %v507
        %v1357 = vunpack.c.h.b16 %v507
        %v1358 = vunpack.c.l.b16 %v508
        %v1359 = vunpack.c.h.b16 %v508
        %v1360 = vunpack.c.l.b16 %v509
        %v1361 = vunpack.c.h.b16 %v509
        %v1362 = vunpack.c.l.b16 %v510
        %v1363 = vunpack.c.h.b16 %v510
        %v1364 = vunpack.c.l.b16 %v511
        %v1365 = vunpack.c.h.b16 %v511
        %v1366 = vunpack.c.l.b16 %v512
        %v1367 = vunpack.c.h.b16 %v512
        %v1368 = vunpack.c.l.b16 %v513
        %v1369 = vunpack.c.h.b16 %v513
        %v1370 = vunpack.c.l.b16 %v514
        %v1371 = vunpack.c.h.b16 %v514
        %v1372 = vunpack.c.l.b16 %v515
        %v1373 = vunpack.c.h.b16 %v515
        %v1374 = vunpack.c.l.b16 %v516
        %v1375 = vunpack.c.h.b16 %v516
        %v1376 = vunpack.c.l.b16 %v517
        %v1377 = vunpack.c.h.b16 %v517
        %v1378 = vunpack.c.l.b16 %v518
        %v1379 = vunpack.c.h.b16 %v518
        %v1380 = vunpack.c.l.b16 %v519
        %v1381 = vunpack.c.h.b16 %v519
        %v1382 = vunpack.c.l.b16 %v520
        %v1383 = vunpack.c.h.b16 %v520
        %v1384 = vunpack.c.l.b16 %v521
        %v1385 = vunpack.c.h.b16 %v521
        %v1386 = vunpack.c.l.b16 %v522
        %v1387 = vunpack.c.h.b16 %v522
        %v1388 = vunpack.c.l.b16 %v523
        %v1389 = vunpack.c.h.b16 %v523
        %v1390 = vunpack.c.l.b16 %v524
        %v1391 = vunpack.c.h.b16 %v524
        %v1392 = vunpack.c.l.b16 %v525
        %v1393 = vunpack.c.h.b16 %v525
        %v1394 = vunpack.c.l.b16 %v526
        %v1395 = vunpack.c.h.b16 %v526
        %v1396 = vunpack.c.l.b16 %v527
        %v1397 = vunpack.c.h.b16 %v527
        %v1398 = vunpack.c.l.b16 %v528
        %v1399 = vunpack.c.h.b16 %v528
        %v1400 = vunpack.c.l.b16 %v529
        %v1401 = vunpack.c.h.b16 %v529
        %v1402 = vunpack.c.l.b16 %v530
        %v1403 = vunpack.c.h.b16 %v530
        %v1404 = vunpack.c.l.b16 %v531
        %v1405 = vunpack.c.h.b16 %v531
        %v1406 = vunpack.c.l.b16 %v532
        %v1407 = vunpack.c.h.b16 %v532
        %v1408 = vunpack.c.l.b16 %v533
        %v1409 = vunpack.c.h.b16 %v533
        %v1410 = vunpack.c.l.b16 %v534
        %v1411 = vunpack.c.h.b16 %v534
        %v1412 = vunpack.c.l.b16 %v535
        %v1413 = vunpack.c.h.b16 %v535
        %v1414 = vunpack.c.l.b16 %v536
        %v1415 = vunpack.c.h.b16 %v536
        %v1416 = vunpack.c.l.b16 %v537
        %v1417 = vunpack.c.h.b16 %v537
        %v1418 = vunpack.c.l.b16 %v538
        %v1419 = vunpack.c.h.b16 %v538
        %v1420 = vunpack.c.l.b16 %v539
        %v1421 = vunpack.c.h.b16 %v539
        %v1422 = vunpack.c.l.b16 %v540
        %v1423 = vunpack.c.h.b16 %v540
        %v1424 = vunpack.c.l.b16 %v541
        %v1425 = vunpack.c.h.b16 %v541
        %v1426 = vunpack.c.l.b16 %v542
        %v1427 = vunpack.c.h.b16 %v542
        %v1428 = vunpack.c.l.b16 %v543
        %v1429 = vunpack.c.h.b16 %v543
        %v1430 = vunpack.c.l.b16 %v544
        %v1431 = vunpack.c.h.b16 %v544
        %v1432 = vunpack.c.l.b16 %v545
        %v1433 = vunpack.c.h.b16 %v545
        %v1434 = vunpack.c.l.b16 %v546
        %v1435 = vunpack.c.h.b16 %v546
        %v1436 = vunpack.c.l.b16 %v547
        %v1437 = vunpack.c.h.b16 %v547
        %v1438 = vunpack.c.l.b16 %v548
        %v1439 = vunpack.c.h.b16 %v548
        %v1440 = vunpack.c.l.b16 %v549
        %v1441 = vunpack.c.h.b16 %v549
        %v1442 = vunpack.c.l.b16 %v550
        %v1443 = vunpack.c.h.b16 %v550
        %v1444 = vunpack.c.l.b16 %v551
        %v1445 = vunpack.c.h.b16 %v551
        %v1446 = vunpack.c.l.b16 %v552
        %v1447 = vunpack.c.h.b16 %v552
        %v1448 = vunpack.c.l.b16 %v553
        %v1449 = vunpack.c.h.b16 %v553
        %v1450 = vunpack.c.l.b16 %v554
        %v1451 = vunpack.c.h.b16 %v554
        %v1452 = vunpack.c.l.b16 %v555
        %v1453 = vunpack.c.h.b16 %v555
        %v1454 = vunpack.c.l.b16 %v556
        %v1455 = vunpack.c.h.b16 %v556
        %v1456 = vunpack.c.l.b16 %v557
        %v1457 = vunpack.c.h.b16 %v557
        %v1458 = vunpack.c.l.b16 %v558
        %v1459 = vunpack.c.h.b16 %v558
        %v1460 = vunpack.c.l.b16 %v559
        %v1461 = vunpack.c.h.b16 %v559
        %v1462 = vunpack.c.l.b16 %v560
        %v1463 = vunpack.c.h.b16 %v560
        %v1464 = vunpack.c.l.b16 %v561
        %v1465 = vunpack.c.h.b16 %v561
        %v1466 = vunpack.c.l.b16 %v562
        %v1467 = vunpack.c.h.b16 %v562
        %v1468 = vunpack.c.l.b16 %v563
        %v1469 = vunpack.c.h.b16 %v563
        %v1470 = vunpack.c.l.b16 %v564
        %v1471 = vunpack.c.h.b16 %v564
        %v1472 = vunpack.c.l.b16 %v565
        %v1473 = vunpack.c.h.b16 %v565
        %v1474 = vunpack.c.l.b16 %v566
        %v1475 = vunpack.c.h.b16 %v566
        %v1476 = vunpack.c.l.b16 %v567
        %v1477 = vunpack.c.h.b16 %v567
        %v1478 = vunpack.c.l.b16 %v568
        %v1479 = vunpack.c.h.b16 %v568
        %v1480 = vunpack.c.l.b16 %v569
        %v1481 = vunpack.c.h.b16 %v569
        %v1482 = vunpack.c.l.b16 %v570
        %v1483 = vunpack.c.h.b16 %v570
        %v1484 = vunpack.c.l.b16 %v571
        %v1485 = vunpack.c.h.b16 %v571
        %v1486 = vunpack.c.l.b16 %v572
        %v1487 = vunpack.c.h.b16 %v572
        %v1488 = vunpack.c.l.b16 %v573
        %v1489 = vunpack.c.h.b16 %v573
        %v1490 = vunpack.c.l.b16 %v574
        %v1491 = vunpack.c.h.b16 %v574
        %v1492 = vunpack.c.l.b16 %v575
        %v1493 = vunpack.c.h.b16 %v575
        %v1494 = vunpack.c.l.b16 %v576
        %v1495 = vunpack.c.h.b16 %v576
        %v1496 = vunpack.c.l.b16 %v577
        %v1497 = vunpack.c.h.b16 %v577
        %v1498 = vunpack.c.l.b16 %v578
        %v1499 = vunpack.c.h.b16 %v578
        %v1500 = vunpack.c.l.b16 %v579
        %v1501 = vunpack.c.h.b16 %v579
        %v1502 = vunpack.c.l.b16 %v580
        %v1503 = vunpack.c.h.b16 %v580
        %v1504 = vunpack.c.l.b16 %v581
        %v1505 = vunpack.c.h.b16 %v581
        %v1506 = vunpack.c.l.b16 %v582
        %v1507 = vunpack.c.h.b16 %v582
        %v1508 = vunpack.c.l.b16 %v583
        %v1509 = vunpack.c.h.b16 %v583
        %v1510 = vunpack.c.l.b16 %v584
        %v1511 = vunpack.c.h.b16 %v584
        %v1512 = vunpack.c.l.b16 %v585
        %v1513 = vunpack.c.h.b16 %v585
        %v1514 = vunpack.c.l.b16 %v586
        %v1515 = vunpack.c.h.b16 %v586
        %v1516 = vunpack.c.l.b16 %v587
        %v1517 = vunpack.c.h.b16 %v587
        %v1518 = vunpack.c.l.b16 %v588
        %v1519 = vunpack.c.h.b16 %v588
        %v1520 = vunpack.c.l.b16 %v589
        %v1521 = vunpack.c.h.b16 %v589
        %v1522 = vunpack.c.l.b16 %v590
        %v1523 = vunpack.c.h.b16 %v590
        %v1524 = vunpack.c.l.b16 %v591
        %v1525 = vunpack.c.h.b16 %v591
        %v1526 = vunpack.c.l.b16 %v592
        %v1527 = vunpack.c.h.b16 %v592
        %v1528 = vunpack.c.l.b16 %v593
        %v1529 = vunpack.c.h.b16 %v593
        %v1530 = vunpack.c.l.b16 %v594
        %v1531 = vunpack.c.h.b16 %v594
        %v1532 = vunpack.c.l.b16 %v595
        %v1533 = vunpack.c.h.b16 %v595
        %v1534 = vunpack.c.l.b16 %v596
        %v1535 = vunpack.c.h.b16 %v596
        %v1536 = vunpack.c.l.b16 %v597
        %v1537 = vunpack.c.h.b16 %v597
        %v1538 = vunpack.c.l.b16 %v598
        %v1539 = vunpack.c.h.b16 %v598
        %v1540 = vunpack.c.l.b16 %v599
        %v1541 = vunpack.c.h.b16 %v599
        %v1542 = vunpack.c.l.b16 %v600
        %v1543 = vunpack.c.h.b16 %v600
        %v1544 = vunpack.c.l.b16 %v601
        %v1545 = vunpack.c.h.b16 %v601
        %v1546 = vunpack.c.l.b16 %v602
        %v1547 = vunpack.c.h.b16 %v602
        %v1548 = vunpack.c.l.b16 %v603
        %v1549 = vunpack.c.h.b16 %v603
        %v1550 = vunpack.c.l.b16 %v604
        %v1551 = vunpack.c.h.b16 %v604
        %v1552 = vunpack.c.l.b16 %v605
        %v1553 = vunpack.c.h.b16 %v605
        %v1554 = vunpack.c.l.b16 %v606
        %v1555 = vunpack.c.h.b16 %v606
        %v1556 = vunpack.c.l.b16 %v607
        %v1557 = vunpack.c.h.b16 %v607
        %v1558 = vunpack.c.l.b16 %v608
        %v1559 = vunpack.c.h.b16 %v608
        %v1560 = vunpack.c.l.b16 %v609
        %v1561 = vunpack.c.h.b16 %v609
        %v1562 = vunpack.c.l.b16 %v610
        %v1563 = vunpack.c.h.b16 %v610
        %v1564 = vunpack.c.l.b16 %v611
        %v1565 = vunpack.c.h.b16 %v611
        %v1566 = vunpack.c.l.b16 %v612
        %v1567 = vunpack.c.h.b16 %v612
        %v1568 = vunpack.c.l.b16 %v613
        %v1569 = vunpack.c.h.b16 %v613
        %v1570 = vunpack.c.l.b16 %v614
        %v1571 = vunpack.c.h.b16 %v614
        %v1572 = vunpack.c.l.b16 %v615
        %v1573 = vunpack.c.h.b16 %v615
        %v1574 = vunpack.c.l.b16 %v616
        %v1575 = vunpack.c.h.b16 %v616
        %v1576 = vunpack.c.l.b16 %v617
        %v1577 = vunpack.c.h.b16 %v617
        %v1578 = vunpack.c.l.b16 %v618
        %v1579 = vunpack.c.h.b16 %v618
        %v1580 = vunpack.c.l.b16 %v619
        %v1581 = vunpack.c.h.b16 %v619
        %v1582 = vunpack.c.l.b16 %v620
        %v1583 = vunpack.c.h.b16 %v620
        %v1584 = vunpack.c.l.b16 %v621
        %v1585 = vunpack.c.h.b16 %v621
        %v1586 = vunpack.c.l.b16 %v622
        %v1587 = vunpack.c.h.b16 %v622
        %v1588 = vunpack.c.l.b16 %v623
        %v1589 = vunpack.c.h.b16 %v623
        %v1590 = vunpack.c.l.b16 %v624
        %v1591 = vunpack.c.h.b16 %v624
        %v1592 = vunpack.c.l.b16 %v625
        %v1593 = vunpack.c.h.b16 %v625
        %v1594 = vunpack.c.l.b16 %v626
        %v1595 = vunpack.c.h.b16 %v626
        %v1596 = vunpack.c.l.b16 %v627
        %v1597 = vunpack.c.h.b16 %v627
        %v1598 = vunpack.c.l.b16 %v628
        %v1599 = vunpack.c.h.b16 %v628
        %v1600 = vunpack.c.l.b16 %v629
        %v1601 = vunpack.c.h.b16 %v629
        %v1602 = vunpack.c.l.b16 %v630
        %v1603 = vunpack.c.h.b16 %v630
        %v1604 = vunpack.c.l.b16 %v631
        %v1605 = vunpack.c.h.b16 %v631
        %v1606 = vunpack.c.l.b16 %v632
        %v1607 = vunpack.c.h.b16 %v632
        %v1608 = vunpack.c.l.b16 %v633
        %v1609 = vunpack.c.h.b16 %v633
        %v1610 = vunpack.c.l.b16 %v634
        %v1611 = vunpack.c.h.b16 %v634
        %v1612 = vunpack.c.l.b16 %v635
        %v1613 = vunpack.c.h.b16 %v635
        %v1614 = vunpack.c.l.b16 %v636
        %v1615 = vunpack.c.h.b16 %v636
        %v1616 = vunpack.c.l.b16 %v637
        %v1617 = vunpack.c.h.b16 %v637
        %v1618 = vunpack.c.l.b16 %v638
        %v1619 = vunpack.c.h.b16 %v638
        %v1620 = vunpack.c.l.b16 %v639
        %v1621 = vunpack.c.h.b16 %v639
        %v1622 = vunpack.c.l.b16 %v640
        %v1623 = vunpack.c.h.b16 %v640
        %v1624 = vunpack.c.l.b16 %v641
        %v1625 = vunpack.c.h.b16 %v641
        %v1626 = vunpack.c.l.b16 %v642
        %v1627 = vunpack.c.h.b16 %v642
        %v1628 = vunpack.c.l.b16 %v643
        %v1629 = vunpack.c.h.b16 %v643
        %v1630 = vunpack.c.l.b16 %v644
        %v1631 = vunpack.c.h.b16 %v644
        %v1632 = vunpack.c.l.b16 %v645
        %v1633 = vunpack.c.h.b16 %v645
        %v1634 = vunpack.c.l.b16 %v646
        %v1635 = vunpack.c.h.b16 %v646
        %v1636 = vunpack.c.l.b16 %v647
        %v1637 = vunpack.c.h.b16 %v647
        %v1638 = vunpack.c.l.b16 %v648
        %v1639 = vunpack.c.h.b16 %v648
        %v1640 = vunpack.c.l.b16 %v649
        %v1641 = vunpack.c.h.b16 %v649
        %v1642 = vunpack.c.l.b16 %v650
        %v1643 = vunpack.c.h.b16 %v650
        %v1644 = vunpack.c.l.b16 %v651
        %v1645 = vunpack.c.h.b16 %v651
        %v1646 = vunpack.c.l.b16 %v652
        %v1647 = vunpack.c.h.b16 %v652
        %v1648 = vunpack.c.l.b16 %v653
        %v1649 = vunpack.c.h.b16 %v653
        %v1650 = vunpack.c.l.b16 %v654
        %v1651 = vunpack.c.h.b16 %v654
        %v1652 = vunpack.c.l.b16 %v655
        %v1653 = vunpack.c.h.b16 %v655
        %v1654 = vunpack.c.l.b16 %v656
        %v1655 = vunpack.c.h.b16 %v656
        %v1656 = vunpack.c.l.b16 %v657
        %v1657 = vunpack.c.h.b16 %v657
        %v1658 = vunpack.c.l.b16 %v658
        %v1659 = vunpack.c.h.b16 %v658
        %v1660 = vunpack.c.l.b16 %v659
        %v1661 = vunpack.c.h.b16 %v659
        %v1662 = vunpack.c.l.b16 %v660
        %v1663 = vunpack.c.h.b16 %v660
        %v1664 = vunpack.c.l.b16 %v661
        %v1665 = vunpack.c.h.b16 %v661
        %v1666 = vunpack.c.l.b16 %v662
        %v1667 = vunpack.c.h.b16 %v662
        %v1668 = vunpack.c.l.b16 %v663
        %v1669 = vunpack.c.h.b16 %v663
        %v1670 = vunpack.c.l.b16 %v664
        %v1671 = vunpack.c.h.b16 %v664
        %v1672 = vunpack.c.l.b16 %v665
        %v1673 = vunpack.c.h.b16 %v665
        %v1674 = vunpack.c.l.b16 %v666
        %v1675 = vunpack.c.h.b16 %v666
        %v1676 = vunpack.c.l.b16 %v667
        %v1677 = vunpack.c.h.b16 %v667
        %v1678 = vunpack.c.l.b16 %v668
        %v1679 = vunpack.c.h.b16 %v668
        %v1680 = vunpack.c.l.b16 %v669
        %v1681 = vunpack.c.h.b16 %v669
        %v1682 = vunpack.c.l.b16 %v670
        %v1683 = vunpack.c.h.b16 %v670
        %v1684 = vunpack.c.l.b16 %v671
        %v1685 = vunpack.c.h.b16 %v671
        %v1686 = vunpack.c.l.b16 %v672
        %v1687 = vunpack.c.h.b16 %v672
        %v1688 = vunpack.c.l.b16 %v673
        %v1689 = vunpack.c.h.b16 %v673
        %v1690 = vunpack.c.l.b16 %v674
        %v1691 = vunpack.c.h.b16 %v674
        %v1692 = vunpack.c.l.b16 %v675
        %v1693 = vunpack.c.h.b16 %v675
        %v1694 = vunpack.c.l.b16 %v676
        %v1695 = vunpack.c.h.b16 %v676
        %v1696 = vunpack.c.l.b16 %v677
        %v1697 = vunpack.c.h.b16 %v677
        %v1698 = vunpack.c.l.b16 %v678
        %v1699 = vunpack.c.h.b16 %v678
        %v1700 = vunpack.c.l.b16 %v679
        %v1701 = vunpack.c.h.b16 %v679
        %v1702 = vunpack.c.l.b16 %v680
        %v1703 = vunpack.c.h.b16 %v680
        %v1704 = vunpack.c.l.b16 %v681
        %v1705 = vunpack.c.h.b16 %v681
        %v1706 = vunpack.c.l.b16 %v682
        %v1707 = vunpack.c.h.b16 %v682
        %v1708 = vunpack.c.l.b16 %v683
        %v1709 = vunpack.c.h.b16 %v683
        %v1710 = vunpack.c.l.b16 %v684
        %v1711 = vunpack.c.h.b16 %v684
        %v1712 = vunpack.c.l.b16 %v685
        %v1713 = vunpack.c.h.b16 %v685
        %v1714 = vunpack.c.l.b16 %v686
        %v1715 = vunpack.c.h.b16 %v686
        %v1716 = vunpack.c.l.b16 %v687
        %v1717 = vunpack.c.h.b16 %v687
        %v1718 = vunpack.c.l.b16 %v688
        %v1719 = vunpack.c.h.b16 %v688
        %v1720 = vunpack.c.l.b16 %v689
        %v1721 = vunpack.c.h.b16 %v689
        %v1722 = vunpack.c.l.b16 %v690
        %v1723 = vunpack.c.h.b16 %v690
        %v1724 = vunpack.c.l.b16 %v691
        %v1725 = vunpack.c.h.b16 %v691
        %v1726 = vunpack.c.l.b16 %v692
        %v1727 = vunpack.c.h.b16 %v692
        %v1728 = vunpack.c.l.b16 %v693
        %v1729 = vunpack.c.h.b16 %v693
        %v1730 = vunpack.c.l.b16 %v694
        %v1731 = vunpack.c.h.b16 %v694
        %v1732 = vunpack.c.l.b16 %v695
        %v1733 = vunpack.c.h.b16 %v695
        %v1734 = vunpack.c.l.b16 %v696
        %v1735 = vunpack.c.h.b16 %v696
        %v1736 = vunpack.c.l.b16 %v697
        %v1737 = vunpack.c.h.b16 %v697
        %v1738 = vunpack.c.l.b16 %v698
        %v1739 = vunpack.c.h.b16 %v698
        %v1740 = vunpack.c.l.b16 %v699
        %v1741 = vunpack.c.h.b16 %v699
        %v1742 = vunpack.c.l.b16 %v700
        %v1743 = vunpack.c.h.b16 %v700
        %v1744 = vunpack.c.l.b16 %v701
        %v1745 = vunpack.c.h.b16 %v701
        %v1746 = vunpack.c.l.b16 %v702
        %v1747 = vunpack.c.h.b16 %v702
        %v1748 = vunpack.c.l.b16 %v703
        %v1749 = vunpack.c.h.b16 %v703
        %v1750 = vunpack.c.l.b16 %v704
        %v1751 = vunpack.c.h.b16 %v704
        %v1752 = vunpack.c.l.b16 %v705
        %v1753 = vunpack.c.h.b16 %v705
        %v1754 = vunpack.c.l.b16 %v706
        %v1755 = vunpack.c.h.b16 %v706
        %v1756 = vunpack.c.l.b16 %v707
        %v1757 = vunpack.c.h.b16 %v707
        %v1758 = vunpack.c.l.b16 %v708
        %v1759 = vunpack.c.h.b16 %v708
        %v1760 = vunpack.c.l.b16 %v709
        %v1761 = vunpack.c.h.b16 %v709
        %v1762 = vunpack.c.l.b16 %v710
        %v1763 = vunpack.c.h.b16 %v710
        %v1764 = vunpack.c.l.b16 %v711
        %v1765 = vunpack.c.h.b16 %v711
        %v1766 = vunpack.c.l.b16 %v712
        %v1767 = vunpack.c.h.b16 %v712
        %v1768 = vunpack.c.l.b16 %v713
        %v1769 = vunpack.c.h.b16 %v713
        %v1770 = vunpack.c.l.b16 %v714
        %v1771 = vunpack.c.h.b16 %v714
        %v1772 = vunpack.c.l.b16 %v715
        %v1773 = vunpack.c.h.b16 %v715
        %v1774 = vunpack.c.l.b16 %v716
        %v1775 = vunpack.c.h.b16 %v716
        %v1776 = vunpack.c.l.b16 %v717
        %v1777 = vunpack.c.h.b16 %v717
        %v1778 = vunpack.c.l.b16 %v718
        %v1779 = vunpack.c.h.b16 %v718
        %v1780 = vunpack.c.l.b16 %v719
        %v1781 = vunpack.c.h.b16 %v719
        %v1782 = vunpack.c.l.b16 %v720
        %v1783 = vunpack.c.h.b16 %v720
        %v1784 = vunpack.c.l.b16 %v721
        %v1785 = vunpack.c.h.b16 %v721
        %v1786 = vunpack.c.l.b16 %v722
        %v1787 = vunpack.c.h.b16 %v722
        %v1788 = vunpack.c.l.b16 %v723
        %v1789 = vunpack.c.h.b16 %v723
        %v1790 = vunpack.c.l.b16 %v724
        %v1791 = vunpack.c.h.b16 %v724
        %v1792 = vunpack.c.l.b16 %v725
        %v1793 = vunpack.c.h.b16 %v725
        %v1794 = vunpack.c.l.b16 %v726
        %v1795 = vunpack.c.h.b16 %v726
        %v1796 = vunpack.c.l.b16 %v727
        %v1797 = vunpack.c.h.b16 %v727
        %v1798 = vunpack.c.l.b16 %v728
        %v1799 = vunpack.c.h.b16 %v728
        %v1800 = vunpack.c.l.b16 %v729
        %v1801 = vunpack.c.h.b16 %v729
        %v1802 = vunpack.c.l.b16 %v730
        %v1803 = vunpack.c.h.b16 %v730
        %v1804 = vunpack.c.l.b16 %v731
        %v1805 = vunpack.c.h.b16 %v731
        %v1806 = vunpack.c.l.b16 %v732
        %v1807 = vunpack.c.h.b16 %v732
        %v1808 = vunpack.c.l.b16 %v733
        %v1809 = vunpack.c.h.b16 %v733
        %v1810 = vunpack.c.l.b16 %v734
        %v1811 = vunpack.c.h.b16 %v734
        %v1812 = vunpack.c.l.b16 %v735
        %v1813 = vunpack.c.h.b16 %v735
        %v1814 = vunpack.c.l.b16 %v736
        %v1815 = vunpack.c.h.b16 %v736
        %v1816 = vunpack.c.l.b16 %v737
        %v1817 = vunpack.c.h.b16 %v737
        %v1818 = vunpack.c.l.b16 %v738
        %v1819 = vunpack.c.h.b16 %v738
        %v1820 = vunpack.c.l.b16 %v739
        %v1821 = vunpack.c.h.b16 %v739
        %v1822 = vunpack.c.l.b16 %v740
        %v1823 = vunpack.c.h.b16 %v740
        %v1824 = vunpack.c.l.b16 %v741
        %v1825 = vunpack.c.h.b16 %v741
        %v1826 = vunpack.c.l.b16 %v742
        %v1827 = vunpack.c.h.b16 %v742
        %v1828 = vunpack.c.l.b16 %v743
        %v1829 = vunpack.c.h.b16 %v743
        %v1830 = vunpack.c.l.b16 %v744
        %v1831 = vunpack.c.h.b16 %v744
        %v1832 = vunpack.c.l.b16 %v745
        %v1833 = vunpack.c.h.b16 %v745
        %v1834 = vunpack.c.l.b16 %v746
        %v1835 = vunpack.c.h.b16 %v746
        %v1836 = vunpack.c.l.b16 %v747
        %v1837 = vunpack.c.h.b16 %v747
        %v1838 = vunpack.c.l.b16 %v748
        %v1839 = vunpack.c.h.b16 %v748
        %v1840 = vunpack.c.l.b16 %v749
        %v1841 = vunpack.c.h.b16 %v749
        %v1842 = vunpack.c.l.b16 %v750
        %v1843 = vunpack.c.h.b16 %v750
        %v1844 = vunpack.c.l.b16 %v751
        %v1845 = vunpack.c.h.b16 %v751
        %v1846 = vunpack.c.l.b16 %v752
        %v1847 = vunpack.c.h.b16 %v752
        %v1848 = vunpack.c.l.b16 %v753
        %v1849 = vunpack.c.h.b16 %v753
        %v1850 = vunpack.c.l.b16 %v754
        %v1851 = vunpack.c.h.b16 %v754
        %v1852 = vunpack.c.l.b16 %v755
        %v1853 = vunpack.c.h.b16 %v755
        %v1854 = vunpack.c.l.b16 %v756
        %v1855 = vunpack.c.h.b16 %v756
        %v1856 = vunpack.c.l.b16 %v757
        %v1857 = vunpack.c.h.b16 %v757
        %v1858 = vunpack.c.l.b16 %v758
        %v1859 = vunpack.c.h.b16 %v758
        %v1860 = vunpack.c.l.b16 %v759
        %v1861 = vunpack.c.h.b16 %v759
        %v1862 = vunpack.c.l.b16 %v760
        %v1863 = vunpack.c.h.b16 %v760
        %v1864 = vunpack.c.l.b16 %v761
        %v1865 = vunpack.c.h.b16 %v761
        %v1866 = vunpack.c.l.b16 %v762
        %v1867 = vunpack.c.h.b16 %v762
        %v1868 = vunpack.c.l.b16 %v763
        %v1869 = vunpack.c.h.b16 %v763
        %v1870 = vunpack.c.l.b16 %v764
        %v1871 = vunpack.c.h.b16 %v764
        %v1872 = vunpack.c.l.b16 %v765
        %v1873 = vunpack.c.h.b16 %v765
        %v1874 = vunpack.c.l.b16 %v766
        %v1875 = vunpack.c.h.b16 %v766
        %v1876 = vunpack.c.l.b16 %v767
        %v1877 = vunpack.c.h.b16 %v767
        %v1878 = vunpack.c.l.b16 %v768
        %v1879 = vunpack.c.h.b16 %v768
        %v1880 = vunpack.c.l.b16 %v769
        %v1881 = vunpack.c.h.b16 %v769
        %v1882 = vunpack.c.l.b16 %v770
        %v1883 = vunpack.c.h.b16 %v770
        %v1884 = vunpack.c.l.b16 %v771
        %v1885 = vunpack.c.h.b16 %v771
        %v1886 = vunpack.c.l.b16 %v772
        %v1887 = vunpack.c.h.b16 %v772
        %v1888 = vunpack.c.l.b16 %v773
        %v1889 = vunpack.c.h.b16 %v773
        %v1890 = vunpack.c.l.b16 %v774
        %v1891 = vunpack.c.h.b16 %v774
        %v1892 = vunpack.c.l.b16 %v775
        %v1893 = vunpack.c.h.b16 %v775
        %v1894 = vunpack.c.l.b16 %v776
        %v1895 = vunpack.c.h.b16 %v776
        %v1896 = vunpack.c.l.b16 %v777
        %v1897 = vunpack.c.h.b16 %v777
        %v1898 = vunpack.c.l.b16 %v778
        %v1899 = vunpack.c.h.b16 %v778
        %v1900 = vunpack.c.l.b16 %v779
        %v1901 = vunpack.c.h.b16 %v779
        %v1902 = vunpack.c.l.b16 %v780
        %v1903 = vunpack.c.h.b16 %v780
        %v1904 = vunpack.c.l.b16 %v781
        %v1905 = vunpack.c.h.b16 %v781
        %v1906 = vunpack.c.l.b16 %v782
        %v1907 = vunpack.c.h.b16 %v782
        %v1908 = vunpack.c.l.b16 %v783
        %v1909 = vunpack.c.h.b16 %v783
        %v1910 = vunpack.c.l.b16 %v784
        %v1911 = vunpack.c.h.b16 %v784
        %v1912 = vunpack.c.l.b16 %v785
        %v1913 = vunpack.c.h.b16 %v785
        %v1914 = vunpack.c.l.b16 %v786
        %v1915 = vunpack.c.h.b16 %v786
        %v1916 = vunpack.c.l.b16 %v787
        %v1917 = vunpack.c.h.b16 %v787
        %v1918 = vunpack.c.l.b16 %v788
        %v1919 = vunpack.c.h.b16 %v788
        %v1920 = vunpack.c.l.b16 %v789
        %v1921 = vunpack.c.h.b16 %v789
        %v1922 = vunpack.c.l.b16 %v790
        %v1923 = vunpack.c.h.b16 %v790
        %v1924 = vunpack.c.l.b16 %v791
        %v1925 = vunpack.c.h.b16 %v791
        %v1926 = vunpack.c.l.b16 %v792
        %v1927 = vunpack.c.h.b16 %v792
        %v1928 = vunpack.c.l.b16 %v793
        %v1929 = vunpack.c.h.b16 %v793
        %v1930 = vunpack.c.l.b16 %v794
        %v1931 = vunpack.c.h.b16 %v794
        %v1932 = vunpack.c.l.b16 %v795
        %v1933 = vunpack.c.h.b16 %v795
        %v1934 = vunpack.c.l.b16 %v796
        %v1935 = vunpack.c.h.b16 %v796
        %v1936 = vunpack.c.l.b16 %v797
        %v1937 = vunpack.c.h.b16 %v797
        %v1938 = vunpack.c.l.b16 %v798
        %v1939 = vunpack.c.h.b16 %v798
        %v1940 = vunpack.c.l.b16 %v799
        %v1941 = vunpack.c.h.b16 %v799
        %v1942 = vunpack.c.l.b16 %v800
        %v1943 = vunpack.c.h.b16 %v800
        %v1944 = vunpack.c.l.b16 %v801
        %v1945 = vunpack.c.h.b16 %v801
        %v1946 = vunpack.c.l.b16 %v802
        %v1947 = vunpack.c.h.b16 %v802
        %v1948 = vunpack.c.l.b16 %v803
        %v1949 = vunpack.c.h.b16 %v803
        %v1950 = vunpack.c.l.b16 %v804
        %v1951 = vunpack.c.h.b16 %v804
        %v1952 = vunpack.c.l.b16 %v805
        %v1953 = vunpack.c.h.b16 %v805
        %v1954 = vunpack.c.l.b16 %v806
        %v1955 = vunpack.c.h.b16 %v806
        %v1956 = vunpack.c.l.b16 %v807
        %v1957 = vunpack.c.h.b16 %v807
        %v1958 = vunpack.c.l.b16 %v808
        %v1959 = vunpack.c.h.b16 %v808
        %v1960 = vunpack.c.l.b16 %v809
        %v1961 = vunpack.c.h.b16 %v809
        %v1962 = vunpack.c.l.b16 %v810
        %v1963 = vunpack.c.h.b16 %v810
        %v1964 = vunpack.c.l.b16 %v811
        %v1965 = vunpack.c.h.b16 %v811
        %v1966 = vunpack.c.l.b16 %v812
        %v1967 = vunpack.c.h.b16 %v812
        %v1968 = vunpack.c.l.b16 %v813
        %v1969 = vunpack.c.h.b16 %v813
        %v1970 = vunpack.c.l.b16 %v814
        %v1971 = vunpack.c.h.b16 %v814
        %v1972 = vunpack.c.l.b16 %v815
        %v1973 = vunpack.c.h.b16 %v815
        %v1974 = vunpack.c.l.b16 %v816
        %v1975 = vunpack.c.h.b16 %v816
        %v1976 = vunpack.c.l.b16 %v817
        %v1977 = vunpack.c.h.b16 %v817
        %v1978 = vunpack.c.l.b16 %v818
        %v1979 = vunpack.c.h.b16 %v818
        %v1980 = vunpack.c.l.b16 %v819
        %v1981 = vunpack.c.h.b16 %v819
        %v1982 = vunpack.c.l.b16 %v820
        %v1983 = vunpack.c.h.b16 %v820
        %v1984 = vunpack.c.l.b16 %v821
        %v1985 = vunpack.c.h.b16 %v821
        %v1986 = vunpack.c.l.b16 %v822
        %v1987 = vunpack.c.h.b16 %v822
        %v1988 = vunpack.c.l.b16 %v823
        %v1989 = vunpack.c.h.b16 %v823
        %v1990 = vunpack.c.l.b16 %v824
        %v1991 = vunpack.c.h.b16 %v824
        %v1992 = vunpack.c.l.b16 %v825
        %v1993 = vunpack.c.h.b16 %v825
        %v1994 = vunpack.c.l.b16 %v826
        %v1995 = vunpack.c.h.b16 %v826
        %v1996 = vunpack.c.l.b16 %v827
        %v1997 = vunpack.c.h.b16 %v827
        %v1998 = vunpack.c.l.b16 %v828
        %v1999 = vunpack.c.h.b16 %v828
        %v2000 = vunpack.c.l.b16 %v829
        %v2001 = vunpack.c.h.b16 %v829
        %v2002 = vunpack.c.l.b16 %v830
        %v2003 = vunpack.c.h.b16 %v830
        %v2004 = vunpack.c.l.b16 %v831
        %v2005 = vunpack.c.h.b16 %v831
        %v2006 = vunpack.c.l.b16 %v832
        %v2007 = vunpack.c.h.b16 %v832
        %v2008 = vunpack.c.l.b16 %v833
        %v2009 = vunpack.c.h.b16 %v833
        %v2010 = vunpack.c.l.b16 %v834
        %v2011 = vunpack.c.h.b16 %v834
        %v2012 = vunpack.c.l.b16 %v835
        %v2013 = vunpack.c.h.b16 %v835
        %v2014 = vunpack.c.l.b16 %v836
        %v2015 = vunpack.c.h.b16 %v836
        %v2016 = vunpack.c.l.b16 %v837
        %v2017 = vunpack.c.h.b16 %v837
        %v2018 = vunpack.c.l.b16 %v838
        %v2019 = vunpack.c.h.b16 %v838
        %v2020 = vunpack.c.l.b16 %v839
        %v2021 = vunpack.c.h.b16 %v839
        %v2022 = vunpack.c.l.b16 %v840
        %v2023 = vunpack.c.h.b16 %v840
        %v2024 = vunpack.c.l.b16 %v841
        %v2025 = vunpack.c.h.b16 %v841
        %v2026 = vunpack.c.l.b16 %v842
        %v2027 = vunpack.c.h.b16 %v842
        %v2028 = vunpack.c.l.b16 %v843
        %v2029 = vunpack.c.h.b16 %v843
        %v2030 = vunpack.c.l.b16 %v844
        %v2031 = vunpack.c.h.b16 %v844
        %v2032 = vunpack.c.l.b16 %v845
        %v2033 = vunpack.c.h.b16 %v845
        %v2034 = vunpack.c.l.b16 %v846
        %v2035 = vunpack.c.h.b16 %v846
        %v2036 = vunpack.c.l.b16 %v847
        %v2037 = vunpack.c.h.b16 %v847
        %v2038 = vunpack.c.l.b16 %v848
        %v2039 = vunpack.c.h.b16 %v848
        %v2040 = vunpack.c.l.b16 %v849
        %v2041 = vunpack.c.h.b16 %v849
        %v2042 = vunpack.c.l.b16 %v850
        %v2043 = vunpack.c.h.b16 %v850
        %v2044 = vunpack.c.l.b16 %v851
        %v2045 = vunpack.c.h.b16 %v851
        %v2046 = vunpack.c.l.b16 %v852
        %v2047 = vunpack.c.h.b16 %v852
        %v2048 = vunpack.c.l.b16 %v853
        %v2049 = vunpack.c.h.b16 %v853
        %v2050 = vunpack.c.l.b16 %v854
        %v2051 = vunpack.c.h.b16 %v854
        %v2052 = vunpack.c.l.b16 %v855
        %v2053 = vunpack.c.h.b16 %v855
        %v2054 = vunpack.c.l.b16 %v856
        %v2055 = vunpack.c.h.b16 %v856
        %v2056 = vunpack.c.l.b16 %v857
        %v2057 = vunpack.c.h.b16 %v857
        %v2058 = vunpack.c.l.b16 %v858
        %v2059 = vunpack.c.h.b16 %v858
        %v2060 = vunpack.c.l.b16 %v859
        %v2061 = vunpack.c.h.b16 %v859
        %v2062 = vunpack.c.l.b16 %v860
        %v2063 = vunpack.c.h.b16 %v860
        %v2064 = vunpack.c.l.b16 %v861
        %v2065 = vunpack.c.h.b16 %v861
        %v2066 = vunpack.c.l.b16 %v862
        %v2067 = vunpack.c.h.b16 %v862
        %v2068 = vunpack.c.l.b16 %v863
        %v2069 = vunpack.c.h.b16 %v863
        %v2070 = vunpack.c.l.b16 %v864
        %v2071 = vunpack.c.h.b16 %v864
        %v2072 = vunpack.c.l.b16 %v865
        %v2073 = vunpack.c.h.b16 %v865
        %v2074 = vunpack.c.l.b16 %v866
        %v2075 = vunpack.c.h.b16 %v866
        %v2076 = vunpack.c.l.b16 %v867
        %v2077 = vunpack.c.h.b16 %v867
        %v2078 = vunpack.c.l.b16 %v868
        %v2079 = vunpack.c.h.b16 %v868
        %v2080 = vunpack.c.l.b16 %v869
        %v2081 = vunpack.c.h.b16 %v869
        %v2082 = vunpack.c.l.b16 %v870
        %v2083 = vunpack.c.h.b16 %v870
        %v2084 = vunpack.c.l.b16 %v871
        %v2085 = vunpack.c.h.b16 %v871
        %v2086 = vunpack.c.l.b16 %v872
        %v2087 = vunpack.c.h.b16 %v872
        %v2088 = vunpack.c.l.b16 %v873
        %v2089 = vunpack.c.h.b16 %v873
        %v2090 = vunpack.c.l.b16 %v874
        %v2091 = vunpack.c.h.b16 %v874
        %v2092 = vunpack.c.l.b16 %v875
        %v2093 = vunpack.c.h.b16 %v875
        %v2094 = vpack.c.b16 %v1318, %v1310
        %v2095 = vpack.c.b16 %v1319, %v1311
        %v2096 = vpack.c.b16 %v1320, %v1312
        %v2097 = vpack.c.b16 %v1321, %v1313
        %v2098 = vpack.c.b16 %v1322, %v1314
        %v2099 = vpack.c.b16 %v1323, %v1315
        %v2100 = vpack.c.b16 %v1324, %v1316
        %v2101 = vpack.c.b16 %v1325, %v1317
        %v2102 = vpack.c.b16 %v1334, %v1326
        %v2103 = vpack.c.b16 %v1335, %v1327
        %v2104 = vpack.c.b16 %v1336, %v1328
        %v2105 = vpack.c.b16 %v1337, %v1329
        %v2106 = vpack.c.b16 %v1338, %v1330
        %v2107 = vpack.c.b16 %v1339, %v1331
        %v2108 = vpack.c.b16 %v1340, %v1332
        %v2109 = vpack.c.b16 %v1341, %v1333
        %v2110 = vpack.c.b16 %v1350, %v1342
        %v2111 = vpack.c.b16 %v1351, %v1343
        %v2112 = vpack.c.b16 %v1352, %v1344
        %v2113 = vpack.c.b16 %v1353, %v1345
        %v2114 = vpack.c.b16 %v1354, %v1346
        %v2115 = vpack.c.b16 %v1355, %v1347
        %v2116 = vpack.c.b16 %v1356, %v1348
        %v2117 = vpack.c.b16 %v1357, %v1349
        %v2118 = vpack.c.b16 %v1366, %v1358
        %v2119 = vpack.c.b16 %v1367, %v1359
        %v2120 = vpack.c.b16 %v1368, %v1360
        %v2121 = vpack.c.b16 %v1369, %v1361
        %v2122 = vpack.c.b16 %v1370, %v1362
        %v2123 = vpack.c.b16 %v1371, %v1363
        %v2124 = vpack.c.b16 %v1372, %v1364
        %v2125 = vpack.c.b16 %v1373, %v1365
        %v2126 = vpack.c.b16 %v1382, %v1374
        %v2127 = vpack.c.b16 %v1383, %v1375
        %v2128 = vpack.c.b16 %v1384, %v1376
        %v2129 = vpack.c.b16 %v1385, %v1377
        %v2130 = vpack.c.b16 %v1386, %v1378
        %v2131 = vpack.c.b16 %v1387, %v1379
        %v2132 = vpack.c.b16 %v1388, %v1380
        %v2133 = vpack.c.b16 %v1389, %v1381
        %v2134 = vpack.c.b16 %v1398, %v1390
        %v2135 = vpack.c.b16 %v1399, %v1391
        %v2136 = vpack.c.b16 %v1400, %v1392
        %v2137 = vpack.c.b16 %v1401, %v1393
        %v2138 = vpack.c.b16 %v1402, %v1394
        %v2139 = vpack.c.b16 %v1403, %v1395
        %v2140 = vpack.c.b16 %v1404, %v1396
        %v2141 = vpack.c.b16 %v1405, %v1397
        %v2142 = vpack.c.b16 %v1414, %v1406
        %v2143 = vpack.c.b16 %v1415, %v1407
        %v2144 = vpack.c.b16 %v1416, %v1408
        %v2145 = vpack.c.b16 %v1417, %v1409
        %v2146 = vpack.c.b16 %v1418, %v1410
        %v2147 = vpack.c.b16 %v1419, %v1411
        %v2148 = vpack.c.b16 %v1420, %v1412
        %v2149 = vpack.c.b16 %v1421, %v1413
        %v2150 = vpack.c.b16 %v1430, %v1422
        %v2151 = vpack.c.b16 %v1431, %v1423
        %v2152 = vpack.c.b16 %v1432, %v1424
        %v2153 = vpack.c.b16 %v1433, %v1425
        %v2154 = vpack.c.b16 %v1434, %v1426
        %v2155 = vpack.c.b16 %v1435, %v1427
        %v2156 = vpack.c.b16 %v1436, %v1428
        %v2157 = vpack.c.b16 %v1437, %v1429
        %v2158 = vpack.c.b16 %v1446, %v1438
        %v2159 = vpack.c.b16 %v1447, %v1439
        %v2160 = vpack.c.b16 %v1448, %v1440
        %v2161 = vpack.c.b16 %v1449, %v1441
        %v2162 = vpack.c.b16 %v1450, %v1442
        %v2163 = vpack.c.b16 %v1451, %v1443
        %v2164 = vpack.c.b16 %v1452, %v1444
        %v2165 = vpack.c.b16 %v1453, %v1445
        %v2166 = vpack.c.b16 %v1462, %v1454
        %v2167 = vpack.c.b16 %v1463, %v1455
        %v2168 = vpack.c.b16 %v1464, %v1456
        %v2169 = vpack.c.b16 %v1465, %v1457
        %v2170 = vpack.c.b16 %v1466, %v1458
        %v2171 = vpack.c.b16 %v1467, %v1459
        %v2172 = vpack.c.b16 %v1468, %v1460
        %v2173 = vpack.c.b16 %v1469, %v1461
        %v2174 = vpack.c.b16 %v1478, %v1470
        %v2175 = vpack.c.b16 %v1479, %v1471
        %v2176 = vpack.c.b16 %v1480, %v1472
        %v2177 = vpack.c.b16 %v1481, %v1473
        %v2178 = vpack.c.b16 %v1482, %v1474
        %v2179 = vpack.c.b16 %v1483, %v1475
        %v2180 = vpack.c.b16 %v1484, %v1476
        %v2181 = vpack.c.b16 %v1485, %v1477
        %v2182 = vpack.c.b16 %v1494, %v1486
        %v2183 = vpack.c.b16 %v1495, %v1487
        %v2184 = vpack.c.b16 %v1496, %v1488
        %v2185 = vpack.c.b16 %v1497, %v1489
        %v2186 = vpack.c.b16 %v1498, %v1490
        %v2187 = vpack.c.b16 %v1499, %v1491
        %v2188 = vpack.c.b16 %v1500, %v1492
        %v2189 = vpack.c.b16 %v1501, %v1493
        %v2190 = vpack.c.b16 %v1510, %v1502
        %v2191 = vpack.c.b16 %v1511, %v1503
        %v2192 = vpack.c.b16 %v1512, %v1504
        %v2193 = vpack.c.b16 %v1513, %v1505
        %v2194 = vpack.c.b16 %v1514, %v1506
        %v2195 = vpack.c.b16 %v1515, %v1507
        %v2196 = vpack.c.b16 %v1516, %v1508
        %v2197 = vpack.c.b16 %v1517, %v1509
        %v2198 = vpack.c.b16 %v1526, %v1518
        %v2199 = vpack.c.b16 %v1527, %v1519
        %v2200 = vpack.c.b16 %v1528, %v1520
        %v2201 = vpack.c.b16 %v1529, %v1521
        %v2202 = vpack.c.b16 %v1530, %v1522
        %v2203 = vpack.c.b16 %v1531, %v1523
        %v2204 = vpack.c.b16 %v1532, %v1524
        %v2205 = vpack.c.b16 %v1533, %v1525
        %v2206 = vpack.c.b16 %v1542, %v1534
        %v2207 = vpack.c.b16 %v1543, %v1535
        %v2208 = vpack.c.b16 %v1544, %v1536
        %v2209 = vpack.c.b16 %v1545, %v1537
        %v2210 = vpack.c.b16 %v1546, %v1538
        %v2211 = vpack.c.b16 %v1547, %v1539
        %v2212 = vpack.c.b16 %v1548, %v1540
        %v2213 = vpack.c.b16 %v1549, %v1541
        %v2214 = vpack.c.b16 %v1558, %v1550
        %v2215 = vpack.c.b16 %v1559, %v1551
        %v2216 = vpack.c.b16 %v1560, %v1552
        %v2217 = vpack.c.b16 %v1561, %v1553
        %v2218 = vpack.c.b16 %v1562, %v1554
        %v2219 = vpack.c.b16 %v1563, %v1555
        %v2220 = vpack.c.b16 %v1564, %v1556
        %v2221 = vpack.c.b16 %v1565, %v1557
        %v2222 = vpack.c.b16 %v1574, %v1566
        %v2223 = vpack.c.b16 %v1575, %v1567
        %v2224 = vpack.c.b16 %v1576, %v1568
        %v2225 = vpack.c.b16 %v1577, %v1569
        %v2226 = vpack.c.b16 %v1578, %v1570
        %v2227 = vpack.c.b16 %v1579, %v1571
        %v2228 = vpack.c.b16 %v1580, %v1572
        %v2229 = vpack.c.b16 %v1581, %v1573
        %v2230 = vpack.c.b16 %v1590, %v1582
        %v2231 = vpack.c.b16 %v1591, %v1583
        %v2232 = vpack.c.b16 %v1592, %v1584
        %v2233 = vpack.c.b16 %v1593, %v1585
        %v2234 = vpack.c.b16 %v1594, %v1586
        %v2235 = vpack.c.b16 %v1595, %v1587
        %v2236 = vpack.c.b16 %v1596, %v1588
        %v2237 = vpack.c.b16 %v1597, %v1589
        %v2238 = vpack.c.b16 %v1606, %v1598
        %v2239 = vpack.c.b16 %v1607, %v1599
        %v2240 = vpack.c.b16 %v1608, %v1600
        %v2241 = vpack.c.b16 %v1609, %v1601
        %v2242 = vpack.c.b16 %v1610, %v1602
        %v2243 = vpack.c.b16 %v1611, %v1603
        %v2244 = vpack.c.b16 %v1612, %v1604
        %v2245 = vpack.c.b16 %v1613, %v1605
        %v2246 = vpack.c.b16 %v1622, %v1614
        %v2247 = vpack.c.b16 %v1623, %v1615
        %v2248 = vpack.c.b16 %v1624, %v1616
        %v2249 = vpack.c.b16 %v1625, %v1617
        %v2250 = vpack.c.b16 %v1626, %v1618
        %v2251 = vpack.c.b16 %v1627, %v1619
        %v2252 = vpack.c.b16 %v1628, %v1620
        %v2253 = vpack.c.b16 %v1629, %v1621
        %v2254 = vpack.c.b16 %v1638, %v1630
        %v2255 = vpack.c.b16 %v1639, %v1631
        %v2256 = vpack.c.b16 %v1640, %v1632
        %v2257 = vpack.c.b16 %v1641, %v1633
        %v2258 = vpack.c.b16 %v1642, %v1634
        %v2259 = vpack.c.b16 %v1643, %v1635
        %v2260 = vpack.c.b16 %v1644, %v1636
        %v2261 = vpack.c.b16 %v1645, %v1637
        %v2262 = vpack.c.b16 %v1654, %v1646
        %v2263 = vpack.c.b16 %v1655, %v1647
        %v2264 = vpack.c.b16 %v1656, %v1648
        %v2265 = vpack.c.b16 %v1657, %v1649
        %v2266 = vpack.c.b16 %v1658, %v1650
        %v2267 = vpack.c.b16 %v1659, %v1651
        %v2268 = vpack.c.b16 %v1660, %v1652
        %v2269 = vpack.c.b16 %v1661, %v1653
        %v2270 = vpack.c.b16 %v1670, %v1662
        %v2271 = vpack.c.b16 %v1671, %v1663
        %v2272 = vpack.c.b16 %v1672, %v1664
        %v2273 = vpack.c.b16 %v1673, %v1665
        %v2274 = vpack.c.b16 %v1674, %v1666
        %v2275 = vpack.c.b16 %v1675, %v1667
        %v2276 = vpack.c.b16 %v1676, %v1668
        %v2277 = vpack.c.b16 %v1677, %v1669
        %v2278 = vpack.c.b16 %v1686, %v1678
        %v2279 = vpack.c.b16 %v1687, %v1679
        %v2280 = vpack.c.b16 %v1688, %v1680
        %v2281 = vpack.c.b16 %v1689, %v1681
        %v2282 = vpack.c.b16 %v1690, %v1682
        %v2283 = vpack.c.b16 %v1691, %v1683
        %v2284 = vpack.c.b16 %v1692, %v1684
        %v2285 = vpack.c.b16 %v1693, %v1685
        %v2286 = vpack.c.b16 %v1702, %v1694
        %v2287 = vpack.c.b16 %v1703, %v1695
        %v2288 = vpack.c.b16 %v1704, %v1696
        %v2289 = vpack.c.b16 %v1705, %v1697
        %v2290 = vpack.c.b16 %v1706, %v1698
        %v2291 = vpack.c.b16 %v1707, %v1699
        %v2292 = vpack.c.b16 %v1708, %v1700
        %v2293 = vpack.c.b16 %v1709, %v1701
        %v2294 = vpack.c.b16 %v1718, %v1710
        %v2295 = vpack.c.b16 %v1719, %v1711
        %v2296 = vpack.c.b16 %v1720, %v1712
        %v2297 = vpack.c.b16 %v1721, %v1713
        %v2298 = vpack.c.b16 %v1722, %v1714
        %v2299 = vpack.c.b16 %v1723, %v1715
        %v2300 = vpack.c.b16 %v1724, %v1716
        %v2301 = vpack.c.b16 %v1725, %v1717
        %v2302 = vpack.c.b16 %v1734, %v1726
        %v2303 = vpack.c.b16 %v1735, %v1727
        %v2304 = vpack.c.b16 %v1736, %v1728
        %v2305 = vpack.c.b16 %v1737, %v1729
        %v2306 = vpack.c.b16 %v1738, %v1730
        %v2307 = vpack.c.b16 %v1739, %v1731
        %v2308 = vpack.c.b16 %v1740, %v1732
        %v2309 = vpack.c.b16 %v1741, %v1733
        %v2310 = vpack.c.b16 %v1750, %v1742
        %v2311 = vpack.c.b16 %v1751, %v1743
        %v2312 = vpack.c.b16 %v1752, %v1744
        %v2313 = vpack.c.b16 %v1753, %v1745
        %v2314 = vpack.c.b16 %v1754, %v1746
        %v2315 = vpack.c.b16 %v1755, %v1747
        %v2316 = vpack.c.b16 %v1756, %v1748
        %v2317 = vpack.c.b16 %v1757, %v1749
        %v2318 = vpack.c.b16 %v1766, %v1758
        %v2319 = vpack.c.b16 %v1767, %v1759
        %v2320 = vpack.c.b16 %v1768, %v1760
        %v2321 = vpack.c.b16 %v1769, %v1761
        %v2322 = vpack.c.b16 %v1770, %v1762
        %v2323 = vpack.c.b16 %v1771, %v1763
        %v2324 = vpack.c.b16 %v1772, %v1764
        %v2325 = vpack.c.b16 %v1773, %v1765
        %v2326 = vpack.c.b16 %v1782, %v1774
        %v2327 = vpack.c.b16 %v1783, %v1775
        %v2328 = vpack.c.b16 %v1784, %v1776
        %v2329 = vpack.c.b16 %v1785, %v1777
        %v2330 = vpack.c.b16 %v1786, %v1778
        %v2331 = vpack.c.b16 %v1787, %v1779
        %v2332 = vpack.c.b16 %v1788, %v1780
        %v2333 = vpack.c.b16 %v1789, %v1781
        %v2334 = vpack.c.b16 %v1798, %v1790
        %v2335 = vpack.c.b16 %v1799, %v1791
        %v2336 = vpack.c.b16 %v1800, %v1792
        %v2337 = vpack.c.b16 %v1801, %v1793
        %v2338 = vpack.c.b16 %v1802, %v1794
        %v2339 = vpack.c.b16 %v1803, %v1795
        %v2340 = vpack.c.b16 %v1804, %v1796
        %v2341 = vpack.c.b16 %v1805, %v1797
        %v2342 = vpack.c.b16 %v1814, %v1806
        %v2343 = vpack.c.b16 %v1815, %v1807
        %v2344 = vpack.c.b16 %v1816, %v1808
        %v2345 = vpack.c.b16 %v1817, %v1809
        %v2346 = vpack.c.b16 %v1818, %v1810
        %v2347 = vpack.c.b16 %v1819, %v1811
        %v2348 = vpack.c.b16 %v1820, %v1812
        %v2349 = vpack.c.b16 %v1821, %v1813
        %v2350 = vpack.c.b16 %v1830, %v1822
        %v2351 = vpack.c.b16 %v1831, %v1823
        %v2352 = vpack.c.b16 %v1832, %v1824
        %v2353 = vpack.c.b16 %v1833, %v1825
        %v2354 = vpack.c.b16 %v1834, %v1826
        %v2355 = vpack.c.b16 %v1835, %v1827
        %v2356 = vpack.c.b16 %v1836, %v1828
        %v2357 = vpack.c.b16 %v1837, %v1829
        %v2358 = vpack.c.b16 %v1846, %v1838
        %v2359 = vpack.c.b16 %v1847, %v1839
        %v2360 = vpack.c.b16 %v1848, %v1840
        %v2361 = vpack.c.b16 %v1849, %v1841
        %v2362 = vpack.c.b16 %v1850, %v1842
        %v2363 = vpack.c.b16 %v1851, %v1843
        %v2364 = vpack.c.b16 %v1852, %v1844
        %v2365 = vpack.c.b16 %v1853, %v1845
        %v2366 = vpack.c.b16 %v1862, %v1854
        %v2367 = vpack.c.b16 %v1863, %v1855
        %v2368 = vpack.c.b16 %v1864, %v1856
        %v2369 = vpack.c.b16 %v1865, %v1857
        %v2370 = vpack.c.b16 %v1866, %v1858
        %v2371 = vpack.c.b16 %v1867, %v1859
        %v2372 = vpack.c.b16 %v1868, %v1860
        %v2373 = vpack.c.b16 %v1869, %v1861
        %v2374 = vpack.c.b16 %v1878, %v1870
        %v2375 = vpack.c.b16 %v1879, %v1871
        %v2376 = vpack.c.b16 %v1880, %v1872
        %v2377 = vpack.c.b16 %v1881, %v1873
        %v2378 = vpack.c.b16 %v1882, %v1874
        %v2379 = vpack.c.b16 %v1883, %v1875
        %v2380 = vpack.c.b16 %v1884, %v1876
        %v2381 = vpack.c.b16 %v1885, %v1877
        %v2382 = vpack.c.b16 %v1894, %v1886
        %v2383 = vpack.c.b16 %v1895, %v1887
        %v2384 = vpack.c.b16 %v1896, %v1888
        %v2385 = vpack.c.b16 %v1897, %v1889
        %v2386 = vpack.c.b16 %v1898, %v1890
        %v2387 = vpack.c.b16 %v1899, %v1891
        %v2388 = vpack.c.b16 %v1900, %v1892
        %v2389 = vpack.c.b16 %v1901, %v1893
        %v2390 = vpack.c.b16 %v1910, %v1902
        %v2391 = vpack.c.b16 %v1911, %v1903
        %v2392 = vpack.c.b16 %v1912, %v1904
        %v2393 = vpack.c.b16 %v1913, %v1905
        %v2394 = vpack.c.b16 %v1914, %v1906
        %v2395 = vpack.c.b16 %v1915, %v1907
        %v2396 = vpack.c.b16 %v1916, %v1908
        %v2397 = vpack.c.b16 %v1917, %v1909
        %v2398 = vpack.c.b16 %v1926, %v1918
        %v2399 = vpack.c.b16 %v1927, %v1919
        %v2400 = vpack.c.b16 %v1928, %v1920
        %v2401 = vpack.c.b16 %v1929, %v1921
        %v2402 = vpack.c.b16 %v1930, %v1922
        %v2403 = vpack.c.b16 %v1931, %v1923
        %v2404 = vpack.c.b16 %v1932, %v1924
        %v2405 = vpack.c.b16 %v1933, %v1925
        %v2406 = vpack.c.b16 %v1942, %v1934
        %v2407 = vpack.c.b16 %v1943, %v1935
        %v2408 = vpack.c.b16 %v1944, %v1936
        %v2409 = vpack.c.b16 %v1945, %v1937
        %v2410 = vpack.c.b16 %v1946, %v1938
        %v2411 = vpack.c.b16 %v1947, %v1939
        %v2412 = vpack.c.b16 %v1948, %v1940
        %v2413 = vpack.c.b16 %v1949, %v1941
        %v2414 = vpack.c.b16 %v1958, %v1950
        %v2415 = vpack.c.b16 %v1959, %v1951
        %v2416 = vpack.c.b16 %v1960, %v1952
        %v2417 = vpack.c.b16 %v1961, %v1953
        %v2418 = vpack.c.b16 %v1962, %v1954
        %v2419 = vpack.c.b16 %v1963, %v1955
        %v2420 = vpack.c.b16 %v1964, %v1956
        %v2421 = vpack.c.b16 %v1965, %v1957
        %v2422 = vpack.c.b16 %v1974, %v1966
        %v2423 = vpack.c.b16 %v1975, %v1967
        %v2424 = vpack.c.b16 %v1976, %v1968
        %v2425 = vpack.c.b16 %v1977, %v1969
        %v2426 = vpack.c.b16 %v1978, %v1970
        %v2427 = vpack.c.b16 %v1979, %v1971
        %v2428 = vpack.c.b16 %v1980, %v1972
        %v2429 = vpack.c.b16 %v1981, %v1973
        %v2430 = vpack.c.b16 %v1990, %v1982
        %v2431 = vpack.c.b16 %v1991, %v1983
        %v2432 = vpack.c.b16 %v1992, %v1984
        %v2433 = vpack.c.b16 %v1993, %v1985
        %v2434 = vpack.c.b16 %v1994, %v1986
        %v2435 = vpack.c.b16 %v1995, %v1987
        %v2436 = vpack.c.b16 %v1996, %v1988
        %v2437 = vpack.c.b16 %v1997, %v1989
        %v2438 = vpack.c.b16 %v2006, %v1998
        %v2439 = vpack.c.b16 %v2007, %v1999
        %v2440 = vpack.c.b16 %v2008, %v2000
        %v2441 = vpack.c.b16 %v2009, %v2001
        %v2442 = vpack.c.b16 %v2010, %v2002
        %v2443 = vpack.c.b16 %v2011, %v2003
        %v2444 = vpack.c.b16 %v2012, %v2004
        %v2445 = vpack.c.b16 %v2013, %v2005
        %v2446 = vpack.c.b16 %v2022, %v2014
        %v2447 = vpack.c.b16 %v2023, %v2015
        %v2448 = vpack.c.b16 %v2024, %v2016
        %v2449 = vpack.c.b16 %v2025, %v2017
        %v2450 = vpack.c.b16 %v2026, %v2018
        %v2451 = vpack.c.b16 %v2027, %v2019
        %v2452 = vpack.c.b16 %v2028, %v2020
        %v2453 = vpack.c.b16 %v2029, %v2021
        %v2454 = vpack.c.b16 %v2038, %v2030
        %v2455 = vpack.c.b16 %v2039, %v2031
        %v2456 = vpack.c.b16 %v2040, %v2032
        %v2457 = vpack.c.b16 %v2041, %v2033
        %v2458 = vpack.c.b16 %v2042, %v2034
        %v2459 = vpack.c.b16 %v2043, %v2035
        %v2460 = vpack.c.b16 %v2044, %v2036
        %v2461 = vpack.c.b16 %v2045, %v2037
        %v2462 = vpack.c.b16 %v2054, %v2046
        %v2463 = vpack.c.b16 %v2055, %v2047
        %v2464 = vpack.c.b16 %v2056, %v2048
        %v2465 = vpack.c.b16 %v2057, %v2049
        %v2466 = vpack.c.b16 %v2058, %v2050
        %v2467 = vpack.c.b16 %v2059, %v2051
        %v2468 = vpack.c.b16 %v2060, %v2052
        %v2469 = vpack.c.b16 %v2061, %v2053
        %v2470 = vpack.c.b16 %v2070, %v2062
        %v2471 = vpack.c.b16 %v2071, %v2063
        %v2472 = vpack.c.b16 %v2072, %v2064
        %v2473 = vpack.c.b16 %v2073, %v2065
        %v2474 = vpack.c.b16 %v2074, %v2066
        %v2475 = vpack.c.b16 %v2075, %v2067
        %v2476 = vpack.c.b16 %v2076, %v2068
        %v2477 = vpack.c.b16 %v2077, %v2069
        %v2478 = vpack.c.b16 %v2086, %v2078
        %v2479 = vpack.c.b16 %v2087, %v2079
        %v2480 = vpack.c.b16 %v2088, %v2080
        %v2481 = vpack.c.b16 %v2089, %v2081
        %v2482 = vpack.c.b16 %v2090, %v2082
        %v2483 = vpack.c.b16 %v2091, %v2083
        %v2484 = vpack.c.b16 %v2092, %v2084
        %v2485 = vpack.c.b16 %v2093, %v2085
        %vm2878 = vcmask 130048
        %v2880 = vsel %vm2878, %v483, 0
        %2882 = vmatprep.subr.bf16.mxu0 %v2151
        %2883 = vmatpush1.bf16.msra.mxu0 %v2150
        %2884 = vmatprep.subr.bf16.mxu0 %v2143
        %2885 = vmatpush1.bf16.msra.mxu0 %v2142
        %2886 = vmatprep.subr.bf16.mxu0 %v2135
        %2887 = vmatpush1.bf16.msra.mxu0 %v2134
        %2888 = vmatprep.subr.bf16.mxu0 %v2127
        %2889 = vmatpush1.bf16.msra.mxu0 %v2126
        %2890 = vmatprep.subr.bf16.mxu0 %v2119
        %2891 = vmatpush1.bf16.msra.mxu0 %v2118
        %2892 = vmatprep.subr.bf16.mxu0 %v2111
        %2893 = vmatpush1.bf16.msra.mxu0 %v2110
        %2894 = vmatprep.subr.bf16.mxu0 %v2103
        %2895 = vmatpush1.bf16.msra.mxu0 %v2102
        %2896 = vmatprep.subr.bf16.mxu0 %v2095
        %2897 = vmatpush1.bf16.msra.mxu0 %v2094
        %2898 = vmatprep.subr.bf16.mxu0 %v2215
        %2899 = vmatpush2.bf16.msra.mxu0 %v2214
        %2900 = vmatprep.subr.bf16.mxu0 %v2207
        %2901 = vmatpush2.bf16.msra.mxu0 %v2206
        %2902 = vmatprep.subr.bf16.mxu0 %v2199
        %2903 = vmatpush2.bf16.msra.mxu0 %v2198
        %2904 = vmatprep.subr.bf16.mxu0 %v2191
        %2905 = vmatpush2.bf16.msra.mxu0 %v2190
        %2906 = vmatprep.subr.bf16.mxu0 %v2183
        %2907 = vmatpush2.bf16.msra.mxu0 %v2182
        %2908 = vmatprep.subr.bf16.mxu0 %v2175
        %2909 = vmatpush2.bf16.msra.mxu0 %v2174
        %2910 = vmatprep.subr.bf16.mxu0 %v2167
        %2911 = vmatpush2.bf16.msra.mxu0 %v2166
        %2912 = vmatprep.subr.bf16.mxu0 %v2159
        %2913 = vmatpush2.bf16.msra.mxu0 %v2158
        %2914 = vmatprep.mubr.bf16.mxu0 %v478
        %2915 = vmatmul.mubr.bf16.gmra.mxu0 %v477
        %v2916 = vpop.f32.mrf.mxu0
        %v2917 = vadd.f32 %v881, %v2916
        %v2918 = vpop.f32.mrf.mxu0
        %v2919 = vadd.f32 %v885, %v2918
        %v2920 = vpop.f32.mrf.mxu0
        %v2921 = vadd.f32 %v881, %v2920
        %v2922 = vpop.f32.mrf.mxu0
        %v2923 = vadd.f32 %v885, %v2922
        %2924 = vdwg.mxu0
        %2925 = vmatprep.subr.bf16.mxu0 %v2279
        %2926 = vmatpush1.bf16.msra.mxu0 %v2278
        %2927 = vmatprep.subr.bf16.mxu0 %v2271
        %2928 = vmatpush1.bf16.msra.mxu0 %v2270
        %2929 = vmatprep.subr.bf16.mxu0 %v2263
        %2930 = vmatpush1.bf16.msra.mxu0 %v2262
        %2931 = vmatprep.subr.bf16.mxu0 %v2255
        %2932 = vmatpush1.bf16.msra.mxu0 %v2254
        %2933 = vmatprep.subr.bf16.mxu0 %v2247
        %2934 = vmatpush1.bf16.msra.mxu0 %v2246
        %2935 = vmatprep.subr.bf16.mxu0 %v2239
        %2936 = vmatpush1.bf16.msra.mxu0 %v2238
        %2937 = vmatprep.subr.bf16.mxu0 %v2231
        %2938 = vmatpush1.bf16.msra.mxu0 %v2230
        %2939 = vmatprep.subr.bf16.mxu0 %v2223
        %2940 = vmatpush1.bf16.msra.mxu0 %v2222
        %2941 = vmatprep.subr.bf16.mxu0 %v2343
        %2942 = vmatpush2.bf16.msra.mxu0 %v2342
        %2943 = vmatprep.subr.bf16.mxu0 %v2335
        %2944 = vmatpush2.bf16.msra.mxu0 %v2334
        %2945 = vmatprep.subr.bf16.mxu0 %v2327
        %2946 = vmatpush2.bf16.msra.mxu0 %v2326
        %2947 = vmatprep.subr.bf16.mxu0 %v2319
        %2948 = vmatpush2.bf16.msra.mxu0 %v2318
        %2949 = vmatprep.subr.bf16.mxu0 %v2311
        %2950 = vmatpush2.bf16.msra.mxu0 %v2310
        %2951 = vmatprep.subr.bf16.mxu0 %v2303
        %2952 = vmatpush2.bf16.msra.mxu0 %v2302
        %2953 = vmatprep.subr.bf16.mxu0 %v2295
        %2954 = vmatpush2.bf16.msra.mxu0 %v2294
        %2955 = vmatprep.subr.bf16.mxu0 %v2287
        %2956 = vmatpush2.bf16.msra.mxu0 %v2286
        %2957 = vmatprep.mubr.bf16.mxu0 %v480
        %2958 = vmatmul.mubr.bf16.gmra.mxu0 %v479
        %v2959 = vpop.f32.mrf.mxu0
        %v2960 = vadd.f32 %v2917, %v2959
        %v2961 = vpop.f32.mrf.mxu0
        %v2962 = vadd.f32 %v2919, %v2961
        %v2963 = vpop.f32.mrf.mxu0
        %v2964 = vadd.f32 %v2921, %v2963
        %v2965 = vpop.f32.mrf.mxu0
        %v2966 = vadd.f32 %v2923, %v2965
        %2967 = vdwg.mxu0
        %2968 = vmatprep.subr.bf16.mxu0 %v2407
        %2969 = vmatpush1.bf16.msra.mxu0 %v2406
        %2970 = vmatprep.subr.bf16.mxu0 %v2399
        %2971 = vmatpush1.bf16.msra.mxu0 %v2398
        %2972 = vmatprep.subr.bf16.mxu0 %v2391
        %2973 = vmatpush1.bf16.msra.mxu0 %v2390
        %2974 = vmatprep.subr.bf16.mxu0 %v2383
        %2975 = vmatpush1.bf16.msra.mxu0 %v2382
        %2976 = vmatprep.subr.bf16.mxu0 %v2375
        %2977 = vmatpush1.bf16.msra.mxu0 %v2374
        %2978 = vmatprep.subr.bf16.mxu0 %v2367
        %2979 = vmatpush1.bf16.msra.mxu0 %v2366
        %2980 = vmatprep.subr.bf16.mxu0 %v2359
        %2981 = vmatpush1.bf16.msra.mxu0 %v2358
        %2982 = vmatprep.subr.bf16.mxu0 %v2351
        %2983 = vmatpush1.bf16.msra.mxu0 %v2350
        %2984 = vmatprep.subr.bf16.mxu0 %v2471
        %2985 = vmatpush2.bf16.msra.mxu0 %v2470
        %2986 = vmatprep.subr.bf16.mxu0 %v2463
        %2987 = vmatpush2.bf16.msra.mxu0 %v2462
        %2988 = vmatprep.subr.bf16.mxu0 %v2455
        %2989 = vmatpush2.bf16.msra.mxu0 %v2454
        %2990 = vmatprep.subr.bf16.mxu0 %v2447
        %2991 = vmatpush2.bf16.msra.mxu0 %v2446
        %2992 = vmatprep.subr.bf16.mxu0 %v2439
        %2993 = vmatpush2.bf16.msra.mxu0 %v2438
        %2994 = vmatprep.subr.bf16.mxu0 %v2431
        %2995 = vmatpush2.bf16.msra.mxu0 %v2430
        %2996 = vmatprep.subr.bf16.mxu0 %v2423
        %2997 = vmatpush2.bf16.msra.mxu0 %v2422
        %2998 = vmatprep.subr.bf16.mxu0 %v2415
        %2999 = vmatpush2.bf16.msra.mxu0 %v2414
        %3000 = vmatprep.mubr.bf16.mxu0 %v482
        %3001 = vmatmul.mubr.bf16.gmra.mxu0 %v481
        %v3002 = vpop.f32.mrf.mxu0
        %v3003 = vadd.f32 %v2960, %v3002
        %v3004 = vpop.f32.mrf.mxu0
        %v3005 = vadd.f32 %v2962, %v3004
        %v3006 = vpop.f32.mrf.mxu0
        %v3007 = vadd.f32 %v2964, %v3006
        %v3008 = vpop.f32.mrf.mxu0
        %v3009 = vadd.f32 %v2966, %v3008
        %3010 = vdwg.mxu0
        %3011 = vmatprep.subr.bf16.mxu0 0
        %3012 = vmatpush1.bf16.msra.mxu0 0
        %3013 = vmatprep.subr.bf16.mxu0 0
        %3014 = vmatpush1.bf16.msra.mxu0 0
        %3015 = vmatprep.subr.bf16.mxu0 0
        %3016 = vmatpush1.bf16.msra.mxu0 0
        %3017 = vmatprep.subr.bf16.mxu0 0
        %3018 = vmatpush1.bf16.msra.mxu0 0
        %3019 = vmatprep.subr.bf16.mxu0 0
        %3020 = vmatpush1.bf16.msra.mxu0 0
        %3021 = vmatprep.subr.bf16.mxu0 0
        %3022 = vmatpush1.bf16.msra.mxu0 0
        %3023 = vmatprep.subr.bf16.mxu0 0
        %3024 = vmatpush1.bf16.msra.mxu0 0
        %3025 = vmatprep.subr.bf16.mxu0 %v2479
        %3026 = vmatpush1.bf16.msra.mxu0 %v2478
        %3027 = vmatprep.subr.bf16.mxu0 0
        %3028 = vmatpush2.bf16.msra.mxu0 0
        %3029 = vmatprep.subr.bf16.mxu0 0
        %3030 = vmatpush2.bf16.msra.mxu0 0
        %3031 = vmatprep.subr.bf16.mxu0 0
        %3032 = vmatpush2.bf16.msra.mxu0 0
        %3033 = vmatprep.subr.bf16.mxu0 0
        %3034 = vmatpush2.bf16.msra.mxu0 0
        %3035 = vmatprep.subr.bf16.mxu0 0
        %3036 = vmatpush2.bf16.msra.mxu0 0
        %3037 = vmatprep.subr.bf16.mxu0 0
        %3038 = vmatpush2.bf16.msra.mxu0 0
        %3039 = vmatprep.subr.bf16.mxu0 0
        %3040 = vmatpush2.bf16.msra.mxu0 0
        %3041 = vmatprep.subr.bf16.mxu0 0
        %3042 = vmatpush2.bf16.msra.mxu0 0
        %3043 = vmatprep.mubr.bf16.mxu0 0
        %3044 = vmatmul.mubr.bf16.gmra.mxu0 %v2880
        %v3045 = vpop.f32.mrf.mxu0
        %v3046 = vadd.f32 %v3003, %v3045
        %v3047 = vpop.f32.mrf.mxu0
        %v3048 = vadd.f32 %v3005, %v3047
        %v3049 = vpop.f32.mrf.mxu0
        %v3050 = vadd.f32 %v3007, %v3049
        %v3051 = vpop.f32.mrf.mxu0
        %v3052 = vadd.f32 %v3009, %v3051
        %3053 = vdwg.mxu0
        %3054 = vmatprep.subr.bf16.mxu0 %v2153
        %3055 = vmatpush1.bf16.msra.mxu0 %v2152
        %3056 = vmatprep.subr.bf16.mxu0 %v2145
        %3057 = vmatpush1.bf16.msra.mxu0 %v2144
        %3058 = vmatprep.subr.bf16.mxu0 %v2137
        %3059 = vmatpush1.bf16.msra.mxu0 %v2136
        %3060 = vmatprep.subr.bf16.mxu0 %v2129
        %3061 = vmatpush1.bf16.msra.mxu0 %v2128
        %3062 = vmatprep.subr.bf16.mxu0 %v2121
        %3063 = vmatpush1.bf16.msra.mxu0 %v2120
        %3064 = vmatprep.subr.bf16.mxu0 %v2113
        %3065 = vmatpush1.bf16.msra.mxu0 %v2112
        %3066 = vmatprep.subr.bf16.mxu0 %v2105
        %3067 = vmatpush1.bf16.msra.mxu0 %v2104
        %3068 = vmatprep.subr.bf16.mxu0 %v2097
        %3069 = vmatpush1.bf16.msra.mxu0 %v2096
        %3070 = vmatprep.subr.bf16.mxu0 %v2217
        %3071 = vmatpush2.bf16.msra.mxu0 %v2216
        %3072 = vmatprep.subr.bf16.mxu0 %v2209
        %3073 = vmatpush2.bf16.msra.mxu0 %v2208
        %3074 = vmatprep.subr.bf16.mxu0 %v2201
        %3075 = vmatpush2.bf16.msra.mxu0 %v2200
        %3076 = vmatprep.subr.bf16.mxu0 %v2193
        %3077 = vmatpush2.bf16.msra.mxu0 %v2192
        %3078 = vmatprep.subr.bf16.mxu0 %v2185
        %3079 = vmatpush2.bf16.msra.mxu0 %v2184
        %3080 = vmatprep.subr.bf16.mxu0 %v2177
        %3081 = vmatpush2.bf16.msra.mxu0 %v2176
        %3082 = vmatprep.subr.bf16.mxu0 %v2169
        %3083 = vmatpush2.bf16.msra.mxu0 %v2168
        %3084 = vmatprep.subr.bf16.mxu0 %v2161
        %3085 = vmatpush2.bf16.msra.mxu0 %v2160
        %3086 = vmatprep.mubr.bf16.mxu0 %v478
        %3087 = vmatmul.mubr.bf16.gmra.mxu0 %v477
        %v3088 = vpop.f32.mrf.mxu0
        %v3089 = vadd.f32 %v889, %v3088
        %v3090 = vpop.f32.mrf.mxu0
        %v3091 = vadd.f32 %v893, %v3090
        %v3092 = vpop.f32.mrf.mxu0
        %v3093 = vadd.f32 %v889, %v3092
        %v3094 = vpop.f32.mrf.mxu0
        %v3095 = vadd.f32 %v893, %v3094
        %3096 = vdwg.mxu0
        %3097 = vmatprep.subr.bf16.mxu0 %v2281
        %3098 = vmatpush1.bf16.msra.mxu0 %v2280
        %3099 = vmatprep.subr.bf16.mxu0 %v2273
        %3100 = vmatpush1.bf16.msra.mxu0 %v2272
        %3101 = vmatprep.subr.bf16.mxu0 %v2265
        %3102 = vmatpush1.bf16.msra.mxu0 %v2264
        %3103 = vmatprep.subr.bf16.mxu0 %v2257
        %3104 = vmatpush1.bf16.msra.mxu0 %v2256
        %3105 = vmatprep.subr.bf16.mxu0 %v2249
        %3106 = vmatpush1.bf16.msra.mxu0 %v2248
        %3107 = vmatprep.subr.bf16.mxu0 %v2241
        %3108 = vmatpush1.bf16.msra.mxu0 %v2240
        %3109 = vmatprep.subr.bf16.mxu0 %v2233
        %3110 = vmatpush1.bf16.msra.mxu0 %v2232
        %3111 = vmatprep.subr.bf16.mxu0 %v2225
        %3112 = vmatpush1.bf16.msra.mxu0 %v2224
        %3113 = vmatprep.subr.bf16.mxu0 %v2345
        %3114 = vmatpush2.bf16.msra.mxu0 %v2344
        %3115 = vmatprep.subr.bf16.mxu0 %v2337
        %3116 = vmatpush2.bf16.msra.mxu0 %v2336
        %3117 = vmatprep.subr.bf16.mxu0 %v2329
        %3118 = vmatpush2.bf16.msra.mxu0 %v2328
        %3119 = vmatprep.subr.bf16.mxu0 %v2321
        %3120 = vmatpush2.bf16.msra.mxu0 %v2320
        %3121 = vmatprep.subr.bf16.mxu0 %v2313
        %3122 = vmatpush2.bf16.msra.mxu0 %v2312
        %3123 = vmatprep.subr.bf16.mxu0 %v2305
        %3124 = vmatpush2.bf16.msra.mxu0 %v2304
        %3125 = vmatprep.subr.bf16.mxu0 %v2297
        %3126 = vmatpush2.bf16.msra.mxu0 %v2296
        %3127 = vmatprep.subr.bf16.mxu0 %v2289
        %3128 = vmatpush2.bf16.msra.mxu0 %v2288
        %3129 = vmatprep.mubr.bf16.mxu0 %v480
        %3130 = vmatmul.mubr.bf16.gmra.mxu0 %v479
        %v3131 = vpop.f32.mrf.mxu0
        %v3132 = vadd.f32 %v3089, %v3131
        %v3133 = vpop.f32.mrf.mxu0
        %v3134 = vadd.f32 %v3091, %v3133
        %v3135 = vpop.f32.mrf.mxu0
        %v3136 = vadd.f32 %v3093, %v3135
        %v3137 = vpop.f32.mrf.mxu0
        %v3138 = vadd.f32 %v3095, %v3137
        %3139 = vdwg.mxu0
        %3140 = vmatprep.subr.bf16.mxu0 %v2409
        %3141 = vmatpush1.bf16.msra.mxu0 %v2408
        %3142 = vmatprep.subr.bf16.mxu0 %v2401
        %3143 = vmatpush1.bf16.msra.mxu0 %v2400
        %3144 = vmatprep.subr.bf16.mxu0 %v2393
        %3145 = vmatpush1.bf16.msra.mxu0 %v2392
        %3146 = vmatprep.subr.bf16.mxu0 %v2385
        %3147 = vmatpush1.bf16.msra.mxu0 %v2384
        %3148 = vmatprep.subr.bf16.mxu0 %v2377
        %3149 = vmatpush1.bf16.msra.mxu0 %v2376
        %3150 = vmatprep.subr.bf16.mxu0 %v2369
        %3151 = vmatpush1.bf16.msra.mxu0 %v2368
        %3152 = vmatprep.subr.bf16.mxu0 %v2361
        %3153 = vmatpush1.bf16.msra.mxu0 %v2360
        %3154 = vmatprep.subr.bf16.mxu0 %v2353
        %3155 = vmatpush1.bf16.msra.mxu0 %v2352
        %3156 = vmatprep.subr.bf16.mxu0 %v2473
        %3157 = vmatpush2.bf16.msra.mxu0 %v2472
        %3158 = vmatprep.subr.bf16.mxu0 %v2465
        %3159 = vmatpush2.bf16.msra.mxu0 %v2464
        %3160 = vmatprep.subr.bf16.mxu0 %v2457
        %3161 = vmatpush2.bf16.msra.mxu0 %v2456
        %3162 = vmatprep.subr.bf16.mxu0 %v2449
        %3163 = vmatpush2.bf16.msra.mxu0 %v2448
        %3164 = vmatprep.subr.bf16.mxu0 %v2441
        %3165 = vmatpush2.bf16.msra.mxu0 %v2440
        %3166 = vmatprep.subr.bf16.mxu0 %v2433
        %3167 = vmatpush2.bf16.msra.mxu0 %v2432
        %3168 = vmatprep.subr.bf16.mxu0 %v2425
        %3169 = vmatpush2.bf16.msra.mxu0 %v2424
        %3170 = vmatprep.subr.bf16.mxu0 %v2417
        %3171 = vmatpush2.bf16.msra.mxu0 %v2416
        %3172 = vmatprep.mubr.bf16.mxu0 %v482
        %3173 = vmatmul.mubr.bf16.gmra.mxu0 %v481
        %v3174 = vpop.f32.mrf.mxu0
        %v3175 = vadd.f32 %v3132, %v3174
        %v3176 = vpop.f32.mrf.mxu0
        %v3177 = vadd.f32 %v3134, %v3176
        %v3178 = vpop.f32.mrf.mxu0
        %v3179 = vadd.f32 %v3136, %v3178
        %v3180 = vpop.f32.mrf.mxu0
        %v3181 = vadd.f32 %v3138, %v3180
        %3182 = vdwg.mxu0
        %3183 = vmatprep.subr.bf16.mxu0 0
        %3184 = vmatpush1.bf16.msra.mxu0 0
        %3185 = vmatprep.subr.bf16.mxu0 0
        %3186 = vmatpush1.bf16.msra.mxu0 0
        %3187 = vmatprep.subr.bf16.mxu0 0
        %3188 = vmatpush1.bf16.msra.mxu0 0
        %3189 = vmatprep.subr.bf16.mxu0 0
        %3190 = vmatpush1.bf16.msra.mxu0 0
        %3191 = vmatprep.subr.bf16.mxu0 0
        %3192 = vmatpush1.bf16.msra.mxu0 0
        %3193 = vmatprep.subr.bf16.mxu0 0
        %3194 = vmatpush1.bf16.msra.mxu0 0
        %3195 = vmatprep.subr.bf16.mxu0 0
        %3196 = vmatpush1.bf16.msra.mxu0 0
        %3197 = vmatprep.subr.bf16.mxu0 %v2481
        %3198 = vmatpush1.bf16.msra.mxu0 %v2480
        %3199 = vmatprep.subr.bf16.mxu0 0
        %3200 = vmatpush2.bf16.msra.mxu0 0
        %3201 = vmatprep.subr.bf16.mxu0 0
        %3202 = vmatpush2.bf16.msra.mxu0 0
        %3203 = vmatprep.subr.bf16.mxu0 0
        %3204 = vmatpush2.bf16.msra.mxu0 0
        %3205 = vmatprep.subr.bf16.mxu0 0
        %3206 = vmatpush2.bf16.msra.mxu0 0
        %3207 = vmatprep.subr.bf16.mxu0 0
        %3208 = vmatpush2.bf16.msra.mxu0 0
        %3209 = vmatprep.subr.bf16.mxu0 0
        %3210 = vmatpush2.bf16.msra.mxu0 0
        %3211 = vmatprep.subr.bf16.mxu0 0
        %3212 = vmatpush2.bf16.msra.mxu0 0
        %3213 = vmatprep.subr.bf16.mxu0 0
        %3214 = vmatpush2.bf16.msra.mxu0 0
        %3215 = vmatprep.mubr.bf16.mxu0 0
        %3216 = vmatmul.mubr.bf16.gmra.mxu0 %v2880
        %v3217 = vpop.f32.mrf.mxu0
        %v3218 = vadd.f32 %v3175, %v3217
        %v3219 = vpop.f32.mrf.mxu0
        %v3220 = vadd.f32 %v3177, %v3219
        %v3221 = vpop.f32.mrf.mxu0
        %v3222 = vadd.f32 %v3179, %v3221
        %v3223 = vpop.f32.mrf.mxu0
        %v3224 = vadd.f32 %v3181, %v3223
        %3225 = vdwg.mxu0
        %3226 = vmatprep.subr.bf16.mxu0 %v2155
        %3227 = vmatpush1.bf16.msra.mxu0 %v2154
        %3228 = vmatprep.subr.bf16.mxu0 %v2147
        %3229 = vmatpush1.bf16.msra.mxu0 %v2146
        %3230 = vmatprep.subr.bf16.mxu0 %v2139
        %3231 = vmatpush1.bf16.msra.mxu0 %v2138
        %3232 = vmatprep.subr.bf16.mxu0 %v2131
        %3233 = vmatpush1.bf16.msra.mxu0 %v2130
        %3234 = vmatprep.subr.bf16.mxu0 %v2123
        %3235 = vmatpush1.bf16.msra.mxu0 %v2122
        %3236 = vmatprep.subr.bf16.mxu0 %v2115
        %3237 = vmatpush1.bf16.msra.mxu0 %v2114
        %3238 = vmatprep.subr.bf16.mxu0 %v2107
        %3239 = vmatpush1.bf16.msra.mxu0 %v2106
        %3240 = vmatprep.subr.bf16.mxu0 %v2099
        %3241 = vmatpush1.bf16.msra.mxu0 %v2098
        %3242 = vmatprep.subr.bf16.mxu0 %v2219
        %3243 = vmatpush2.bf16.msra.mxu0 %v2218
        %3244 = vmatprep.subr.bf16.mxu0 %v2211
        %3245 = vmatpush2.bf16.msra.mxu0 %v2210
        %3246 = vmatprep.subr.bf16.mxu0 %v2203
        %3247 = vmatpush2.bf16.msra.mxu0 %v2202
        %3248 = vmatprep.subr.bf16.mxu0 %v2195
        %3249 = vmatpush2.bf16.msra.mxu0 %v2194
        %3250 = vmatprep.subr.bf16.mxu0 %v2187
        %3251 = vmatpush2.bf16.msra.mxu0 %v2186
        %3252 = vmatprep.subr.bf16.mxu0 %v2179
        %3253 = vmatpush2.bf16.msra.mxu0 %v2178
        %3254 = vmatprep.subr.bf16.mxu0 %v2171
        %3255 = vmatpush2.bf16.msra.mxu0 %v2170
        %3256 = vmatprep.subr.bf16.mxu0 %v2163
        %3257 = vmatpush2.bf16.msra.mxu0 %v2162
        %3258 = vmatprep.mubr.bf16.mxu0 %v478
        %3259 = vmatmul.mubr.bf16.gmra.mxu0 %v477
        %v3260 = vpop.f32.mrf.mxu0
        %v3261 = vadd.f32 %v897, %v3260
        %v3262 = vpop.f32.mrf.mxu0
        %v3263 = vadd.f32 %v901, %v3262
        %v3264 = vpop.f32.mrf.mxu0
        %v3265 = vadd.f32 %v897, %v3264
        %v3266 = vpop.f32.mrf.mxu0
        %v3267 = vadd.f32 %v901, %v3266
        %3268 = vdwg.mxu0
        %3269 = vmatprep.subr.bf16.mxu0 %v2283
        %3270 = vmatpush1.bf16.msra.mxu0 %v2282
        %3271 = vmatprep.subr.bf16.mxu0 %v2275
        %3272 = vmatpush1.bf16.msra.mxu0 %v2274
        %3273 = vmatprep.subr.bf16.mxu0 %v2267
        %3274 = vmatpush1.bf16.msra.mxu0 %v2266
        %3275 = vmatprep.subr.bf16.mxu0 %v2259
        %3276 = vmatpush1.bf16.msra.mxu0 %v2258
        %3277 = vmatprep.subr.bf16.mxu0 %v2251
        %3278 = vmatpush1.bf16.msra.mxu0 %v2250
        %3279 = vmatprep.subr.bf16.mxu0 %v2243
        %3280 = vmatpush1.bf16.msra.mxu0 %v2242
        %3281 = vmatprep.subr.bf16.mxu0 %v2235
        %3282 = vmatpush1.bf16.msra.mxu0 %v2234
        %3283 = vmatprep.subr.bf16.mxu0 %v2227
        %3284 = vmatpush1.bf16.msra.mxu0 %v2226
        %3285 = vmatprep.subr.bf16.mxu0 %v2347
        %3286 = vmatpush2.bf16.msra.mxu0 %v2346
        %3287 = vmatprep.subr.bf16.mxu0 %v2339
        %3288 = vmatpush2.bf16.msra.mxu0 %v2338
        %3289 = vmatprep.subr.bf16.mxu0 %v2331
        %3290 = vmatpush2.bf16.msra.mxu0 %v2330
        %3291 = vmatprep.subr.bf16.mxu0 %v2323
        %3292 = vmatpush2.bf16.msra.mxu0 %v2322
        %3293 = vmatprep.subr.bf16.mxu0 %v2315
        %3294 = vmatpush2.bf16.msra.mxu0 %v2314
        %3295 = vmatprep.subr.bf16.mxu0 %v2307
        %3296 = vmatpush2.bf16.msra.mxu0 %v2306
        %3297 = vmatprep.subr.bf16.mxu0 %v2299
        %3298 = vmatpush2.bf16.msra.mxu0 %v2298
        %3299 = vmatprep.subr.bf16.mxu0 %v2291
        %3300 = vmatpush2.bf16.msra.mxu0 %v2290
        %3301 = vmatprep.mubr.bf16.mxu0 %v480
        %3302 = vmatmul.mubr.bf16.gmra.mxu0 %v479
        %v3303 = vpop.f32.mrf.mxu0
        %v3304 = vadd.f32 %v3261, %v3303
        %v3305 = vpop.f32.mrf.mxu0
        %v3306 = vadd.f32 %v3263, %v3305
        %v3307 = vpop.f32.mrf.mxu0
        %v3308 = vadd.f32 %v3265, %v3307
        %v3309 = vpop.f32.mrf.mxu0
        %v3310 = vadd.f32 %v3267, %v3309
        %3311 = vdwg.mxu0
        %3312 = vmatprep.subr.bf16.mxu0 %v2411
        %3313 = vmatpush1.bf16.msra.mxu0 %v2410
        %3314 = vmatprep.subr.bf16.mxu0 %v2403
        %3315 = vmatpush1.bf16.msra.mxu0 %v2402
        %3316 = vmatprep.subr.bf16.mxu0 %v2395
        %3317 = vmatpush1.bf16.msra.mxu0 %v2394
        %3318 = vmatprep.subr.bf16.mxu0 %v2387
        %3319 = vmatpush1.bf16.msra.mxu0 %v2386
        %3320 = vmatprep.subr.bf16.mxu0 %v2379
        %3321 = vmatpush1.bf16.msra.mxu0 %v2378
        %3322 = vmatprep.subr.bf16.mxu0 %v2371
        %3323 = vmatpush1.bf16.msra.mxu0 %v2370
        %3324 = vmatprep.subr.bf16.mxu0 %v2363
        %3325 = vmatpush1.bf16.msra.mxu0 %v2362
        %3326 = vmatprep.subr.bf16.mxu0 %v2355
        %3327 = vmatpush1.bf16.msra.mxu0 %v2354
        %3328 = vmatprep.subr.bf16.mxu0 %v2475
        %3329 = vmatpush2.bf16.msra.mxu0 %v2474
        %3330 = vmatprep.subr.bf16.mxu0 %v2467
        %3331 = vmatpush2.bf16.msra.mxu0 %v2466
        %3332 = vmatprep.subr.bf16.mxu0 %v2459
        %3333 = vmatpush2.bf16.msra.mxu0 %v2458
        %3334 = vmatprep.subr.bf16.mxu0 %v2451
        %3335 = vmatpush2.bf16.msra.mxu0 %v2450
        %3336 = vmatprep.subr.bf16.mxu0 %v2443
        %3337 = vmatpush2.bf16.msra.mxu0 %v2442
        %3338 = vmatprep.subr.bf16.mxu0 %v2435
        %3339 = vmatpush2.bf16.msra.mxu0 %v2434
        %3340 = vmatprep.subr.bf16.mxu0 %v2427
        %3341 = vmatpush2.bf16.msra.mxu0 %v2426
        %3342 = vmatprep.subr.bf16.mxu0 %v2419
        %3343 = vmatpush2.bf16.msra.mxu0 %v2418
        %3344 = vmatprep.mubr.bf16.mxu0 %v482
        %3345 = vmatmul.mubr.bf16.gmra.mxu0 %v481
        %v3346 = vpop.f32.mrf.mxu0
        %v3347 = vadd.f32 %v3304, %v3346
        %v3348 = vpop.f32.mrf.mxu0
        %v3349 = vadd.f32 %v3306, %v3348
        %v3350 = vpop.f32.mrf.mxu0
        %v3351 = vadd.f32 %v3308, %v3350
        %v3352 = vpop.f32.mrf.mxu0
        %v3353 = vadd.f32 %v3310, %v3352
        %3354 = vdwg.mxu0
        %3355 = vmatprep.subr.bf16.mxu0 0
        %3356 = vmatpush1.bf16.msra.mxu0 0
        %3357 = vmatprep.subr.bf16.mxu0 0
        %3358 = vmatpush1.bf16.msra.mxu0 0
        %3359 = vmatprep.subr.bf16.mxu0 0
        %3360 = vmatpush1.bf16.msra.mxu0 0
        %3361 = vmatprep.subr.bf16.mxu0 0
        %3362 = vmatpush1.bf16.msra.mxu0 0
        %3363 = vmatprep.subr.bf16.mxu0 0
        %3364 = vmatpush1.bf16.msra.mxu0 0
        %3365 = vmatprep.subr.bf16.mxu0 0
        %3366 = vmatpush1.bf16.msra.mxu0 0
        %3367 = vmatprep.subr.bf16.mxu0 0
        %3368 = vmatpush1.bf16.msra.mxu0 0
        %3369 = vmatprep.subr.bf16.mxu0 %v2483
        %3370 = vmatpush1.bf16.msra.mxu0 %v2482
        %3371 = vmatprep.subr.bf16.mxu0 0
        %3372 = vmatpush2.bf16.msra.mxu0 0
        %3373 = vmatprep.subr.bf16.mxu0 0
        %3374 = vmatpush2.bf16.msra.mxu0 0
        %3375 = vmatprep.subr.bf16.mxu0 0
        %3376 = vmatpush2.bf16.msra.mxu0 0
        %3377 = vmatprep.subr.bf16.mxu0 0
        %3378 = vmatpush2.bf16.msra.mxu0 0
        %3379 = vmatprep.subr.bf16.mxu0 0
        %3380 = vmatpush2.bf16.msra.mxu0 0
        %3381 = vmatprep.subr.bf16.mxu0 0
        %3382 = vmatpush2.bf16.msra.mxu0 0
        %3383 = vmatprep.subr.bf16.mxu0 0
        %3384 = vmatpush2.bf16.msra.mxu0 0
        %3385 = vmatprep.subr.bf16.mxu0 0
        %3386 = vmatpush2.bf16.msra.mxu0 0
        %3387 = vmatprep.mubr.bf16.mxu0 0
        %3388 = vmatmul.mubr.bf16.gmra.mxu0 %v2880
        %v3389 = vpop.f32.mrf.mxu0
        %v3390 = vadd.f32 %v3347, %v3389
        %v3391 = vpop.f32.mrf.mxu0
        %v3392 = vadd.f32 %v3349, %v3391
        %v3393 = vpop.f32.mrf.mxu0
        %v3394 = vadd.f32 %v3351, %v3393
        %v3395 = vpop.f32.mrf.mxu0
        %v3396 = vadd.f32 %v3353, %v3395
        %3397 = vdwg.mxu0
        %3398 = vmatprep.subr.bf16.mxu0 %v2157
        %3399 = vmatpush1.bf16.msra.mxu0 %v2156
        %3400 = vmatprep.subr.bf16.mxu0 %v2149
        %3401 = vmatpush1.bf16.msra.mxu0 %v2148
        %3402 = vmatprep.subr.bf16.mxu0 %v2141
        %3403 = vmatpush1.bf16.msra.mxu0 %v2140
        %3404 = vmatprep.subr.bf16.mxu0 %v2133
        %3405 = vmatpush1.bf16.msra.mxu0 %v2132
        %3406 = vmatprep.subr.bf16.mxu0 %v2125
        %3407 = vmatpush1.bf16.msra.mxu0 %v2124
        %3408 = vmatprep.subr.bf16.mxu0 %v2117
        %3409 = vmatpush1.bf16.msra.mxu0 %v2116
        %3410 = vmatprep.subr.bf16.mxu0 %v2109
        %3411 = vmatpush1.bf16.msra.mxu0 %v2108
        %3412 = vmatprep.subr.bf16.mxu0 %v2101
        %3413 = vmatpush1.bf16.msra.mxu0 %v2100
        %3414 = vmatprep.subr.bf16.mxu0 %v2221
        %3415 = vmatpush2.bf16.msra.mxu0 %v2220
        %3416 = vmatprep.subr.bf16.mxu0 %v2213
        %3417 = vmatpush2.bf16.msra.mxu0 %v2212
        %3418 = vmatprep.subr.bf16.mxu0 %v2205
        %3419 = vmatpush2.bf16.msra.mxu0 %v2204
        %3420 = vmatprep.subr.bf16.mxu0 %v2197
        %3421 = vmatpush2.bf16.msra.mxu0 %v2196
        %3422 = vmatprep.subr.bf16.mxu0 %v2189
        %3423 = vmatpush2.bf16.msra.mxu0 %v2188
        %3424 = vmatprep.subr.bf16.mxu0 %v2181
        %3425 = vmatpush2.bf16.msra.mxu0 %v2180
        %3426 = vmatprep.subr.bf16.mxu0 %v2173
        %3427 = vmatpush2.bf16.msra.mxu0 %v2172
        %3428 = vmatprep.subr.bf16.mxu0 %v2165
        %3429 = vmatpush2.bf16.msra.mxu0 %v2164
        %3430 = vmatprep.mubr.bf16.mxu0 %v478
        %3431 = vmatmul.mubr.bf16.gmra.mxu0 %v477
        %v3432 = vpop.f32.mrf.mxu0
        %v3433 = vadd.f32 %v905, %v3432
        %v3434 = vpop.f32.mrf.mxu0
        %v3435 = vadd.f32 %v909, %v3434
        %v3436 = vpop.f32.mrf.mxu0
        %v3437 = vadd.f32 %v905, %v3436
        %v3438 = vpop.f32.mrf.mxu0
        %v3439 = vadd.f32 %v909, %v3438
        %3440 = vdwg.mxu0
        %3441 = vmatprep.subr.bf16.mxu0 %v2285
        %3442 = vmatpush1.bf16.msra.mxu0 %v2284
        %3443 = vmatprep.subr.bf16.mxu0 %v2277
        %3444 = vmatpush1.bf16.msra.mxu0 %v2276
        %3445 = vmatprep.subr.bf16.mxu0 %v2269
        %3446 = vmatpush1.bf16.msra.mxu0 %v2268
        %3447 = vmatprep.subr.bf16.mxu0 %v2261
        %3448 = vmatpush1.bf16.msra.mxu0 %v2260
        %3449 = vmatprep.subr.bf16.mxu0 %v2253
        %3450 = vmatpush1.bf16.msra.mxu0 %v2252
        %3451 = vmatprep.subr.bf16.mxu0 %v2245
        %3452 = vmatpush1.bf16.msra.mxu0 %v2244
        %3453 = vmatprep.subr.bf16.mxu0 %v2237
        %3454 = vmatpush1.bf16.msra.mxu0 %v2236
        %3455 = vmatprep.subr.bf16.mxu0 %v2229
        %3456 = vmatpush1.bf16.msra.mxu0 %v2228
        %3457 = vmatprep.subr.bf16.mxu0 %v2349
        %3458 = vmatpush2.bf16.msra.mxu0 %v2348
        %3459 = vmatprep.subr.bf16.mxu0 %v2341
        %3460 = vmatpush2.bf16.msra.mxu0 %v2340
        %3461 = vmatprep.subr.bf16.mxu0 %v2333
        %3462 = vmatpush2.bf16.msra.mxu0 %v2332
        %3463 = vmatprep.subr.bf16.mxu0 %v2325
        %3464 = vmatpush2.bf16.msra.mxu0 %v2324
        %3465 = vmatprep.subr.bf16.mxu0 %v2317
        %3466 = vmatpush2.bf16.msra.mxu0 %v2316
        %3467 = vmatprep.subr.bf16.mxu0 %v2309
        %3468 = vmatpush2.bf16.msra.mxu0 %v2308
        %3469 = vmatprep.subr.bf16.mxu0 %v2301
        %3470 = vmatpush2.bf16.msra.mxu0 %v2300
        %3471 = vmatprep.subr.bf16.mxu0 %v2293
        %3472 = vmatpush2.bf16.msra.mxu0 %v2292
        %3473 = vmatprep.mubr.bf16.mxu0 %v480
        %3474 = vmatmul.mubr.bf16.gmra.mxu0 %v479
        %v3475 = vpop.f32.mrf.mxu0
        %v3476 = vadd.f32 %v3433, %v3475
        %v3477 = vpop.f32.mrf.mxu0
        %v3478 = vadd.f32 %v3435, %v3477
        %v3479 = vpop.f32.mrf.mxu0
        %v3480 = vadd.f32 %v3437, %v3479
        %v3481 = vpop.f32.mrf.mxu0
        %v3482 = vadd.f32 %v3439, %v3481
        %3483 = vdwg.mxu0
        %3484 = vmatprep.subr.bf16.mxu0 %v2413
        %3485 = vmatpush1.bf16.msra.mxu0 %v2412
        %3486 = vmatprep.subr.bf16.mxu0 %v2405
        %3487 = vmatpush1.bf16.msra.mxu0 %v2404
        %3488 = vmatprep.subr.bf16.mxu0 %v2397
        %3489 = vmatpush1.bf16.msra.mxu0 %v2396
        %3490 = vmatprep.subr.bf16.mxu0 %v2389
        %3491 = vmatpush1.bf16.msra.mxu0 %v2388
        %3492 = vmatprep.subr.bf16.mxu0 %v2381
        %3493 = vmatpush1.bf16.msra.mxu0 %v2380
        %3494 = vmatprep.subr.bf16.mxu0 %v2373
        %3495 = vmatpush1.bf16.msra.mxu0 %v2372
        %3496 = vmatprep.subr.bf16.mxu0 %v2365
        %3497 = vmatpush1.bf16.msra.mxu0 %v2364
        %3498 = vmatprep.subr.bf16.mxu0 %v2357
        %3499 = vmatpush1.bf16.msra.mxu0 %v2356
        %3500 = vmatprep.subr.bf16.mxu0 %v2477
        %3501 = vmatpush2.bf16.msra.mxu0 %v2476
        %3502 = vmatprep.subr.bf16.mxu0 %v2469
        %3503 = vmatpush2.bf16.msra.mxu0 %v2468
        %3504 = vmatprep.subr.bf16.mxu0 %v2461
        %3505 = vmatpush2.bf16.msra.mxu0 %v2460
        %3506 = vmatprep.subr.bf16.mxu0 %v2453
        %3507 = vmatpush2.bf16.msra.mxu0 %v2452
        %3508 = vmatprep.subr.bf16.mxu0 %v2445
        %3509 = vmatpush2.bf16.msra.mxu0 %v2444
        %3510 = vmatprep.subr.bf16.mxu0 %v2437
        %3511 = vmatpush2.bf16.msra.mxu0 %v2436
        %3512 = vmatprep.subr.bf16.mxu0 %v2429
        %3513 = vmatpush2.bf16.msra.mxu0 %v2428
        %3514 = vmatprep.subr.bf16.mxu0 %v2421
        %3515 = vmatpush2.bf16.msra.mxu0 %v2420
        %3516 = vmatprep.mubr.bf16.mxu0 %v482
        %3517 = vmatmul.mubr.bf16.gmra.mxu0 %v481
        %v3518 = vpop.f32.mrf.mxu0
        %v3519 = vadd.f32 %v3476, %v3518
        %v3520 = vpop.f32.mrf.mxu0
        %v3521 = vadd.f32 %v3478, %v3520
        %v3522 = vpop.f32.mrf.mxu0
        %v3523 = vadd.f32 %v3480, %v3522
        %v3524 = vpop.f32.mrf.mxu0
        %v3525 = vadd.f32 %v3482, %v3524
        %3526 = vdwg.mxu0
        %3527 = vmatprep.subr.bf16.mxu0 0
        %3528 = vmatpush1.bf16.msra.mxu0 0
        %3529 = vmatprep.subr.bf16.mxu0 0
        %3530 = vmatpush1.bf16.msra.mxu0 0
        %3531 = vmatprep.subr.bf16.mxu0 0
        %3532 = vmatpush1.bf16.msra.mxu0 0
        %3533 = vmatprep.subr.bf16.mxu0 0
        %3534 = vmatpush1.bf16.msra.mxu0 0
        %3535 = vmatprep.subr.bf16.mxu0 0
        %3536 = vmatpush1.bf16.msra.mxu0 0
        %3537 = vmatprep.subr.bf16.mxu0 0
        %3538 = vmatpush1.bf16.msra.mxu0 0
        %3539 = vmatprep.subr.bf16.mxu0 0
        %3540 = vmatpush1.bf16.msra.mxu0 0
        %3541 = vmatprep.subr.bf16.mxu0 %v2485
        %3542 = vmatpush1.bf16.msra.mxu0 %v2484
        %3543 = vmatprep.subr.bf16.mxu0 0
        %3544 = vmatpush2.bf16.msra.mxu0 0
        %3545 = vmatprep.subr.bf16.mxu0 0
        %3546 = vmatpush2.bf16.msra.mxu0 0
        %3547 = vmatprep.subr.bf16.mxu0 0
        %3548 = vmatpush2.bf16.msra.mxu0 0
        %3549 = vmatprep.subr.bf16.mxu0 0
        %3550 = vmatpush2.bf16.msra.mxu0 0
        %3551 = vmatprep.subr.bf16.mxu0 0
        %3552 = vmatpush2.bf16.msra.mxu0 0
        %3553 = vmatprep.subr.bf16.mxu0 0
        %3554 = vmatpush2.bf16.msra.mxu0 0
        %3555 = vmatprep.subr.bf16.mxu0 0
        %3556 = vmatpush2.bf16.msra.mxu0 0
        %3557 = vmatprep.subr.bf16.mxu0 0
        %3558 = vmatpush2.bf16.msra.mxu0 0
        %3559 = vmatprep.mubr.bf16.mxu0 0
        %3560 = vmatmul.mubr.bf16.gmra.mxu0 %v2880
        %v3561 = vpop.f32.mrf.mxu0
        %v3562 = vadd.f32 %v3519, %v3561
        %v3563 = vpop.f32.mrf.mxu0
        %v3564 = vadd.f32 %v3521, %v3563
        %v3565 = vpop.f32.mrf.mxu0
        %v3566 = vadd.f32 %v3523, %v3565
        %v3567 = vpop.f32.mrf.mxu0
        %v3568 = vadd.f32 %v3525, %v3567
        %3569 = vdwg.mxu0
        %vm3570 = vcmp.gt.f32.partialorder %v3046, 0.0
        %vm3571 = vcmp.gt.f32.partialorder %v3048, 0.0
        %vm3572 = vcmp.gt.f32.partialorder %v3218, 0.0
        %vm3573 = vcmp.gt.f32.partialorder %v3220, 0.0
        %vm3574 = vcmp.gt.f32.partialorder %v3390, 0.0
        %vm3575 = vcmp.gt.f32.partialorder %v3392, 0.0
        %vm3576 = vcmp.gt.f32.partialorder %v3562, 0.0
        %vm3577 = vcmp.gt.f32.partialorder %v3564, 0.0
        %vm3578 = vcmp.gt.f32.partialorder %v3050, 0.0
        %vm3579 = vcmp.gt.f32.partialorder %v3052, 0.0
        %vm3580 = vcmp.gt.f32.partialorder %v3222, 0.0
        %vm3581 = vcmp.gt.f32.partialorder %v3224, 0.0
        %vm3582 = vcmp.gt.f32.partialorder %v3394, 0.0
        %vm3583 = vcmp.gt.f32.partialorder %v3396, 0.0
        %vm3584 = vcmp.gt.f32.partialorder %v3566, 0.0
        %vm3585 = vcmp.gt.f32.partialorder %v3568, 0.0
        %v3586 = vmul.f32 %v3046, 0.2
        %v3587 = vmul.f32 %v3048, 0.2
        %v3588 = vmul.f32 %v3218, 0.2
        %v3589 = vmul.f32 %v3220, 0.2
        %v3590 = vmul.f32 %v3390, 0.2
        %v3591 = vmul.f32 %v3392, 0.2
        %v3592 = vmul.f32 %v3562, 0.2
        %v3593 = vmul.f32 %v3564, 0.2
        %v3594 = vmul.f32 %v3050, 0.2
        %v3595 = vmul.f32 %v3052, 0.2
        %v3596 = vmul.f32 %v3222, 0.2
        %v3597 = vmul.f32 %v3224, 0.2
        %v3598 = vmul.f32 %v3394, 0.2
        %v3599 = vmul.f32 %v3396, 0.2
        %v3600 = vmul.f32 %v3566, 0.2
        %v3601 = vmul.f32 %v3568, 0.2
        %v3602 = vsel %vm3570, %v3046, %v3586
        %v3603 = vsel %vm3571, %v3048, %v3587
        %v3604 = vsel %vm3572, %v3218, %v3588
        %v3605 = vsel %vm3573, %v3220, %v3589
        %v3606 = vsel %vm3574, %v3390, %v3590
        %v3607 = vsel %vm3575, %v3392, %v3591
        %v3608 = vsel %vm3576, %v3562, %v3592
        %v3609 = vsel %vm3577, %v3564, %v3593
        %v3610 = vsel %vm3578, %v3050, %v3594
        %v3611 = vsel %vm3579, %v3052, %v3595
        %v3612 = vsel %vm3580, %v3222, %v3596
        %v3613 = vsel %vm3581, %v3224, %v3597
        %v3614 = vsel %vm3582, %v3394, %v3598
        %v3615 = vsel %vm3583, %v3396, %v3599
        %v3616 = vsel %vm3584, %v3566, %v3600
        %v3617 = vsel %vm3585, %v3568, %v3601
        %v3618 = vpack.c.bf16 %v3610, %v3602
        %v3619 = vpack.c.bf16 %v3611, %v3603
        %v3620 = vpack.c.bf16 %v3612, %v3604
        %v3621 = vpack.c.bf16 %v3613, %v3605
        %v3622 = vpack.c.bf16 %v3614, %v3606
        %v3623 = vpack.c.bf16 %v3615, %v3607
        %v3624 = vpack.c.bf16 %v3616, %v3608
        %v3625 = vpack.c.bf16 %v3617, %v3609
        %v3626 = vld [vmem:[#allocation8] sm:$0xff]
        %v3627 = vld [vmem:[#allocation8 + $0x8] sm:$0xff]
        %v3628 = vld [vmem:[#allocation8 + $0x10] sm:$0xff]
        %v3629 = vld [vmem:[#allocation8 + $0x18] sm:$0xff]
        %v3630 = vld [vmem:[#allocation8 + $0x20] sm:$0xff]
        %v3631 = vld [vmem:[#allocation8 + $0x28] sm:$0xff]
        %v3632 = vld [vmem:[#allocation8 + $0x30] sm:$0xff]
        %v3633 = vld [vmem:[#allocation8 + $0x38] sm:$0xff]
        %v3634 = vld [vmem:[#allocation8 + $0x40] sm:$0xff]
        %v3635 = vld [vmem:[#allocation8 + $0x48] sm:$0xff]
        %v3636 = vld [vmem:[#allocation8 + $0x50] sm:$0xff]
        %v3637 = vld [vmem:[#allocation8 + $0x58] sm:$0xff]
        %v3638 = vld [vmem:[#allocation8 + $0x60] sm:$0xff]
        %v3639 = vld [vmem:[#allocation8 + $0x68] sm:$0xff]
        %v3640 = vld [vmem:[#allocation8 + $0x70] sm:$0xff]
        %v3641 = vld [vmem:[#allocation8 + $0x78] sm:$0xff]
        %v3642 = vld [vmem:[#allocation8 + $0x80] sm:$0xff]
        %v3643 = vld [vmem:[#allocation8 + $0x88] sm:$0xff]
        %v3644 = vld [vmem:[#allocation8 + $0x90] sm:$0xff]
        %v3645 = vld [vmem:[#allocation8 + $0x98] sm:$0xff]
        %v3646 = vld [vmem:[#allocation8 + $0xa0] sm:$0xff]
        %v3647 = vld [vmem:[#allocation8 + $0xa8] sm:$0xff]
        %v3648 = vld [vmem:[#allocation8 + $0xb0] sm:$0xff]
        %v3649 = vld [vmem:[#allocation8 + $0xb8] sm:$0xff]
        %v3650 = vld [vmem:[#allocation8 + $0xc0] sm:$0xff]
        %v3651 = vld [vmem:[#allocation8 + $0xc8] sm:$0xff]
        %v3652 = vld [vmem:[#allocation8 + $0xd0] sm:$0xff]
        %v3653 = vld [vmem:[#allocation8 + $0xd8] sm:$0xff]
        %v3654 = vld [vmem:[#allocation8 + $0xe0] sm:$0xff]
        %v3655 = vld [vmem:[#allocation8 + $0xe8] sm:$0xff]
        %v3656 = vld [vmem:[#allocation8 + $0xf0] sm:$0xff]
        %v3657 = vld [vmem:[#allocation8 + $0xf8] sm:$0xff]
        %v3658 = vld [vmem:[#allocation8 + $0x100] sm:$0xff]
        %v3659 = vld [vmem:[#allocation8 + $0x108] sm:$0xff]
        %v3660 = vld [vmem:[#allocation8 + $0x110] sm:$0xff]
        %v3661 = vld [vmem:[#allocation8 + $0x118] sm:$0xff]
        %v3662 = vld [vmem:[#allocation8 + $0x120] sm:$0xff]
        %v3663 = vld [vmem:[#allocation8 + $0x128] sm:$0xff]
        %v3664 = vld [vmem:[#allocation8 + $0x130] sm:$0xff]
        %v3665 = vld [vmem:[#allocation8 + $0x138] sm:$0xff]
        %v3666 = vld [vmem:[#allocation8 + $0x140] sm:$0xff]
        %v3667 = vld [vmem:[#allocation8 + $0x148] sm:$0xff]
        %v3668 = vld [vmem:[#allocation8 + $0x150] sm:$0xff]
        %v3669 = vld [vmem:[#allocation8 + $0x158] sm:$0xff]
        %v3670 = vld [vmem:[#allocation8 + $0x160] sm:$0xff]
        %v3671 = vld [vmem:[#allocation8 + $0x168] sm:$0xff]
        %v3672 = vld [vmem:[#allocation8 + $0x170] sm:$0xff]
        %v3673 = vld [vmem:[#allocation8 + $0x178] sm:$0xff]
        %v3674 = vld [vmem:[#allocation8 + $0x180] sm:$0xff]
        %v3675 = vld [vmem:[#allocation8 + $0x188] sm:$0xff]
        %v3676 = vld [vmem:[#allocation8 + $0x190] sm:$0xff]
        %v3677 = vld [vmem:[#allocation8 + $0x198] sm:$0xff]
        %v3678 = vld [vmem:[#allocation8 + $0x1a0] sm:$0xff]
        %v3679 = vld [vmem:[#allocation8 + $0x1a8] sm:$0xff]
        %v3680 = vld [vmem:[#allocation8 + $0x1b0] sm:$0xff]
        %v3681 = vld [vmem:[#allocation8 + $0x1b8] sm:$0xff]
        %v3682 = vld [vmem:[#allocation8 + $0x1c0] sm:$0xff]
        %v3683 = vld [vmem:[#allocation8 + $0x1c8] sm:$0xff]
        %v3684 = vld [vmem:[#allocation8 + $0x1d0] sm:$0xff]
        %v3685 = vld [vmem:[#allocation8 + $0x1d8] sm:$0xff]
        %v3686 = vld [vmem:[#allocation8 + $0x1e0] sm:$0xff]
        %v3687 = vld [vmem:[#allocation8 + $0x1e8] sm:$0xff]
        %v3688 = vld [vmem:[#allocation8 + $0x1f0] sm:$0xff]
        %v3689 = vld [vmem:[#allocation8 + $0x1f8] sm:$0xff]
        %v3690 = vld [vmem:[#allocation8 + $0x200] sm:$0xff]
        %v3691 = vld [vmem:[#allocation8 + $0x208] sm:$0xff]
        %v3692 = vld [vmem:[#allocation8 + $0x210] sm:$0xff]
        %v3693 = vld [vmem:[#allocation8 + $0x218] sm:$0xff]
        %v3694 = vld [vmem:[#allocation8 + $0x220] sm:$0xff]
        %v3695 = vld [vmem:[#allocation8 + $0x228] sm:$0xff]
        %v3696 = vld [vmem:[#allocation8 + $0x230] sm:$0xff]
        %v3697 = vld [vmem:[#allocation8 + $0x238] sm:$0xff]
        %v3698 = vld [vmem:[#allocation8 + $0x240] sm:$0xff]
        %v3699 = vld [vmem:[#allocation8 + $0x248] sm:$0xff]
        %v3700 = vld [vmem:[#allocation8 + $0x250] sm:$0xff]
        %v3701 = vld [vmem:[#allocation8 + $0x258] sm:$0xff]
        %v3702 = vld [vmem:[#allocation8 + $0x260] sm:$0xff]
        %v3703 = vld [vmem:[#allocation8 + $0x268] sm:$0xff]
        %v3704 = vld [vmem:[#allocation8 + $0x270] sm:$0xff]
        %v3705 = vld [vmem:[#allocation8 + $0x278] sm:$0xff]
        %v3706 = vld [vmem:[#allocation8 + $0x280] sm:$0xff]
        %v3707 = vld [vmem:[#allocation8 + $0x288] sm:$0xff]
        %v3708 = vld [vmem:[#allocation8 + $0x290] sm:$0xff]
        %v3709 = vld [vmem:[#allocation8 + $0x298] sm:$0xff]
        %v3710 = vld [vmem:[#allocation8 + $0x2a0] sm:$0xff]
        %v3711 = vld [vmem:[#allocation8 + $0x2a8] sm:$0xff]
        %v3712 = vld [vmem:[#allocation8 + $0x2b0] sm:$0xff]
        %v3713 = vld [vmem:[#allocation8 + $0x2b8] sm:$0xff]
        %v3714 = vld [vmem:[#allocation8 + $0x2c0] sm:$0xff]
        %v3715 = vld [vmem:[#allocation8 + $0x2c8] sm:$0xff]
        %v3716 = vld [vmem:[#allocation8 + $0x2d0] sm:$0xff]
        %v3717 = vld [vmem:[#allocation8 + $0x2d8] sm:$0xff]
        %v3718 = vld [vmem:[#allocation8 + $0x2e0] sm:$0xff]
        %v3719 = vld [vmem:[#allocation8 + $0x2e8] sm:$0xff]
        %v3720 = vld [vmem:[#allocation8 + $0x2f0] sm:$0xff]
        %v3721 = vld [vmem:[#allocation8 + $0x2f8] sm:$0xff]
        %v3722 = vld [vmem:[#allocation8 + $0x300] sm:$0xff]
        %v3723 = vld [vmem:[#allocation8 + $0x308] sm:$0xff]
        %v3724 = vld [vmem:[#allocation8 + $0x310] sm:$0xff]
        %v3725 = vld [vmem:[#allocation8 + $0x318] sm:$0xff]
        %v3726 = vld [vmem:[#allocation8 + $0x320] sm:$0xff]
        %v3727 = vld [vmem:[#allocation8 + $0x328] sm:$0xff]
        %v3728 = vld [vmem:[#allocation8 + $0x330] sm:$0xff]
        %v3729 = vld [vmem:[#allocation8 + $0x338] sm:$0xff]
        %v3730 = vld [vmem:[#allocation8 + $0x340] sm:$0xff]
        %v3731 = vld [vmem:[#allocation8 + $0x348] sm:$0xff]
        %v3732 = vld [vmem:[#allocation8 + $0x350] sm:$0xff]
        %v3733 = vld [vmem:[#allocation8 + $0x358] sm:$0xff]
        %v3734 = vld [vmem:[#allocation8 + $0x360] sm:$0xff]
        %v3735 = vld [vmem:[#allocation8 + $0x368] sm:$0xff]
        %v3736 = vld [vmem:[#allocation8 + $0x370] sm:$0xff]
        %v3737 = vld [vmem:[#allocation8 + $0x378] sm:$0xff]
        %v3738 = vld [vmem:[#allocation8 + $0x380] sm:$0xff]
        %v3739 = vld [vmem:[#allocation8 + $0x388] sm:$0xff]
        %v3740 = vld [vmem:[#allocation8 + $0x390] sm:$0xff]
        %v3741 = vld [vmem:[#allocation8 + $0x398] sm:$0xff]
        %v3742 = vld [vmem:[#allocation8 + $0x3a0] sm:$0xff]
        %v3743 = vld [vmem:[#allocation8 + $0x3a8] sm:$0xff]
        %v3744 = vld [vmem:[#allocation8 + $0x3b0] sm:$0xff]
        %v3745 = vld [vmem:[#allocation8 + $0x3b8] sm:$0xff]
        %v3746 = vld [vmem:[#allocation8 + $0x3c0] sm:$0xff]
        %v3747 = vld [vmem:[#allocation8 + $0x3c8] sm:$0xff]
        %v3748 = vld [vmem:[#allocation8 + $0x3d0] sm:$0xff]
        %v3749 = vld [vmem:[#allocation8 + $0x3d8] sm:$0xff]
        %v3750 = vld [vmem:[#allocation8 + $0x3e0] sm:$0xff]
        %v3751 = vld [vmem:[#allocation8 + $0x3e8] sm:$0xff]
        %v3752 = vld [vmem:[#allocation8 + $0x3f0] sm:$0xff]
        %v3753 = vld [vmem:[#allocation8 + $0x3f8] sm:$0xff]
        %v3754 = vld [vmem:[#allocation8 + $0x400] sm:$0xff]
        %v3755 = vld [vmem:[#allocation8 + $0x408] sm:$0xff]
        %v3756 = vld [vmem:[#allocation8 + $0x410] sm:$0xff]
        %v3757 = vld [vmem:[#allocation8 + $0x418] sm:$0xff]
        %v3758 = vld [vmem:[#allocation8 + $0x420] sm:$0xff]
        %v3759 = vld [vmem:[#allocation8 + $0x428] sm:$0xff]
        %v3760 = vld [vmem:[#allocation8 + $0x430] sm:$0xff]
        %v3761 = vld [vmem:[#allocation8 + $0x438] sm:$0xff]
        %v3762 = vld [vmem:[#allocation8 + $0x440] sm:$0xff]
        %v3763 = vld [vmem:[#allocation8 + $0x448] sm:$0xff]
        %v3764 = vld [vmem:[#allocation8 + $0x450] sm:$0xff]
        %v3765 = vld [vmem:[#allocation8 + $0x458] sm:$0xff]
        %v3766 = vld [vmem:[#allocation8 + $0x460] sm:$0xff]
        %v3767 = vld [vmem:[#allocation8 + $0x468] sm:$0xff]
        %v3768 = vld [vmem:[#allocation8 + $0x470] sm:$0xff]
        %v3769 = vld [vmem:[#allocation8 + $0x478] sm:$0xff]
        %v3770 = vld [vmem:[#allocation8 + $0x480] sm:$0xff]
        %v3771 = vld [vmem:[#allocation8 + $0x488] sm:$0xff]
        %v3772 = vld [vmem:[#allocation8 + $0x490] sm:$0xff]
        %v3773 = vld [vmem:[#allocation8 + $0x498] sm:$0xff]
        %v3774 = vld [vmem:[#allocation8 + $0x4a0] sm:$0xff]
        %v3775 = vld [vmem:[#allocation8 + $0x4a8] sm:$0xff]
        %v3776 = vld [vmem:[#allocation8 + $0x4b0] sm:$0xff]
        %v3777 = vld [vmem:[#allocation8 + $0x4b8] sm:$0xff]
        %v3778 = vld [vmem:[#allocation8 + $0x4c0] sm:$0xff]
        %v3779 = vld [vmem:[#allocation8 + $0x4c8] sm:$0xff]
        %v3780 = vld [vmem:[#allocation8 + $0x4d0] sm:$0xff]
        %v3781 = vld [vmem:[#allocation8 + $0x4d8] sm:$0xff]
        %v3782 = vld [vmem:[#allocation8 + $0x4e0] sm:$0xff]
        %v3783 = vld [vmem:[#allocation8 + $0x4e8] sm:$0xff]
        %v3784 = vld [vmem:[#allocation8 + $0x4f0] sm:$0xff]
        %v3785 = vld [vmem:[#allocation8 + $0x4f8] sm:$0xff]
        %v3786 = vld [vmem:[#allocation8 + $0x500] sm:$0xff]
        %v3787 = vld [vmem:[#allocation8 + $0x508] sm:$0xff]
        %v3788 = vld [vmem:[#allocation8 + $0x510] sm:$0xff]
        %v3789 = vld [vmem:[#allocation8 + $0x518] sm:$0xff]
        %v3790 = vld [vmem:[#allocation8 + $0x520] sm:$0xff]
        %v3791 = vld [vmem:[#allocation8 + $0x528] sm:$0xff]
        %v3792 = vld [vmem:[#allocation8 + $0x530] sm:$0xff]
        %v3793 = vld [vmem:[#allocation8 + $0x538] sm:$0xff]
        %v3794 = vld [vmem:[#allocation8 + $0x540] sm:$0xff]
        %v3795 = vld [vmem:[#allocation8 + $0x548] sm:$0xff]
        %v3796 = vld [vmem:[#allocation8 + $0x550] sm:$0xff]
        %v3797 = vld [vmem:[#allocation8 + $0x558] sm:$0xff]
        %v3798 = vld [vmem:[#allocation8 + $0x560] sm:$0xff]
        %v3799 = vld [vmem:[#allocation8 + $0x568] sm:$0xff]
        %v3800 = vld [vmem:[#allocation8 + $0x570] sm:$0xff]
        %v3801 = vld [vmem:[#allocation8 + $0x578] sm:$0xff]
        %v3802 = vld [vmem:[#allocation8 + $0x580] sm:$0xff]
        %v3803 = vld [vmem:[#allocation8 + $0x588] sm:$0xff]
        %v3804 = vld [vmem:[#allocation8 + $0x590] sm:$0xff]
        %v3805 = vld [vmem:[#allocation8 + $0x598] sm:$0xff]
        %v3806 = vld [vmem:[#allocation8 + $0x5a0] sm:$0xff]
        %v3807 = vld [vmem:[#allocation8 + $0x5a8] sm:$0xff]
        %v3808 = vld [vmem:[#allocation8 + $0x5b0] sm:$0xff]
        %v3809 = vld [vmem:[#allocation8 + $0x5b8] sm:$0xff]
        %v3810 = vld [vmem:[#allocation8 + $0x5c0] sm:$0xff]
        %v3811 = vld [vmem:[#allocation8 + $0x5c8] sm:$0xff]
        %v3812 = vld [vmem:[#allocation8 + $0x5d0] sm:$0xff]
        %v3813 = vld [vmem:[#allocation8 + $0x5d8] sm:$0xff]
        %v3814 = vld [vmem:[#allocation8 + $0x5e0] sm:$0xff]
        %v3815 = vld [vmem:[#allocation8 + $0x5e8] sm:$0xff]
        %v3816 = vld [vmem:[#allocation8 + $0x5f0] sm:$0xff]
        %v3817 = vld [vmem:[#allocation8 + $0x5f8] sm:$0xff]
        %v3818 = vld [vmem:[#allocation8 + $0x600] sm:$0xff]
        %v3819 = vld [vmem:[#allocation8 + $0x608] sm:$0xff]
        %v3820 = vld [vmem:[#allocation8 + $0x610] sm:$0xff]
        %v3821 = vld [vmem:[#allocation8 + $0x618] sm:$0xff]
        %v3822 = vld [vmem:[#allocation8 + $0x620] sm:$0xff]
        %v3823 = vld [vmem:[#allocation8 + $0x628] sm:$0xff]
        %v3824 = vld [vmem:[#allocation8 + $0x630] sm:$0xff]
        %v3825 = vld [vmem:[#allocation8 + $0x638] sm:$0xff]
        %v3826 = vld [vmem:[#allocation8 + $0x640] sm:$0xff]
        %v3827 = vld [vmem:[#allocation8 + $0x648] sm:$0xff]
        %v3828 = vld [vmem:[#allocation8 + $0x650] sm:$0xff]
        %v3829 = vld [vmem:[#allocation8 + $0x658] sm:$0xff]
        %v3830 = vld [vmem:[#allocation8 + $0x660] sm:$0xff]
        %v3831 = vld [vmem:[#allocation8 + $0x668] sm:$0xff]
        %v3832 = vld [vmem:[#allocation8 + $0x670] sm:$0xff]
        %v3833 = vld [vmem:[#allocation8 + $0x678] sm:$0xff]
        %v3834 = vld [vmem:[#allocation8 + $0x680] sm:$0xff]
        %v3835 = vld [vmem:[#allocation8 + $0x688] sm:$0xff]
        %v3836 = vld [vmem:[#allocation8 + $0x690] sm:$0xff]
        %v3837 = vld [vmem:[#allocation8 + $0x698] sm:$0xff]
        %v3838 = vld [vmem:[#allocation8 + $0x6a0] sm:$0xff]
        %v3839 = vld [vmem:[#allocation8 + $0x6a8] sm:$0xff]
        %v3840 = vld [vmem:[#allocation8 + $0x6b0] sm:$0xff]
        %v3841 = vld [vmem:[#allocation8 + $0x6b8] sm:$0xff]
        %v3842 = vld [vmem:[#allocation8 + $0x6c0] sm:$0xff]
        %v3843 = vld [vmem:[#allocation8 + $0x6c8] sm:$0xff]
        %v3844 = vld [vmem:[#allocation8 + $0x6d0] sm:$0xff]
        %v3845 = vld [vmem:[#allocation8 + $0x6d8] sm:$0xff]
        %v3846 = vld [vmem:[#allocation8 + $0x6e0] sm:$0xff]
        %v3847 = vld [vmem:[#allocation8 + $0x6e8] sm:$0xff]
        %v3848 = vld [vmem:[#allocation8 + $0x6f0] sm:$0xff]
        %v3849 = vld [vmem:[#allocation8 + $0x6f8] sm:$0xff]
        %v3850 = vld [vmem:[#allocation8 + $0x700] sm:$0xff]
        %v3851 = vld [vmem:[#allocation8 + $0x708] sm:$0xff]
        %v3852 = vld [vmem:[#allocation8 + $0x710] sm:$0xff]
        %v3853 = vld [vmem:[#allocation8 + $0x718] sm:$0xff]
        %v3854 = vld [vmem:[#allocation8 + $0x720] sm:$0xff]
        %v3855 = vld [vmem:[#allocation8 + $0x728] sm:$0xff]
        %v3856 = vld [vmem:[#allocation8 + $0x730] sm:$0xff]
        %v3857 = vld [vmem:[#allocation8 + $0x738] sm:$0xff]
        %v3858 = vld [vmem:[#allocation8 + $0x740] sm:$0xff]
        %v3859 = vld [vmem:[#allocation8 + $0x748] sm:$0xff]
        %v3860 = vld [vmem:[#allocation8 + $0x750] sm:$0xff]
        %v3861 = vld [vmem:[#allocation8 + $0x758] sm:$0xff]
        %v3862 = vld [vmem:[#allocation8 + $0x760] sm:$0xff]
        %v3863 = vld [vmem:[#allocation8 + $0x768] sm:$0xff]
        %v3864 = vld [vmem:[#allocation8 + $0x770] sm:$0xff]
        %v3865 = vld [vmem:[#allocation8 + $0x778] sm:$0xff]
        %v3866 = vld [vmem:[#allocation8 + $0x780] sm:$0xff]
        %v3867 = vld [vmem:[#allocation8 + $0x788] sm:$0xff]
        %v3868 = vld [vmem:[#allocation8 + $0x790] sm:$0xff]
        %v3869 = vld [vmem:[#allocation8 + $0x798] sm:$0xff]
        %v3870 = vld [vmem:[#allocation8 + $0x7a0] sm:$0xff]
        %v3871 = vld [vmem:[#allocation8 + $0x7a8] sm:$0xff]
        %v3872 = vld [vmem:[#allocation8 + $0x7b0] sm:$0xff]
        %v3873 = vld [vmem:[#allocation8 + $0x7b8] sm:$0xff]
        %v3874 = vld [vmem:[#allocation8 + $0x7c0] sm:$0xff]
        %v3875 = vld [vmem:[#allocation8 + $0x7c8] sm:$0xff]
        %v3876 = vld [vmem:[#allocation8 + $0x7d0] sm:$0xff]
        %v3877 = vld [vmem:[#allocation8 + $0x7d8] sm:$0xff]
        %v3878 = vld [vmem:[#allocation8 + $0x7e0] sm:$0xff]
        %v3879 = vld [vmem:[#allocation8 + $0x7e8] sm:$0xff]
        %v3880 = vld [vmem:[#allocation8 + $0x7f0] sm:$0xff]
        %v3881 = vld [vmem:[#allocation8 + $0x7f8] sm:$0xff]
        %v3882 = vld [vmem:[#allocation10] sm:$0xf]
        %v3884 = vlaneseq
        %v3885 = vshrl.u32 %v3884, 7
        %v3886 = vsub.s32 0, %v3885
        %v3887 = vrot.slane %v3882, %v3886
        %v3888 = vlaneseq
        %v3889 = vshrl.u32 %v3888, 7
        %v3890 = vsub.s32 1, %v3889
        %v3891 = vrot.slane %v3882, %v3890
        %v3892 = vlaneseq
        %v3893 = vshrl.u32 %v3892, 7
        %v3894 = vsub.s32 2, %v3893
        %v3895 = vrot.slane %v3882, %v3894
        %v3896 = vlaneseq
        %v3897 = vshrl.u32 %v3896, 7
        %v3898 = vsub.s32 3, %v3897
        %v3899 = vrot.slane %v3882, %v3898
        %v4160 = vunpack.c.l.b16 %v3626
        %v4161 = vunpack.c.h.b16 %v3626
        %v4162 = vunpack.c.l.b16 %v3627
        %v4163 = vunpack.c.h.b16 %v3627
        %v4164 = vunpack.c.l.b16 %v3628
        %v4165 = vunpack.c.h.b16 %v3628
        %v4166 = vunpack.c.l.b16 %v3629
        %v4167 = vunpack.c.h.b16 %v3629
        %v4168 = vunpack.c.l.b16 %v3630
        %v4169 = vunpack.c.h.b16 %v3630
        %v4170 = vunpack.c.l.b16 %v3631
        %v4171 = vunpack.c.h.b16 %v3631
        %v4172 = vunpack.c.l.b16 %v3632
        %v4173 = vunpack.c.h.b16 %v3632
        %v4174 = vunpack.c.l.b16 %v3633
        %v4175 = vunpack.c.h.b16 %v3633
        %v4176 = vunpack.c.l.b16 %v3634
        %v4177 = vunpack.c.h.b16 %v3634
        %v4178 = vunpack.c.l.b16 %v3635
        %v4179 = vunpack.c.h.b16 %v3635
        %v4180 = vunpack.c.l.b16 %v3636
        %v4181 = vunpack.c.h.b16 %v3636
        %v4182 = vunpack.c.l.b16 %v3637
        %v4183 = vunpack.c.h.b16 %v3637
        %v4184 = vunpack.c.l.b16 %v3638
        %v4185 = vunpack.c.h.b16 %v3638
        %v4186 = vunpack.c.l.b16 %v3639
        %v4187 = vunpack.c.h.b16 %v3639
        %v4188 = vunpack.c.l.b16 %v3640
        %v4189 = vunpack.c.h.b16 %v3640
        %v4190 = vunpack.c.l.b16 %v3641
        %v4191 = vunpack.c.h.b16 %v3641
        %v4192 = vunpack.c.l.b16 %v3642
        %v4193 = vunpack.c.h.b16 %v3642
        %v4194 = vunpack.c.l.b16 %v3643
        %v4195 = vunpack.c.h.b16 %v3643
        %v4196 = vunpack.c.l.b16 %v3644
        %v4197 = vunpack.c.h.b16 %v3644
        %v4198 = vunpack.c.l.b16 %v3645
        %v4199 = vunpack.c.h.b16 %v3645
        %v4200 = vunpack.c.l.b16 %v3646
        %v4201 = vunpack.c.h.b16 %v3646
        %v4202 = vunpack.c.l.b16 %v3647
        %v4203 = vunpack.c.h.b16 %v3647
        %v4204 = vunpack.c.l.b16 %v3648
        %v4205 = vunpack.c.h.b16 %v3648
        %v4206 = vunpack.c.l.b16 %v3649
        %v4207 = vunpack.c.h.b16 %v3649
        %v4208 = vunpack.c.l.b16 %v3650
        %v4209 = vunpack.c.h.b16 %v3650
        %v4210 = vunpack.c.l.b16 %v3651
        %v4211 = vunpack.c.h.b16 %v3651
        %v4212 = vunpack.c.l.b16 %v3652
        %v4213 = vunpack.c.h.b16 %v3652
        %v4214 = vunpack.c.l.b16 %v3653
        %v4215 = vunpack.c.h.b16 %v3653
        %v4216 = vunpack.c.l.b16 %v3654
        %v4217 = vunpack.c.h.b16 %v3654
        %v4218 = vunpack.c.l.b16 %v3655
        %v4219 = vunpack.c.h.b16 %v3655
        %v4220 = vunpack.c.l.b16 %v3656
        %v4221 = vunpack.c.h.b16 %v3656
        %v4222 = vunpack.c.l.b16 %v3657
        %v4223 = vunpack.c.h.b16 %v3657
        %v4224 = vunpack.c.l.b16 %v3658
        %v4225 = vunpack.c.h.b16 %v3658
        %v4226 = vunpack.c.l.b16 %v3659
        %v4227 = vunpack.c.h.b16 %v3659
        %v4228 = vunpack.c.l.b16 %v3660
        %v4229 = vunpack.c.h.b16 %v3660
        %v4230 = vunpack.c.l.b16 %v3661
        %v4231 = vunpack.c.h.b16 %v3661
        %v4232 = vunpack.c.l.b16 %v3662
        %v4233 = vunpack.c.h.b16 %v3662
        %v4234 = vunpack.c.l.b16 %v3663
        %v4235 = vunpack.c.h.b16 %v3663
        %v4236 = vunpack.c.l.b16 %v3664
        %v4237 = vunpack.c.h.b16 %v3664
        %v4238 = vunpack.c.l.b16 %v3665
        %v4239 = vunpack.c.h.b16 %v3665
        %v4240 = vunpack.c.l.b16 %v3666
        %v4241 = vunpack.c.h.b16 %v3666
        %v4242 = vunpack.c.l.b16 %v3667
        %v4243 = vunpack.c.h.b16 %v3667
        %v4244 = vunpack.c.l.b16 %v3668
        %v4245 = vunpack.c.h.b16 %v3668
        %v4246 = vunpack.c.l.b16 %v3669
        %v4247 = vunpack.c.h.b16 %v3669
        %v4248 = vunpack.c.l.b16 %v3670
        %v4249 = vunpack.c.h.b16 %v3670
        %v4250 = vunpack.c.l.b16 %v3671
        %v4251 = vunpack.c.h.b16 %v3671
        %v4252 = vunpack.c.l.b16 %v3672
        %v4253 = vunpack.c.h.b16 %v3672
        %v4254 = vunpack.c.l.b16 %v3673
        %v4255 = vunpack.c.h.b16 %v3673
        %v4256 = vunpack.c.l.b16 %v3674
        %v4257 = vunpack.c.h.b16 %v3674
        %v4258 = vunpack.c.l.b16 %v3675
        %v4259 = vunpack.c.h.b16 %v3675
        %v4260 = vunpack.c.l.b16 %v3676
        %v4261 = vunpack.c.h.b16 %v3676
        %v4262 = vunpack.c.l.b16 %v3677
        %v4263 = vunpack.c.h.b16 %v3677
        %v4264 = vunpack.c.l.b16 %v3678
        %v4265 = vunpack.c.h.b16 %v3678
        %v4266 = vunpack.c.l.b16 %v3679
        %v4267 = vunpack.c.h.b16 %v3679
        %v4268 = vunpack.c.l.b16 %v3680
        %v4269 = vunpack.c.h.b16 %v3680
        %v4270 = vunpack.c.l.b16 %v3681
        %v4271 = vunpack.c.h.b16 %v3681
        %v4272 = vunpack.c.l.b16 %v3682
        %v4273 = vunpack.c.h.b16 %v3682
        %v4274 = vunpack.c.l.b16 %v3683
        %v4275 = vunpack.c.h.b16 %v3683
        %v4276 = vunpack.c.l.b16 %v3684
        %v4277 = vunpack.c.h.b16 %v3684
        %v4278 = vunpack.c.l.b16 %v3685
        %v4279 = vunpack.c.h.b16 %v3685
        %v4280 = vunpack.c.l.b16 %v3686
        %v4281 = vunpack.c.h.b16 %v3686
        %v4282 = vunpack.c.l.b16 %v3687
        %v4283 = vunpack.c.h.b16 %v3687
        %v4284 = vunpack.c.l.b16 %v3688
        %v4285 = vunpack.c.h.b16 %v3688
        %v4286 = vunpack.c.l.b16 %v3689
        %v4287 = vunpack.c.h.b16 %v3689
        %v4288 = vunpack.c.l.b16 %v3690
        %v4289 = vunpack.c.h.b16 %v3690
        %v4290 = vunpack.c.l.b16 %v3691
        %v4291 = vunpack.c.h.b16 %v3691
        %v4292 = vunpack.c.l.b16 %v3692
        %v4293 = vunpack.c.h.b16 %v3692
        %v4294 = vunpack.c.l.b16 %v3693
        %v4295 = vunpack.c.h.b16 %v3693
        %v4296 = vunpack.c.l.b16 %v3694
        %v4297 = vunpack.c.h.b16 %v3694
        %v4298 = vunpack.c.l.b16 %v3695
        %v4299 = vunpack.c.h.b16 %v3695
        %v4300 = vunpack.c.l.b16 %v3696
        %v4301 = vunpack.c.h.b16 %v3696
        %v4302 = vunpack.c.l.b16 %v3697
        %v4303 = vunpack.c.h.b16 %v3697
        %v4304 = vunpack.c.l.b16 %v3698
        %v4305 = vunpack.c.h.b16 %v3698
        %v4306 = vunpack.c.l.b16 %v3699
        %v4307 = vunpack.c.h.b16 %v3699
        %v4308 = vunpack.c.l.b16 %v3700
        %v4309 = vunpack.c.h.b16 %v3700
        %v4310 = vunpack.c.l.b16 %v3701
        %v4311 = vunpack.c.h.b16 %v3701
        %v4312 = vunpack.c.l.b16 %v3702
        %v4313 = vunpack.c.h.b16 %v3702
        %v4314 = vunpack.c.l.b16 %v3703
        %v4315 = vunpack.c.h.b16 %v3703
        %v4316 = vunpack.c.l.b16 %v3704
        %v4317 = vunpack.c.h.b16 %v3704
        %v4318 = vunpack.c.l.b16 %v3705
        %v4319 = vunpack.c.h.b16 %v3705
        %v4320 = vunpack.c.l.b16 %v3706
        %v4321 = vunpack.c.h.b16 %v3706
        %v4322 = vunpack.c.l.b16 %v3707
        %v4323 = vunpack.c.h.b16 %v3707
        %v4324 = vunpack.c.l.b16 %v3708
        %v4325 = vunpack.c.h.b16 %v3708
        %v4326 = vunpack.c.l.b16 %v3709
        %v4327 = vunpack.c.h.b16 %v3709
        %v4328 = vunpack.c.l.b16 %v3710
        %v4329 = vunpack.c.h.b16 %v3710
        %v4330 = vunpack.c.l.b16 %v3711
        %v4331 = vunpack.c.h.b16 %v3711
        %v4332 = vunpack.c.l.b16 %v3712
        %v4333 = vunpack.c.h.b16 %v3712
        %v4334 = vunpack.c.l.b16 %v3713
        %v4335 = vunpack.c.h.b16 %v3713
        %v4336 = vunpack.c.l.b16 %v3714
        %v4337 = vunpack.c.h.b16 %v3714
        %v4338 = vunpack.c.l.b16 %v3715
        %v4339 = vunpack.c.h.b16 %v3715
        %v4340 = vunpack.c.l.b16 %v3716
        %v4341 = vunpack.c.h.b16 %v3716
        %v4342 = vunpack.c.l.b16 %v3717
        %v4343 = vunpack.c.h.b16 %v3717
        %v4344 = vunpack.c.l.b16 %v3718
        %v4345 = vunpack.c.h.b16 %v3718
        %v4346 = vunpack.c.l.b16 %v3719
        %v4347 = vunpack.c.h.b16 %v3719
        %v4348 = vunpack.c.l.b16 %v3720
        %v4349 = vunpack.c.h.b16 %v3720
        %v4350 = vunpack.c.l.b16 %v3721
        %v4351 = vunpack.c.h.b16 %v3721
        %v4352 = vunpack.c.l.b16 %v3722
        %v4353 = vunpack.c.h.b16 %v3722
        %v4354 = vunpack.c.l.b16 %v3723
        %v4355 = vunpack.c.h.b16 %v3723
        %v4356 = vunpack.c.l.b16 %v3724
        %v4357 = vunpack.c.h.b16 %v3724
        %v4358 = vunpack.c.l.b16 %v3725
        %v4359 = vunpack.c.h.b16 %v3725
        %v4360 = vunpack.c.l.b16 %v3726
        %v4361 = vunpack.c.h.b16 %v3726
        %v4362 = vunpack.c.l.b16 %v3727
        %v4363 = vunpack.c.h.b16 %v3727
        %v4364 = vunpack.c.l.b16 %v3728
        %v4365 = vunpack.c.h.b16 %v3728
        %v4366 = vunpack.c.l.b16 %v3729
        %v4367 = vunpack.c.h.b16 %v3729
        %v4368 = vunpack.c.l.b16 %v3730
        %v4369 = vunpack.c.h.b16 %v3730
        %v4370 = vunpack.c.l.b16 %v3731
        %v4371 = vunpack.c.h.b16 %v3731
        %v4372 = vunpack.c.l.b16 %v3732
        %v4373 = vunpack.c.h.b16 %v3732
        %v4374 = vunpack.c.l.b16 %v3733
        %v4375 = vunpack.c.h.b16 %v3733
        %v4376 = vunpack.c.l.b16 %v3734
        %v4377 = vunpack.c.h.b16 %v3734
        %v4378 = vunpack.c.l.b16 %v3735
        %v4379 = vunpack.c.h.b16 %v3735
        %v4380 = vunpack.c.l.b16 %v3736
        %v4381 = vunpack.c.h.b16 %v3736
        %v4382 = vunpack.c.l.b16 %v3737
        %v4383 = vunpack.c.h.b16 %v3737
        %v4384 = vunpack.c.l.b16 %v3738
        %v4385 = vunpack.c.h.b16 %v3738
        %v4386 = vunpack.c.l.b16 %v3739
        %v4387 = vunpack.c.h.b16 %v3739
        %v4388 = vunpack.c.l.b16 %v3740
        %v4389 = vunpack.c.h.b16 %v3740
        %v4390 = vunpack.c.l.b16 %v3741
        %v4391 = vunpack.c.h.b16 %v3741
        %v4392 = vunpack.c.l.b16 %v3742
        %v4393 = vunpack.c.h.b16 %v3742
        %v4394 = vunpack.c.l.b16 %v3743
        %v4395 = vunpack.c.h.b16 %v3743
        %v4396 = vunpack.c.l.b16 %v3744
        %v4397 = vunpack.c.h.b16 %v3744
        %v4398 = vunpack.c.l.b16 %v3745
        %v4399 = vunpack.c.h.b16 %v3745
        %v4400 = vunpack.c.l.b16 %v3746
        %v4401 = vunpack.c.h.b16 %v3746
        %v4402 = vunpack.c.l.b16 %v3747
        %v4403 = vunpack.c.h.b16 %v3747
        %v4404 = vunpack.c.l.b16 %v3748
        %v4405 = vunpack.c.h.b16 %v3748
        %v4406 = vunpack.c.l.b16 %v3749
        %v4407 = vunpack.c.h.b16 %v3749
        %v4408 = vunpack.c.l.b16 %v3750
        %v4409 = vunpack.c.h.b16 %v3750
        %v4410 = vunpack.c.l.b16 %v3751
        %v4411 = vunpack.c.h.b16 %v3751
        %v4412 = vunpack.c.l.b16 %v3752
        %v4413 = vunpack.c.h.b16 %v3752
        %v4414 = vunpack.c.l.b16 %v3753
        %v4415 = vunpack.c.h.b16 %v3753
        %v4416 = vunpack.c.l.b16 %v3754
        %v4417 = vunpack.c.h.b16 %v3754
        %v4418 = vunpack.c.l.b16 %v3755
        %v4419 = vunpack.c.h.b16 %v3755
        %v4420 = vunpack.c.l.b16 %v3756
        %v4421 = vunpack.c.h.b16 %v3756
        %v4422 = vunpack.c.l.b16 %v3757
        %v4423 = vunpack.c.h.b16 %v3757
        %v4424 = vunpack.c.l.b16 %v3758
        %v4425 = vunpack.c.h.b16 %v3758
        %v4426 = vunpack.c.l.b16 %v3759
        %v4427 = vunpack.c.h.b16 %v3759
        %v4428 = vunpack.c.l.b16 %v3760
        %v4429 = vunpack.c.h.b16 %v3760
        %v4430 = vunpack.c.l.b16 %v3761
        %v4431 = vunpack.c.h.b16 %v3761
        %v4432 = vunpack.c.l.b16 %v3762
        %v4433 = vunpack.c.h.b16 %v3762
        %v4434 = vunpack.c.l.b16 %v3763
        %v4435 = vunpack.c.h.b16 %v3763
        %v4436 = vunpack.c.l.b16 %v3764
        %v4437 = vunpack.c.h.b16 %v3764
        %v4438 = vunpack.c.l.b16 %v3765
        %v4439 = vunpack.c.h.b16 %v3765
        %v4440 = vunpack.c.l.b16 %v3766
        %v4441 = vunpack.c.h.b16 %v3766
        %v4442 = vunpack.c.l.b16 %v3767
        %v4443 = vunpack.c.h.b16 %v3767
        %v4444 = vunpack.c.l.b16 %v3768
        %v4445 = vunpack.c.h.b16 %v3768
        %v4446 = vunpack.c.l.b16 %v3769
        %v4447 = vunpack.c.h.b16 %v3769
        %v4448 = vunpack.c.l.b16 %v3770
        %v4449 = vunpack.c.h.b16 %v3770
        %v4450 = vunpack.c.l.b16 %v3771
        %v4451 = vunpack.c.h.b16 %v3771
        %v4452 = vunpack.c.l.b16 %v3772
        %v4453 = vunpack.c.h.b16 %v3772
        %v4454 = vunpack.c.l.b16 %v3773
        %v4455 = vunpack.c.h.b16 %v3773
        %v4456 = vunpack.c.l.b16 %v3774
        %v4457 = vunpack.c.h.b16 %v3774
        %v4458 = vunpack.c.l.b16 %v3775
        %v4459 = vunpack.c.h.b16 %v3775
        %v4460 = vunpack.c.l.b16 %v3776
        %v4461 = vunpack.c.h.b16 %v3776
        %v4462 = vunpack.c.l.b16 %v3777
        %v4463 = vunpack.c.h.b16 %v3777
        %v4464 = vunpack.c.l.b16 %v3778
        %v4465 = vunpack.c.h.b16 %v3778
        %v4466 = vunpack.c.l.b16 %v3779
        %v4467 = vunpack.c.h.b16 %v3779
        %v4468 = vunpack.c.l.b16 %v3780
        %v4469 = vunpack.c.h.b16 %v3780
        %v4470 = vunpack.c.l.b16 %v3781
        %v4471 = vunpack.c.h.b16 %v3781
        %v4472 = vunpack.c.l.b16 %v3782
        %v4473 = vunpack.c.h.b16 %v3782
        %v4474 = vunpack.c.l.b16 %v3783
        %v4475 = vunpack.c.h.b16 %v3783
        %v4476 = vunpack.c.l.b16 %v3784
        %v4477 = vunpack.c.h.b16 %v3784
        %v4478 = vunpack.c.l.b16 %v3785
        %v4479 = vunpack.c.h.b16 %v3785
        %v4480 = vunpack.c.l.b16 %v3786
        %v4481 = vunpack.c.h.b16 %v3786
        %v4482 = vunpack.c.l.b16 %v3787
        %v4483 = vunpack.c.h.b16 %v3787
        %v4484 = vunpack.c.l.b16 %v3788
        %v4485 = vunpack.c.h.b16 %v3788
        %v4486 = vunpack.c.l.b16 %v3789
        %v4487 = vunpack.c.h.b16 %v3789
        %v4488 = vunpack.c.l.b16 %v3790
        %v4489 = vunpack.c.h.b16 %v3790
        %v4490 = vunpack.c.l.b16 %v3791
        %v4491 = vunpack.c.h.b16 %v3791
        %v4492 = vunpack.c.l.b16 %v3792
        %v4493 = vunpack.c.h.b16 %v3792
        %v4494 = vunpack.c.l.b16 %v3793
        %v4495 = vunpack.c.h.b16 %v3793
        %v4496 = vunpack.c.l.b16 %v3794
        %v4497 = vunpack.c.h.b16 %v3794
        %v4498 = vunpack.c.l.b16 %v3795
        %v4499 = vunpack.c.h.b16 %v3795
        %v4500 = vunpack.c.l.b16 %v3796
        %v4501 = vunpack.c.h.b16 %v3796
        %v4502 = vunpack.c.l.b16 %v3797
        %v4503 = vunpack.c.h.b16 %v3797
        %v4504 = vunpack.c.l.b16 %v3798
        %v4505 = vunpack.c.h.b16 %v3798
        %v4506 = vunpack.c.l.b16 %v3799
        %v4507 = vunpack.c.h.b16 %v3799
        %v4508 = vunpack.c.l.b16 %v3800
        %v4509 = vunpack.c.h.b16 %v3800
        %v4510 = vunpack.c.l.b16 %v3801
        %v4511 = vunpack.c.h.b16 %v3801
        %v4512 = vunpack.c.l.b16 %v3802
        %v4513 = vunpack.c.h.b16 %v3802
        %v4514 = vunpack.c.l.b16 %v3803
        %v4515 = vunpack.c.h.b16 %v3803
        %v4516 = vunpack.c.l.b16 %v3804
        %v4517 = vunpack.c.h.b16 %v3804
        %v4518 = vunpack.c.l.b16 %v3805
        %v4519 = vunpack.c.h.b16 %v3805
        %v4520 = vunpack.c.l.b16 %v3806
        %v4521 = vunpack.c.h.b16 %v3806
        %v4522 = vunpack.c.l.b16 %v3807
        %v4523 = vunpack.c.h.b16 %v3807
        %v4524 = vunpack.c.l.b16 %v3808
        %v4525 = vunpack.c.h.b16 %v3808
        %v4526 = vunpack.c.l.b16 %v3809
        %v4527 = vunpack.c.h.b16 %v3809
        %v4528 = vunpack.c.l.b16 %v3810
        %v4529 = vunpack.c.h.b16 %v3810
        %v4530 = vunpack.c.l.b16 %v3811
        %v4531 = vunpack.c.h.b16 %v3811
        %v4532 = vunpack.c.l.b16 %v3812
        %v4533 = vunpack.c.h.b16 %v3812
        %v4534 = vunpack.c.l.b16 %v3813
        %v4535 = vunpack.c.h.b16 %v3813
        %v4536 = vunpack.c.l.b16 %v3814
        %v4537 = vunpack.c.h.b16 %v3814
        %v4538 = vunpack.c.l.b16 %v3815
        %v4539 = vunpack.c.h.b16 %v3815
        %v4540 = vunpack.c.l.b16 %v3816
        %v4541 = vunpack.c.h.b16 %v3816
        %v4542 = vunpack.c.l.b16 %v3817
        %v4543 = vunpack.c.h.b16 %v3817
        %v4544 = vunpack.c.l.b16 %v3818
        %v4545 = vunpack.c.h.b16 %v3818
        %v4546 = vunpack.c.l.b16 %v3819
        %v4547 = vunpack.c.h.b16 %v3819
        %v4548 = vunpack.c.l.b16 %v3820
        %v4549 = vunpack.c.h.b16 %v3820
        %v4550 = vunpack.c.l.b16 %v3821
        %v4551 = vunpack.c.h.b16 %v3821
        %v4552 = vunpack.c.l.b16 %v3822
        %v4553 = vunpack.c.h.b16 %v3822
        %v4554 = vunpack.c.l.b16 %v3823
        %v4555 = vunpack.c.h.b16 %v3823
        %v4556 = vunpack.c.l.b16 %v3824
        %v4557 = vunpack.c.h.b16 %v3824
        %v4558 = vunpack.c.l.b16 %v3825
        %v4559 = vunpack.c.h.b16 %v3825
        %v4560 = vunpack.c.l.b16 %v3826
        %v4561 = vunpack.c.h.b16 %v3826
        %v4562 = vunpack.c.l.b16 %v3827
        %v4563 = vunpack.c.h.b16 %v3827
        %v4564 = vunpack.c.l.b16 %v3828
        %v4565 = vunpack.c.h.b16 %v3828
        %v4566 = vunpack.c.l.b16 %v3829
        %v4567 = vunpack.c.h.b16 %v3829
        %v4568 = vunpack.c.l.b16 %v3830
        %v4569 = vunpack.c.h.b16 %v3830
        %v4570 = vunpack.c.l.b16 %v3831
        %v4571 = vunpack.c.h.b16 %v3831
        %v4572 = vunpack.c.l.b16 %v3832
        %v4573 = vunpack.c.h.b16 %v3832
        %v4574 = vunpack.c.l.b16 %v3833
        %v4575 = vunpack.c.h.b16 %v3833
        %v4576 = vunpack.c.l.b16 %v3834
        %v4577 = vunpack.c.h.b16 %v3834
        %v4578 = vunpack.c.l.b16 %v3835
        %v4579 = vunpack.c.h.b16 %v3835
        %v4580 = vunpack.c.l.b16 %v3836
        %v4581 = vunpack.c.h.b16 %v3836
        %v4582 = vunpack.c.l.b16 %v3837
        %v4583 = vunpack.c.h.b16 %v3837
        %v4584 = vunpack.c.l.b16 %v3838
        %v4585 = vunpack.c.h.b16 %v3838
        %v4586 = vunpack.c.l.b16 %v3839
        %v4587 = vunpack.c.h.b16 %v3839
        %v4588 = vunpack.c.l.b16 %v3840
        %v4589 = vunpack.c.h.b16 %v3840
        %v4590 = vunpack.c.l.b16 %v3841
        %v4591 = vunpack.c.h.b16 %v3841
        %v4592 = vunpack.c.l.b16 %v3842
        %v4593 = vunpack.c.h.b16 %v3842
        %v4594 = vunpack.c.l.b16 %v3843
        %v4595 = vunpack.c.h.b16 %v3843
        %v4596 = vunpack.c.l.b16 %v3844
        %v4597 = vunpack.c.h.b16 %v3844
        %v4598 = vunpack.c.l.b16 %v3845
        %v4599 = vunpack.c.h.b16 %v3845
        %v4600 = vunpack.c.l.b16 %v3846
        %v4601 = vunpack.c.h.b16 %v3846
        %v4602 = vunpack.c.l.b16 %v3847
        %v4603 = vunpack.c.h.b16 %v3847
        %v4604 = vunpack.c.l.b16 %v3848
        %v4605 = vunpack.c.h.b16 %v3848
        %v4606 = vunpack.c.l.b16 %v3849
        %v4607 = vunpack.c.h.b16 %v3849
        %v4608 = vunpack.c.l.b16 %v3850
        %v4609 = vunpack.c.h.b16 %v3850
        %v4610 = vunpack.c.l.b16 %v3851
        %v4611 = vunpack.c.h.b16 %v3851
        %v4612 = vunpack.c.l.b16 %v3852
        %v4613 = vunpack.c.h.b16 %v3852
        %v4614 = vunpack.c.l.b16 %v3853
        %v4615 = vunpack.c.h.b16 %v3853
        %v4616 = vunpack.c.l.b16 %v3854
        %v4617 = vunpack.c.h.b16 %v3854
        %v4618 = vunpack.c.l.b16 %v3855
        %v4619 = vunpack.c.h.b16 %v3855
        %v4620 = vunpack.c.l.b16 %v3856
        %v4621 = vunpack.c.h.b16 %v3856
        %v4622 = vunpack.c.l.b16 %v3857
        %v4623 = vunpack.c.h.b16 %v3857
        %v4624 = vunpack.c.l.b16 %v3858
        %v4625 = vunpack.c.h.b16 %v3858
        %v4626 = vunpack.c.l.b16 %v3859
        %v4627 = vunpack.c.h.b16 %v3859
        %v4628 = vunpack.c.l.b16 %v3860
        %v4629 = vunpack.c.h.b16 %v3860
        %v4630 = vunpack.c.l.b16 %v3861
        %v4631 = vunpack.c.h.b16 %v3861
        %v4632 = vunpack.c.l.b16 %v3862
        %v4633 = vunpack.c.h.b16 %v3862
        %v4634 = vunpack.c.l.b16 %v3863
        %v4635 = vunpack.c.h.b16 %v3863
        %v4636 = vunpack.c.l.b16 %v3864
        %v4637 = vunpack.c.h.b16 %v3864
        %v4638 = vunpack.c.l.b16 %v3865
        %v4639 = vunpack.c.h.b16 %v3865
        %v4640 = vunpack.c.l.b16 %v3866
        %v4641 = vunpack.c.h.b16 %v3866
        %v4642 = vunpack.c.l.b16 %v3867
        %v4643 = vunpack.c.h.b16 %v3867
        %v4644 = vunpack.c.l.b16 %v3868
        %v4645 = vunpack.c.h.b16 %v3868
        %v4646 = vunpack.c.l.b16 %v3869
        %v4647 = vunpack.c.h.b16 %v3869
        %v4648 = vunpack.c.l.b16 %v3870
        %v4649 = vunpack.c.h.b16 %v3870
        %v4650 = vunpack.c.l.b16 %v3871
        %v4651 = vunpack.c.h.b16 %v3871
        %v4652 = vunpack.c.l.b16 %v3872
        %v4653 = vunpack.c.h.b16 %v3872
        %v4654 = vunpack.c.l.b16 %v3873
        %v4655 = vunpack.c.h.b16 %v3873
        %v4656 = vunpack.c.l.b16 %v3874
        %v4657 = vunpack.c.h.b16 %v3874
        %v4658 = vunpack.c.l.b16 %v3875
        %v4659 = vunpack.c.h.b16 %v3875
        %v4660 = vunpack.c.l.b16 %v3876
        %v4661 = vunpack.c.h.b16 %v3876
        %v4662 = vunpack.c.l.b16 %v3877
        %v4663 = vunpack.c.h.b16 %v3877
        %v4664 = vunpack.c.l.b16 %v3878
        %v4665 = vunpack.c.h.b16 %v3878
        %v4666 = vunpack.c.l.b16 %v3879
        %v4667 = vunpack.c.h.b16 %v3879
        %v4668 = vunpack.c.l.b16 %v3880
        %v4669 = vunpack.c.h.b16 %v3880
        %v4670 = vunpack.c.l.b16 %v3881
        %v4671 = vunpack.c.h.b16 %v3881
        %v4672 = vpack.c.b16 %v4164, %v4160
        %v4673 = vpack.c.b16 %v4165, %v4161
        %v4674 = vpack.c.b16 %v4166, %v4162
        %v4675 = vpack.c.b16 %v4167, %v4163
        %v4676 = vpack.c.b16 %v4172, %v4168
        %v4677 = vpack.c.b16 %v4173, %v4169
        %v4678 = vpack.c.b16 %v4174, %v4170
        %v4679 = vpack.c.b16 %v4175, %v4171
        %v4680 = vpack.c.b16 %v4180, %v4176
        %v4681 = vpack.c.b16 %v4181, %v4177
        %v4682 = vpack.c.b16 %v4182, %v4178
        %v4683 = vpack.c.b16 %v4183, %v4179
        %v4684 = vpack.c.b16 %v4188, %v4184
        %v4685 = vpack.c.b16 %v4189, %v4185
        %v4686 = vpack.c.b16 %v4190, %v4186
        %v4687 = vpack.c.b16 %v4191, %v4187
        %v4688 = vpack.c.b16 %v4196, %v4192
        %v4689 = vpack.c.b16 %v4197, %v4193
        %v4690 = vpack.c.b16 %v4198, %v4194
        %v4691 = vpack.c.b16 %v4199, %v4195
        %v4692 = vpack.c.b16 %v4204, %v4200
        %v4693 = vpack.c.b16 %v4205, %v4201
        %v4694 = vpack.c.b16 %v4206, %v4202
        %v4695 = vpack.c.b16 %v4207, %v4203
        %v4696 = vpack.c.b16 %v4212, %v4208
        %v4697 = vpack.c.b16 %v4213, %v4209
        %v4698 = vpack.c.b16 %v4214, %v4210
        %v4699 = vpack.c.b16 %v4215, %v4211
        %v4700 = vpack.c.b16 %v4220, %v4216
        %v4701 = vpack.c.b16 %v4221, %v4217
        %v4702 = vpack.c.b16 %v4222, %v4218
        %v4703 = vpack.c.b16 %v4223, %v4219
        %v4704 = vpack.c.b16 %v4228, %v4224
        %v4705 = vpack.c.b16 %v4229, %v4225
        %v4706 = vpack.c.b16 %v4230, %v4226
        %v4707 = vpack.c.b16 %v4231, %v4227
        %v4708 = vpack.c.b16 %v4236, %v4232
        %v4709 = vpack.c.b16 %v4237, %v4233
        %v4710 = vpack.c.b16 %v4238, %v4234
        %v4711 = vpack.c.b16 %v4239, %v4235
        %v4712 = vpack.c.b16 %v4244, %v4240
        %v4713 = vpack.c.b16 %v4245, %v4241
        %v4714 = vpack.c.b16 %v4246, %v4242
        %v4715 = vpack.c.b16 %v4247, %v4243
        %v4716 = vpack.c.b16 %v4252, %v4248
        %v4717 = vpack.c.b16 %v4253, %v4249
        %v4718 = vpack.c.b16 %v4254, %v4250
        %v4719 = vpack.c.b16 %v4255, %v4251
        %v4720 = vpack.c.b16 %v4260, %v4256
        %v4721 = vpack.c.b16 %v4261, %v4257
        %v4722 = vpack.c.b16 %v4262, %v4258
        %v4723 = vpack.c.b16 %v4263, %v4259
        %v4724 = vpack.c.b16 %v4268, %v4264
        %v4725 = vpack.c.b16 %v4269, %v4265
        %v4726 = vpack.c.b16 %v4270, %v4266
        %v4727 = vpack.c.b16 %v4271, %v4267
        %v4728 = vpack.c.b16 %v4276, %v4272
        %v4729 = vpack.c.b16 %v4277, %v4273
        %v4730 = vpack.c.b16 %v4278, %v4274
        %v4731 = vpack.c.b16 %v4279, %v4275
        %v4732 = vpack.c.b16 %v4284, %v4280
        %v4733 = vpack.c.b16 %v4285, %v4281
        %v4734 = vpack.c.b16 %v4286, %v4282
        %v4735 = vpack.c.b16 %v4287, %v4283
        %v4736 = vpack.c.b16 %v4292, %v4288
        %v4737 = vpack.c.b16 %v4293, %v4289
        %v4738 = vpack.c.b16 %v4294, %v4290
        %v4739 = vpack.c.b16 %v4295, %v4291
        %v4740 = vpack.c.b16 %v4300, %v4296
        %v4741 = vpack.c.b16 %v4301, %v4297
        %v4742 = vpack.c.b16 %v4302, %v4298
        %v4743 = vpack.c.b16 %v4303, %v4299
        %v4744 = vpack.c.b16 %v4308, %v4304
        %v4745 = vpack.c.b16 %v4309, %v4305
        %v4746 = vpack.c.b16 %v4310, %v4306
        %v4747 = vpack.c.b16 %v4311, %v4307
        %v4748 = vpack.c.b16 %v4316, %v4312
        %v4749 = vpack.c.b16 %v4317, %v4313
        %v4750 = vpack.c.b16 %v4318, %v4314
        %v4751 = vpack.c.b16 %v4319, %v4315
        %v4752 = vpack.c.b16 %v4324, %v4320
        %v4753 = vpack.c.b16 %v4325, %v4321
        %v4754 = vpack.c.b16 %v4326, %v4322
        %v4755 = vpack.c.b16 %v4327, %v4323
        %v4756 = vpack.c.b16 %v4332, %v4328
        %v4757 = vpack.c.b16 %v4333, %v4329
        %v4758 = vpack.c.b16 %v4334, %v4330
        %v4759 = vpack.c.b16 %v4335, %v4331
        %v4760 = vpack.c.b16 %v4340, %v4336
        %v4761 = vpack.c.b16 %v4341, %v4337
        %v4762 = vpack.c.b16 %v4342, %v4338
        %v4763 = vpack.c.b16 %v4343, %v4339
        %v4764 = vpack.c.b16 %v4348, %v4344
        %v4765 = vpack.c.b16 %v4349, %v4345
        %v4766 = vpack.c.b16 %v4350, %v4346
        %v4767 = vpack.c.b16 %v4351, %v4347
        %v4768 = vpack.c.b16 %v4356, %v4352
        %v4769 = vpack.c.b16 %v4357, %v4353
        %v4770 = vpack.c.b16 %v4358, %v4354
        %v4771 = vpack.c.b16 %v4359, %v4355
        %v4772 = vpack.c.b16 %v4364, %v4360
        %v4773 = vpack.c.b16 %v4365, %v4361
        %v4774 = vpack.c.b16 %v4366, %v4362
        %v4775 = vpack.c.b16 %v4367, %v4363
        %v4776 = vpack.c.b16 %v4372, %v4368
        %v4777 = vpack.c.b16 %v4373, %v4369
        %v4778 = vpack.c.b16 %v4374, %v4370
        %v4779 = vpack.c.b16 %v4375, %v4371
        %v4780 = vpack.c.b16 %v4380, %v4376
        %v4781 = vpack.c.b16 %v4381, %v4377
        %v4782 = vpack.c.b16 %v4382, %v4378
        %v4783 = vpack.c.b16 %v4383, %v4379
        %v4784 = vpack.c.b16 %v4388, %v4384
        %v4785 = vpack.c.b16 %v4389, %v4385
        %v4786 = vpack.c.b16 %v4390, %v4386
        %v4787 = vpack.c.b16 %v4391, %v4387
        %v4788 = vpack.c.b16 %v4396, %v4392
        %v4789 = vpack.c.b16 %v4397, %v4393
        %v4790 = vpack.c.b16 %v4398, %v4394
        %v4791 = vpack.c.b16 %v4399, %v4395
        %v4792 = vpack.c.b16 %v4404, %v4400
        %v4793 = vpack.c.b16 %v4405, %v4401
        %v4794 = vpack.c.b16 %v4406, %v4402
        %v4795 = vpack.c.b16 %v4407, %v4403
        %v4796 = vpack.c.b16 %v4412, %v4408
        %v4797 = vpack.c.b16 %v4413, %v4409
        %v4798 = vpack.c.b16 %v4414, %v4410
        %v4799 = vpack.c.b16 %v4415, %v4411
        %v4800 = vpack.c.b16 %v4420, %v4416
        %v4801 = vpack.c.b16 %v4421, %v4417
        %v4802 = vpack.c.b16 %v4422, %v4418
        %v4803 = vpack.c.b16 %v4423, %v4419
        %v4804 = vpack.c.b16 %v4428, %v4424
        %v4805 = vpack.c.b16 %v4429, %v4425
        %v4806 = vpack.c.b16 %v4430, %v4426
        %v4807 = vpack.c.b16 %v4431, %v4427
        %v4808 = vpack.c.b16 %v4436, %v4432
        %v4809 = vpack.c.b16 %v4437, %v4433
        %v4810 = vpack.c.b16 %v4438, %v4434
        %v4811 = vpack.c.b16 %v4439, %v4435
        %v4812 = vpack.c.b16 %v4444, %v4440
        %v4813 = vpack.c.b16 %v4445, %v4441
        %v4814 = vpack.c.b16 %v4446, %v4442
        %v4815 = vpack.c.b16 %v4447, %v4443
        %v4816 = vpack.c.b16 %v4452, %v4448
        %v4817 = vpack.c.b16 %v4453, %v4449
        %v4818 = vpack.c.b16 %v4454, %v4450
        %v4819 = vpack.c.b16 %v4455, %v4451
        %v4820 = vpack.c.b16 %v4460, %v4456
        %v4821 = vpack.c.b16 %v4461, %v4457
        %v4822 = vpack.c.b16 %v4462, %v4458
        %v4823 = vpack.c.b16 %v4463, %v4459
        %v4824 = vpack.c.b16 %v4468, %v4464
        %v4825 = vpack.c.b16 %v4469, %v4465
        %v4826 = vpack.c.b16 %v4470, %v4466
        %v4827 = vpack.c.b16 %v4471, %v4467
        %v4828 = vpack.c.b16 %v4476, %v4472
        %v4829 = vpack.c.b16 %v4477, %v4473
        %v4830 = vpack.c.b16 %v4478, %v4474
        %v4831 = vpack.c.b16 %v4479, %v4475
        %v4832 = vpack.c.b16 %v4484, %v4480
        %v4833 = vpack.c.b16 %v4485, %v4481
        %v4834 = vpack.c.b16 %v4486, %v4482
        %v4835 = vpack.c.b16 %v4487, %v4483
        %v4836 = vpack.c.b16 %v4492, %v4488
        %v4837 = vpack.c.b16 %v4493, %v4489
        %v4838 = vpack.c.b16 %v4494, %v4490
        %v4839 = vpack.c.b16 %v4495, %v4491
        %v4840 = vpack.c.b16 %v4500, %v4496
        %v4841 = vpack.c.b16 %v4501, %v4497
        %v4842 = vpack.c.b16 %v4502, %v4498
        %v4843 = vpack.c.b16 %v4503, %v4499
        %v4844 = vpack.c.b16 %v4508, %v4504
        %v4845 = vpack.c.b16 %v4509, %v4505
        %v4846 = vpack.c.b16 %v4510, %v4506
        %v4847 = vpack.c.b16 %v4511, %v4507
        %v4848 = vpack.c.b16 %v4516, %v4512
        %v4849 = vpack.c.b16 %v4517, %v4513
        %v4850 = vpack.c.b16 %v4518, %v4514
        %v4851 = vpack.c.b16 %v4519, %v4515
        %v4852 = vpack.c.b16 %v4524, %v4520
        %v4853 = vpack.c.b16 %v4525, %v4521
        %v4854 = vpack.c.b16 %v4526, %v4522
        %v4855 = vpack.c.b16 %v4527, %v4523
        %v4856 = vpack.c.b16 %v4532, %v4528
        %v4857 = vpack.c.b16 %v4533, %v4529
        %v4858 = vpack.c.b16 %v4534, %v4530
        %v4859 = vpack.c.b16 %v4535, %v4531
        %v4860 = vpack.c.b16 %v4540, %v4536
        %v4861 = vpack.c.b16 %v4541, %v4537
        %v4862 = vpack.c.b16 %v4542, %v4538
        %v4863 = vpack.c.b16 %v4543, %v4539
        %v4864 = vpack.c.b16 %v4548, %v4544
        %v4865 = vpack.c.b16 %v4549, %v4545
        %v4866 = vpack.c.b16 %v4550, %v4546
        %v4867 = vpack.c.b16 %v4551, %v4547
        %v4868 = vpack.c.b16 %v4556, %v4552
        %v4869 = vpack.c.b16 %v4557, %v4553
        %v4870 = vpack.c.b16 %v4558, %v4554
        %v4871 = vpack.c.b16 %v4559, %v4555
        %v4872 = vpack.c.b16 %v4564, %v4560
        %v4873 = vpack.c.b16 %v4565, %v4561
        %v4874 = vpack.c.b16 %v4566, %v4562
        %v4875 = vpack.c.b16 %v4567, %v4563
        %v4876 = vpack.c.b16 %v4572, %v4568
        %v4877 = vpack.c.b16 %v4573, %v4569
        %v4878 = vpack.c.b16 %v4574, %v4570
        %v4879 = vpack.c.b16 %v4575, %v4571
        %v4880 = vpack.c.b16 %v4580, %v4576
        %v4881 = vpack.c.b16 %v4581, %v4577
        %v4882 = vpack.c.b16 %v4582, %v4578
        %v4883 = vpack.c.b16 %v4583, %v4579
        %v4884 = vpack.c.b16 %v4588, %v4584
        %v4885 = vpack.c.b16 %v4589, %v4585
        %v4886 = vpack.c.b16 %v4590, %v4586
        %v4887 = vpack.c.b16 %v4591, %v4587
        %v4888 = vpack.c.b16 %v4596, %v4592
        %v4889 = vpack.c.b16 %v4597, %v4593
        %v4890 = vpack.c.b16 %v4598, %v4594
        %v4891 = vpack.c.b16 %v4599, %v4595
        %v4892 = vpack.c.b16 %v4604, %v4600
        %v4893 = vpack.c.b16 %v4605, %v4601
        %v4894 = vpack.c.b16 %v4606, %v4602
        %v4895 = vpack.c.b16 %v4607, %v4603
        %v4896 = vpack.c.b16 %v4612, %v4608
        %v4897 = vpack.c.b16 %v4613, %v4609
        %v4898 = vpack.c.b16 %v4614, %v4610
        %v4899 = vpack.c.b16 %v4615, %v4611
        %v4900 = vpack.c.b16 %v4620, %v4616
        %v4901 = vpack.c.b16 %v4621, %v4617
        %v4902 = vpack.c.b16 %v4622, %v4618
        %v4903 = vpack.c.b16 %v4623, %v4619
        %v4904 = vpack.c.b16 %v4628, %v4624
        %v4905 = vpack.c.b16 %v4629, %v4625
        %v4906 = vpack.c.b16 %v4630, %v4626
        %v4907 = vpack.c.b16 %v4631, %v4627
        %v4908 = vpack.c.b16 %v4636, %v4632
        %v4909 = vpack.c.b16 %v4637, %v4633
        %v4910 = vpack.c.b16 %v4638, %v4634
        %v4911 = vpack.c.b16 %v4639, %v4635
        %v4912 = vpack.c.b16 %v4644, %v4640
        %v4913 = vpack.c.b16 %v4645, %v4641
        %v4914 = vpack.c.b16 %v4646, %v4642
        %v4915 = vpack.c.b16 %v4647, %v4643
        %v4916 = vpack.c.b16 %v4652, %v4648
        %v4917 = vpack.c.b16 %v4653, %v4649
        %v4918 = vpack.c.b16 %v4654, %v4650
        %v4919 = vpack.c.b16 %v4655, %v4651
        %v4920 = vpack.c.b16 %v4660, %v4656
        %v4921 = vpack.c.b16 %v4661, %v4657
        %v4922 = vpack.c.b16 %v4662, %v4658
        %v4923 = vpack.c.b16 %v4663, %v4659
        %v4924 = vpack.c.b16 %v4668, %v4664
        %v4925 = vpack.c.b16 %v4669, %v4665
        %v4926 = vpack.c.b16 %v4670, %v4666
        %v4927 = vpack.c.b16 %v4671, %v4667
        %5184 = vmatprep.subr.bf16.mxu0 %v4701
        %5185 = vmatpush1.bf16.msra.mxu0 %v4700
        %5186 = vmatprep.subr.bf16.mxu0 %v4697
        %5187 = vmatpush1.bf16.msra.mxu0 %v4696
        %5188 = vmatprep.subr.bf16.mxu0 %v4693
        %5189 = vmatpush1.bf16.msra.mxu0 %v4692
        %5190 = vmatprep.subr.bf16.mxu0 %v4689
        %5191 = vmatpush1.bf16.msra.mxu0 %v4688
        %5192 = vmatprep.subr.bf16.mxu0 %v4685
        %5193 = vmatpush1.bf16.msra.mxu0 %v4684
        %5194 = vmatprep.subr.bf16.mxu0 %v4681
        %5195 = vmatpush1.bf16.msra.mxu0 %v4680
        %5196 = vmatprep.subr.bf16.mxu0 %v4677
        %5197 = vmatpush1.bf16.msra.mxu0 %v4676
        %5198 = vmatprep.subr.bf16.mxu0 %v4673
        %5199 = vmatpush1.bf16.msra.mxu0 %v4672
        %5200 = vmatprep.subr.bf16.mxu0 %v4733
        %5201 = vmatpush2.bf16.msra.mxu0 %v4732
        %5202 = vmatprep.subr.bf16.mxu0 %v4729
        %5203 = vmatpush2.bf16.msra.mxu0 %v4728
        %5204 = vmatprep.subr.bf16.mxu0 %v4725
        %5205 = vmatpush2.bf16.msra.mxu0 %v4724
        %5206 = vmatprep.subr.bf16.mxu0 %v4721
        %5207 = vmatpush2.bf16.msra.mxu0 %v4720
        %5208 = vmatprep.subr.bf16.mxu0 %v4717
        %5209 = vmatpush2.bf16.msra.mxu0 %v4716
        %5210 = vmatprep.subr.bf16.mxu0 %v4713
        %5211 = vmatpush2.bf16.msra.mxu0 %v4712
        %5212 = vmatprep.subr.bf16.mxu0 %v4709
        %5213 = vmatpush2.bf16.msra.mxu0 %v4708
        %5214 = vmatprep.subr.bf16.mxu0 %v4705
        %5215 = vmatpush2.bf16.msra.mxu0 %v4704
        %5216 = vmatprep.mubr.bf16.mxu0 %v3619
        %5217 = vmatmul.mubr.bf16.gmra.mxu0 %v3618
        %v5218 = vpop.f32.mrf.mxu0
        %v5219 = vadd.f32 %v3887, %v5218
        %v5220 = vpop.f32.mrf.mxu0
        %v5221 = vadd.f32 %v3891, %v5220
        %v5222 = vpop.f32.mrf.mxu0
        %v5223 = vadd.f32 %v3887, %v5222
        %v5224 = vpop.f32.mrf.mxu0
        %v5225 = vadd.f32 %v3891, %v5224
        %5226 = vdwg.mxu0
        %5227 = vmatprep.subr.bf16.mxu0 %v4765
        %5228 = vmatpush1.bf16.msra.mxu0 %v4764
        %5229 = vmatprep.subr.bf16.mxu0 %v4761
        %5230 = vmatpush1.bf16.msra.mxu0 %v4760
        %5231 = vmatprep.subr.bf16.mxu0 %v4757
        %5232 = vmatpush1.bf16.msra.mxu0 %v4756
        %5233 = vmatprep.subr.bf16.mxu0 %v4753
        %5234 = vmatpush1.bf16.msra.mxu0 %v4752
        %5235 = vmatprep.subr.bf16.mxu0 %v4749
        %5236 = vmatpush1.bf16.msra.mxu0 %v4748
        %5237 = vmatprep.subr.bf16.mxu0 %v4745
        %5238 = vmatpush1.bf16.msra.mxu0 %v4744
        %5239 = vmatprep.subr.bf16.mxu0 %v4741
        %5240 = vmatpush1.bf16.msra.mxu0 %v4740
        %5241 = vmatprep.subr.bf16.mxu0 %v4737
        %5242 = vmatpush1.bf16.msra.mxu0 %v4736
        %5243 = vmatprep.subr.bf16.mxu0 %v4797
        %5244 = vmatpush2.bf16.msra.mxu0 %v4796
        %5245 = vmatprep.subr.bf16.mxu0 %v4793
        %5246 = vmatpush2.bf16.msra.mxu0 %v4792
        %5247 = vmatprep.subr.bf16.mxu0 %v4789
        %5248 = vmatpush2.bf16.msra.mxu0 %v4788
        %5249 = vmatprep.subr.bf16.mxu0 %v4785
        %5250 = vmatpush2.bf16.msra.mxu0 %v4784
        %5251 = vmatprep.subr.bf16.mxu0 %v4781
        %5252 = vmatpush2.bf16.msra.mxu0 %v4780
        %5253 = vmatprep.subr.bf16.mxu0 %v4777
        %5254 = vmatpush2.bf16.msra.mxu0 %v4776
        %5255 = vmatprep.subr.bf16.mxu0 %v4773
        %5256 = vmatpush2.bf16.msra.mxu0 %v4772
        %5257 = vmatprep.subr.bf16.mxu0 %v4769
        %5258 = vmatpush2.bf16.msra.mxu0 %v4768
        %5259 = vmatprep.mubr.bf16.mxu0 %v3621
        %5260 = vmatmul.mubr.bf16.gmra.mxu0 %v3620
        %v5261 = vpop.f32.mrf.mxu0
        %v5262 = vadd.f32 %v5219, %v5261
        %v5263 = vpop.f32.mrf.mxu0
        %v5264 = vadd.f32 %v5221, %v5263
        %v5265 = vpop.f32.mrf.mxu0
        %v5266 = vadd.f32 %v5223, %v5265
        %v5267 = vpop.f32.mrf.mxu0
        %v5268 = vadd.f32 %v5225, %v5267
        %5269 = vdwg.mxu0
        %5270 = vmatprep.subr.bf16.mxu0 %v4829
        %5271 = vmatpush1.bf16.msra.mxu0 %v4828
        %5272 = vmatprep.subr.bf16.mxu0 %v4825
        %5273 = vmatpush1.bf16.msra.mxu0 %v4824
        %5274 = vmatprep.subr.bf16.mxu0 %v4821
        %5275 = vmatpush1.bf16.msra.mxu0 %v4820
        %5276 = vmatprep.subr.bf16.mxu0 %v4817
        %5277 = vmatpush1.bf16.msra.mxu0 %v4816
        %5278 = vmatprep.subr.bf16.mxu0 %v4813
        %5279 = vmatpush1.bf16.msra.mxu0 %v4812
        %5280 = vmatprep.subr.bf16.mxu0 %v4809
        %5281 = vmatpush1.bf16.msra.mxu0 %v4808
        %5282 = vmatprep.subr.bf16.mxu0 %v4805
        %5283 = vmatpush1.bf16.msra.mxu0 %v4804
        %5284 = vmatprep.subr.bf16.mxu0 %v4801
        %5285 = vmatpush1.bf16.msra.mxu0 %v4800
        %5286 = vmatprep.subr.bf16.mxu0 %v4861
        %5287 = vmatpush2.bf16.msra.mxu0 %v4860
        %5288 = vmatprep.subr.bf16.mxu0 %v4857
        %5289 = vmatpush2.bf16.msra.mxu0 %v4856
        %5290 = vmatprep.subr.bf16.mxu0 %v4853
        %5291 = vmatpush2.bf16.msra.mxu0 %v4852
        %5292 = vmatprep.subr.bf16.mxu0 %v4849
        %5293 = vmatpush2.bf16.msra.mxu0 %v4848
        %5294 = vmatprep.subr.bf16.mxu0 %v4845
        %5295 = vmatpush2.bf16.msra.mxu0 %v4844
        %5296 = vmatprep.subr.bf16.mxu0 %v4841
        %5297 = vmatpush2.bf16.msra.mxu0 %v4840
        %5298 = vmatprep.subr.bf16.mxu0 %v4837
        %5299 = vmatpush2.bf16.msra.mxu0 %v4836
        %5300 = vmatprep.subr.bf16.mxu0 %v4833
        %5301 = vmatpush2.bf16.msra.mxu0 %v4832
        %5302 = vmatprep.mubr.bf16.mxu0 %v3623
        %5303 = vmatmul.mubr.bf16.gmra.mxu0 %v3622
        %v5304 = vpop.f32.mrf.mxu0
        %v5305 = vadd.f32 %v5262, %v5304
        %v5306 = vpop.f32.mrf.mxu0
        %v5307 = vadd.f32 %v5264, %v5306
        %v5308 = vpop.f32.mrf.mxu0
        %v5309 = vadd.f32 %v5266, %v5308
        %v5310 = vpop.f32.mrf.mxu0
        %v5311 = vadd.f32 %v5268, %v5310
        %5312 = vdwg.mxu0
        %5313 = vmatprep.subr.bf16.mxu0 %v4893
        %5314 = vmatpush1.bf16.msra.mxu0 %v4892
        %5315 = vmatprep.subr.bf16.mxu0 %v4889
        %5316 = vmatpush1.bf16.msra.mxu0 %v4888
        %5317 = vmatprep.subr.bf16.mxu0 %v4885
        %5318 = vmatpush1.bf16.msra.mxu0 %v4884
        %5319 = vmatprep.subr.bf16.mxu0 %v4881
        %5320 = vmatpush1.bf16.msra.mxu0 %v4880
        %5321 = vmatprep.subr.bf16.mxu0 %v4877
        %5322 = vmatpush1.bf16.msra.mxu0 %v4876
        %5323 = vmatprep.subr.bf16.mxu0 %v4873
        %5324 = vmatpush1.bf16.msra.mxu0 %v4872
        %5325 = vmatprep.subr.bf16.mxu0 %v4869
        %5326 = vmatpush1.bf16.msra.mxu0 %v4868
        %5327 = vmatprep.subr.bf16.mxu0 %v4865
        %5328 = vmatpush1.bf16.msra.mxu0 %v4864
        %5329 = vmatprep.subr.bf16.mxu0 %v4925
        %5330 = vmatpush2.bf16.msra.mxu0 %v4924
        %5331 = vmatprep.subr.bf16.mxu0 %v4921
        %5332 = vmatpush2.bf16.msra.mxu0 %v4920
        %5333 = vmatprep.subr.bf16.mxu0 %v4917
        %5334 = vmatpush2.bf16.msra.mxu0 %v4916
        %5335 = vmatprep.subr.bf16.mxu0 %v4913
        %5336 = vmatpush2.bf16.msra.mxu0 %v4912
        %5337 = vmatprep.subr.bf16.mxu0 %v4909
        %5338 = vmatpush2.bf16.msra.mxu0 %v4908
        %5339 = vmatprep.subr.bf16.mxu0 %v4905
        %5340 = vmatpush2.bf16.msra.mxu0 %v4904
        %5341 = vmatprep.subr.bf16.mxu0 %v4901
        %5342 = vmatpush2.bf16.msra.mxu0 %v4900
        %5343 = vmatprep.subr.bf16.mxu0 %v4897
        %5344 = vmatpush2.bf16.msra.mxu0 %v4896
        %5345 = vmatprep.mubr.bf16.mxu0 %v3625
        %5346 = vmatmul.mubr.bf16.gmra.mxu0 %v3624
        %v5347 = vpop.f32.mrf.mxu0
        %v5348 = vadd.f32 %v5305, %v5347
        %v5349 = vpop.f32.mrf.mxu0
        %v5350 = vadd.f32 %v5307, %v5349
        %v5351 = vpop.f32.mrf.mxu0
        %v5352 = vadd.f32 %v5309, %v5351
        %v5353 = vpop.f32.mrf.mxu0
        %v5354 = vadd.f32 %v5311, %v5353
        %5355 = vdwg.mxu0
        %5356 = vmatprep.subr.bf16.mxu0 %v4703
        %5357 = vmatpush1.bf16.msra.mxu0 %v4702
        %5358 = vmatprep.subr.bf16.mxu0 %v4699
        %5359 = vmatpush1.bf16.msra.mxu0 %v4698
        %5360 = vmatprep.subr.bf16.mxu0 %v4695
        %5361 = vmatpush1.bf16.msra.mxu0 %v4694
        %5362 = vmatprep.subr.bf16.mxu0 %v4691
        %5363 = vmatpush1.bf16.msra.mxu0 %v4690
        %5364 = vmatprep.subr.bf16.mxu0 %v4687
        %5365 = vmatpush1.bf16.msra.mxu0 %v4686
        %5366 = vmatprep.subr.bf16.mxu0 %v4683
        %5367 = vmatpush1.bf16.msra.mxu0 %v4682
        %5368 = vmatprep.subr.bf16.mxu0 %v4679
        %5369 = vmatpush1.bf16.msra.mxu0 %v4678
        %5370 = vmatprep.subr.bf16.mxu0 %v4675
        %5371 = vmatpush1.bf16.msra.mxu0 %v4674
        %5372 = vmatprep.subr.bf16.mxu0 %v4735
        %5373 = vmatpush2.bf16.msra.mxu0 %v4734
        %5374 = vmatprep.subr.bf16.mxu0 %v4731
        %5375 = vmatpush2.bf16.msra.mxu0 %v4730
        %5376 = vmatprep.subr.bf16.mxu0 %v4727
        %5377 = vmatpush2.bf16.msra.mxu0 %v4726
        %5378 = vmatprep.subr.bf16.mxu0 %v4723
        %5379 = vmatpush2.bf16.msra.mxu0 %v4722
        %5380 = vmatprep.subr.bf16.mxu0 %v4719
        %5381 = vmatpush2.bf16.msra.mxu0 %v4718
        %5382 = vmatprep.subr.bf16.mxu0 %v4715
        %5383 = vmatpush2.bf16.msra.mxu0 %v4714
        %5384 = vmatprep.subr.bf16.mxu0 %v4711
        %5385 = vmatpush2.bf16.msra.mxu0 %v4710
        %5386 = vmatprep.subr.bf16.mxu0 %v4707
        %5387 = vmatpush2.bf16.msra.mxu0 %v4706
        %5388 = vmatprep.mubr.bf16.mxu0 %v3619
        %5389 = vmatmul.mubr.bf16.gmra.mxu0 %v3618
        %v5390 = vpop.f32.mrf.mxu0
        %v5391 = vadd.f32 %v3895, %v5390
        %v5392 = vpop.f32.mrf.mxu0
        %v5393 = vadd.f32 %v3899, %v5392
        %v5394 = vpop.f32.mrf.mxu0
        %v5395 = vadd.f32 %v3895, %v5394
        %v5396 = vpop.f32.mrf.mxu0
        %v5397 = vadd.f32 %v3899, %v5396
        %5398 = vdwg.mxu0
        %5399 = vmatprep.subr.bf16.mxu0 %v4767
        %5400 = vmatpush1.bf16.msra.mxu0 %v4766
        %5401 = vmatprep.subr.bf16.mxu0 %v4763
        %5402 = vmatpush1.bf16.msra.mxu0 %v4762
        %5403 = vmatprep.subr.bf16.mxu0 %v4759
        %5404 = vmatpush1.bf16.msra.mxu0 %v4758
        %5405 = vmatprep.subr.bf16.mxu0 %v4755
        %5406 = vmatpush1.bf16.msra.mxu0 %v4754
        %5407 = vmatprep.subr.bf16.mxu0 %v4751
        %5408 = vmatpush1.bf16.msra.mxu0 %v4750
        %5409 = vmatprep.subr.bf16.mxu0 %v4747
        %5410 = vmatpush1.bf16.msra.mxu0 %v4746
        %5411 = vmatprep.subr.bf16.mxu0 %v4743
        %5412 = vmatpush1.bf16.msra.mxu0 %v4742
        %5413 = vmatprep.subr.bf16.mxu0 %v4739
        %5414 = vmatpush1.bf16.msra.mxu0 %v4738
        %5415 = vmatprep.subr.bf16.mxu0 %v4799
        %5416 = vmatpush2.bf16.msra.mxu0 %v4798
        %5417 = vmatprep.subr.bf16.mxu0 %v4795
        %5418 = vmatpush2.bf16.msra.mxu0 %v4794
        %5419 = vmatprep.subr.bf16.mxu0 %v4791
        %5420 = vmatpush2.bf16.msra.mxu0 %v4790
        %5421 = vmatprep.subr.bf16.mxu0 %v4787
        %5422 = vmatpush2.bf16.msra.mxu0 %v4786
        %5423 = vmatprep.subr.bf16.mxu0 %v4783
        %5424 = vmatpush2.bf16.msra.mxu0 %v4782
        %5425 = vmatprep.subr.bf16.mxu0 %v4779
        %5426 = vmatpush2.bf16.msra.mxu0 %v4778
        %5427 = vmatprep.subr.bf16.mxu0 %v4775
        %5428 = vmatpush2.bf16.msra.mxu0 %v4774
        %5429 = vmatprep.subr.bf16.mxu0 %v4771
        %5430 = vmatpush2.bf16.msra.mxu0 %v4770
        %5431 = vmatprep.mubr.bf16.mxu0 %v3621
        %5432 = vmatmul.mubr.bf16.gmra.mxu0 %v3620
        %v5433 = vpop.f32.mrf.mxu0
        %v5434 = vadd.f32 %v5391, %v5433
        %v5435 = vpop.f32.mrf.mxu0
        %v5436 = vadd.f32 %v5393, %v5435
        %v5437 = vpop.f32.mrf.mxu0
        %v5438 = vadd.f32 %v5395, %v5437
        %v5439 = vpop.f32.mrf.mxu0
        %v5440 = vadd.f32 %v5397, %v5439
        %5441 = vdwg.mxu0
        %5442 = vmatprep.subr.bf16.mxu0 %v4831
        %5443 = vmatpush1.bf16.msra.mxu0 %v4830
        %5444 = vmatprep.subr.bf16.mxu0 %v4827
        %5445 = vmatpush1.bf16.msra.mxu0 %v4826
        %5446 = vmatprep.subr.bf16.mxu0 %v4823
        %5447 = vmatpush1.bf16.msra.mxu0 %v4822
        %5448 = vmatprep.subr.bf16.mxu0 %v4819
        %5449 = vmatpush1.bf16.msra.mxu0 %v4818
        %5450 = vmatprep.subr.bf16.mxu0 %v4815
        %5451 = vmatpush1.bf16.msra.mxu0 %v4814
        %5452 = vmatprep.subr.bf16.mxu0 %v4811
        %5453 = vmatpush1.bf16.msra.mxu0 %v4810
        %5454 = vmatprep.subr.bf16.mxu0 %v4807
        %5455 = vmatpush1.bf16.msra.mxu0 %v4806
        %5456 = vmatprep.subr.bf16.mxu0 %v4803
        %5457 = vmatpush1.bf16.msra.mxu0 %v4802
        %5458 = vmatprep.subr.bf16.mxu0 %v4863
        %5459 = vmatpush2.bf16.msra.mxu0 %v4862
        %5460 = vmatprep.subr.bf16.mxu0 %v4859
        %5461 = vmatpush2.bf16.msra.mxu0 %v4858
        %5462 = vmatprep.subr.bf16.mxu0 %v4855
        %5463 = vmatpush2.bf16.msra.mxu0 %v4854
        %5464 = vmatprep.subr.bf16.mxu0 %v4851
        %5465 = vmatpush2.bf16.msra.mxu0 %v4850
        %5466 = vmatprep.subr.bf16.mxu0 %v4847
        %5467 = vmatpush2.bf16.msra.mxu0 %v4846
        %5468 = vmatprep.subr.bf16.mxu0 %v4843
        %5469 = vmatpush2.bf16.msra.mxu0 %v4842
        %5470 = vmatprep.subr.bf16.mxu0 %v4839
        %5471 = vmatpush2.bf16.msra.mxu0 %v4838
        %5472 = vmatprep.subr.bf16.mxu0 %v4835
        %5473 = vmatpush2.bf16.msra.mxu0 %v4834
        %5474 = vmatprep.mubr.bf16.mxu0 %v3623
        %5475 = vmatmul.mubr.bf16.gmra.mxu0 %v3622
        %v5476 = vpop.f32.mrf.mxu0
        %v5477 = vadd.f32 %v5434, %v5476
        %v5478 = vpop.f32.mrf.mxu0
        %v5479 = vadd.f32 %v5436, %v5478
        %v5480 = vpop.f32.mrf.mxu0
        %v5481 = vadd.f32 %v5438, %v5480
        %v5482 = vpop.f32.mrf.mxu0
        %v5483 = vadd.f32 %v5440, %v5482
        %5484 = vdwg.mxu0
        %5485 = vmatprep.subr.bf16.mxu0 %v4895
        %5486 = vmatpush1.bf16.msra.mxu0 %v4894
        %5487 = vmatprep.subr.bf16.mxu0 %v4891
        %5488 = vmatpush1.bf16.msra.mxu0 %v4890
        %5489 = vmatprep.subr.bf16.mxu0 %v4887
        %5490 = vmatpush1.bf16.msra.mxu0 %v4886
        %5491 = vmatprep.subr.bf16.mxu0 %v4883
        %5492 = vmatpush1.bf16.msra.mxu0 %v4882
        %5493 = vmatprep.subr.bf16.mxu0 %v4879
        %5494 = vmatpush1.bf16.msra.mxu0 %v4878
        %5495 = vmatprep.subr.bf16.mxu0 %v4875
        %5496 = vmatpush1.bf16.msra.mxu0 %v4874
        %5497 = vmatprep.subr.bf16.mxu0 %v4871
        %5498 = vmatpush1.bf16.msra.mxu0 %v4870
        %5499 = vmatprep.subr.bf16.mxu0 %v4867
        %5500 = vmatpush1.bf16.msra.mxu0 %v4866
        %5501 = vmatprep.subr.bf16.mxu0 %v4927
        %5502 = vmatpush2.bf16.msra.mxu0 %v4926
        %5503 = vmatprep.subr.bf16.mxu0 %v4923
        %5504 = vmatpush2.bf16.msra.mxu0 %v4922
        %5505 = vmatprep.subr.bf16.mxu0 %v4919
        %5506 = vmatpush2.bf16.msra.mxu0 %v4918
        %5507 = vmatprep.subr.bf16.mxu0 %v4915
        %5508 = vmatpush2.bf16.msra.mxu0 %v4914
        %5509 = vmatprep.subr.bf16.mxu0 %v4911
        %5510 = vmatpush2.bf16.msra.mxu0 %v4910
        %5511 = vmatprep.subr.bf16.mxu0 %v4907
        %5512 = vmatpush2.bf16.msra.mxu0 %v4906
        %5513 = vmatprep.subr.bf16.mxu0 %v4903
        %5514 = vmatpush2.bf16.msra.mxu0 %v4902
        %5515 = vmatprep.subr.bf16.mxu0 %v4899
        %5516 = vmatpush2.bf16.msra.mxu0 %v4898
        %5517 = vmatprep.mubr.bf16.mxu0 %v3625
        %5518 = vmatmul.mubr.bf16.gmra.mxu0 %v3624
        %v5519 = vpop.f32.mrf.mxu0
        %v5520 = vadd.f32 %v5477, %v5519
        %v5521 = vpop.f32.mrf.mxu0
        %v5522 = vadd.f32 %v5479, %v5521
        %v5523 = vpop.f32.mrf.mxu0
        %v5524 = vadd.f32 %v5481, %v5523
        %v5525 = vpop.f32.mrf.mxu0
        %v5526 = vadd.f32 %v5483, %v5525
        %5527 = vdwg.mxu0
        %vm5528 = vcmp.gt.f32.partialorder %v5348, 0.0
        %vm5529 = vcmp.gt.f32.partialorder %v5350, 0.0
        %vm5530 = vcmp.gt.f32.partialorder %v5520, 0.0
        %vm5531 = vcmp.gt.f32.partialorder %v5522, 0.0
        %vm5532 = vcmp.gt.f32.partialorder %v5352, 0.0
        %vm5533 = vcmp.gt.f32.partialorder %v5354, 0.0
        %vm5534 = vcmp.gt.f32.partialorder %v5524, 0.0
        %vm5535 = vcmp.gt.f32.partialorder %v5526, 0.0
        %v5536 = vmul.f32 %v5348, 0.2
        %v5537 = vmul.f32 %v5350, 0.2
        %v5538 = vmul.f32 %v5520, 0.2
        %v5539 = vmul.f32 %v5522, 0.2
        %v5540 = vmul.f32 %v5352, 0.2
        %v5541 = vmul.f32 %v5354, 0.2
        %v5542 = vmul.f32 %v5524, 0.2
        %v5543 = vmul.f32 %v5526, 0.2
        %v5544 = vsel %vm5528, %v5348, %v5536
        %v5545 = vsel %vm5529, %v5350, %v5537
        %v5546 = vsel %vm5530, %v5520, %v5538
        %v5547 = vsel %vm5531, %v5522, %v5539
        %v5548 = vsel %vm5532, %v5352, %v5540
        %v5549 = vsel %vm5533, %v5354, %v5541
        %v5550 = vsel %vm5534, %v5524, %v5542
        %v5551 = vsel %vm5535, %v5526, %v5543
        %v5552 = vpack.c.bf16 %v5548, %v5544
        %v5553 = vpack.c.bf16 %v5549, %v5545
        %v5554 = vpack.c.bf16 %v5550, %v5546
        %v5555 = vpack.c.bf16 %v5551, %v5547
        %v5556 = vld [vmem:[#allocation11] sm:$0xff]
        %v5557 = vld [vmem:[#allocation11 + $0x8] sm:$0xff]
        %v5558 = vld [vmem:[#allocation11 + $0x10] sm:$0xff]
        %v5559 = vld [vmem:[#allocation11 + $0x18] sm:$0xff]
        %v5560 = vld [vmem:[#allocation11 + $0x20] sm:$0xff]
        %v5561 = vld [vmem:[#allocation11 + $0x28] sm:$0xff]
        %v5562 = vld [vmem:[#allocation11 + $0x30] sm:$0xff]
        %v5563 = vld [vmem:[#allocation11 + $0x38] sm:$0xff]
        %v5564 = vld [vmem:[#allocation11 + $0x40] sm:$0xff]
        %v5565 = vld [vmem:[#allocation11 + $0x48] sm:$0xff]
        %v5566 = vld [vmem:[#allocation11 + $0x50] sm:$0xff]
        %v5567 = vld [vmem:[#allocation11 + $0x58] sm:$0xff]
        %v5568 = vld [vmem:[#allocation11 + $0x60] sm:$0xff]
        %v5569 = vld [vmem:[#allocation11 + $0x68] sm:$0xff]
        %v5570 = vld [vmem:[#allocation11 + $0x70] sm:$0xff]
        %v5571 = vld [vmem:[#allocation11 + $0x78] sm:$0xff]
        %v5572 = vld [vmem:[#allocation11 + $0x80] sm:$0xff]
        %v5573 = vld [vmem:[#allocation11 + $0x88] sm:$0xff]
        %v5574 = vld [vmem:[#allocation11 + $0x90] sm:$0xff]
        %v5575 = vld [vmem:[#allocation11 + $0x98] sm:$0xff]
        %v5576 = vld [vmem:[#allocation11 + $0xa0] sm:$0xff]
        %v5577 = vld [vmem:[#allocation11 + $0xa8] sm:$0xff]
        %v5578 = vld [vmem:[#allocation11 + $0xb0] sm:$0xff]
        %v5579 = vld [vmem:[#allocation11 + $0xb8] sm:$0xff]
        %v5580 = vld [vmem:[#allocation11 + $0xc0] sm:$0xff]
        %v5581 = vld [vmem:[#allocation11 + $0xc8] sm:$0xff]
        %v5582 = vld [vmem:[#allocation11 + $0xd0] sm:$0xff]
        %v5583 = vld [vmem:[#allocation11 + $0xd8] sm:$0xff]
        %v5584 = vld [vmem:[#allocation11 + $0xe0] sm:$0xff]
        %v5585 = vld [vmem:[#allocation11 + $0xe8] sm:$0xff]
        %v5586 = vld [vmem:[#allocation11 + $0xf0] sm:$0xff]
        %v5587 = vld [vmem:[#allocation11 + $0xf8] sm:$0xff]
        %v5588 = vld [vmem:[#allocation11 + $0x100] sm:$0xff]
        %v5589 = vld [vmem:[#allocation11 + $0x108] sm:$0xff]
        %v5590 = vld [vmem:[#allocation11 + $0x110] sm:$0xff]
        %v5591 = vld [vmem:[#allocation11 + $0x118] sm:$0xff]
        %v5592 = vld [vmem:[#allocation11 + $0x120] sm:$0xff]
        %v5593 = vld [vmem:[#allocation11 + $0x128] sm:$0xff]
        %v5594 = vld [vmem:[#allocation11 + $0x130] sm:$0xff]
        %v5595 = vld [vmem:[#allocation11 + $0x138] sm:$0xff]
        %v5596 = vld [vmem:[#allocation11 + $0x140] sm:$0xff]
        %v5597 = vld [vmem:[#allocation11 + $0x148] sm:$0xff]
        %v5598 = vld [vmem:[#allocation11 + $0x150] sm:$0xff]
        %v5599 = vld [vmem:[#allocation11 + $0x158] sm:$0xff]
        %v5600 = vld [vmem:[#allocation11 + $0x160] sm:$0xff]
        %v5601 = vld [vmem:[#allocation11 + $0x168] sm:$0xff]
        %v5602 = vld [vmem:[#allocation11 + $0x170] sm:$0xff]
        %v5603 = vld [vmem:[#allocation11 + $0x178] sm:$0xff]
        %v5604 = vld [vmem:[#allocation11 + $0x180] sm:$0xff]
        %v5605 = vld [vmem:[#allocation11 + $0x188] sm:$0xff]
        %v5606 = vld [vmem:[#allocation11 + $0x190] sm:$0xff]
        %v5607 = vld [vmem:[#allocation11 + $0x198] sm:$0xff]
        %v5608 = vld [vmem:[#allocation11 + $0x1a0] sm:$0xff]
        %v5609 = vld [vmem:[#allocation11 + $0x1a8] sm:$0xff]
        %v5610 = vld [vmem:[#allocation11 + $0x1b0] sm:$0xff]
        %v5611 = vld [vmem:[#allocation11 + $0x1b8] sm:$0xff]
        %v5612 = vld [vmem:[#allocation11 + $0x1c0] sm:$0xff]
        %v5613 = vld [vmem:[#allocation11 + $0x1c8] sm:$0xff]
        %v5614 = vld [vmem:[#allocation11 + $0x1d0] sm:$0xff]
        %v5615 = vld [vmem:[#allocation11 + $0x1d8] sm:$0xff]
        %v5616 = vld [vmem:[#allocation11 + $0x1e0] sm:$0xff]
        %v5617 = vld [vmem:[#allocation11 + $0x1e8] sm:$0xff]
        %v5618 = vld [vmem:[#allocation11 + $0x1f0] sm:$0xff]
        %v5619 = vld [vmem:[#allocation11 + $0x1f8] sm:$0xff]
        %v5620 = vld [vmem:[#allocation13] sm:$0x3]
        %v5622 = vlaneseq
        %v5623 = vshrl.u32 %v5622, 7
        %v5624 = vsub.s32 0, %v5623
        %v5625 = vrot.slane %v5620, %v5624
        %v5626 = vlaneseq
        %v5627 = vshrl.u32 %v5626, 7
        %v5628 = vsub.s32 1, %v5627
        %v5629 = vrot.slane %v5620, %v5628
        %v5696 = vunpack.c.l.b16 %v5556
        %v5697 = vunpack.c.h.b16 %v5556
        %v5698 = vunpack.c.l.b16 %v5557
        %v5699 = vunpack.c.h.b16 %v5557
        %v5700 = vunpack.c.l.b16 %v5558
        %v5701 = vunpack.c.h.b16 %v5558
        %v5702 = vunpack.c.l.b16 %v5559
        %v5703 = vunpack.c.h.b16 %v5559
        %v5704 = vunpack.c.l.b16 %v5560
        %v5705 = vunpack.c.h.b16 %v5560
        %v5706 = vunpack.c.l.b16 %v5561
        %v5707 = vunpack.c.h.b16 %v5561
        %v5708 = vunpack.c.l.b16 %v5562
        %v5709 = vunpack.c.h.b16 %v5562
        %v5710 = vunpack.c.l.b16 %v5563
        %v5711 = vunpack.c.h.b16 %v5563
        %v5712 = vunpack.c.l.b16 %v5564
        %v5713 = vunpack.c.h.b16 %v5564
        %v5714 = vunpack.c.l.b16 %v5565
        %v5715 = vunpack.c.h.b16 %v5565
        %v5716 = vunpack.c.l.b16 %v5566
        %v5717 = vunpack.c.h.b16 %v5566
        %v5718 = vunpack.c.l.b16 %v5567
        %v5719 = vunpack.c.h.b16 %v5567
        %v5720 = vunpack.c.l.b16 %v5568
        %v5721 = vunpack.c.h.b16 %v5568
        %v5722 = vunpack.c.l.b16 %v5569
        %v5723 = vunpack.c.h.b16 %v5569
        %v5724 = vunpack.c.l.b16 %v5570
        %v5725 = vunpack.c.h.b16 %v5570
        %v5726 = vunpack.c.l.b16 %v5571
        %v5727 = vunpack.c.h.b16 %v5571
        %v5728 = vunpack.c.l.b16 %v5572
        %v5729 = vunpack.c.h.b16 %v5572
        %v5730 = vunpack.c.l.b16 %v5573
        %v5731 = vunpack.c.h.b16 %v5573
        %v5732 = vunpack.c.l.b16 %v5574
        %v5733 = vunpack.c.h.b16 %v5574
        %v5734 = vunpack.c.l.b16 %v5575
        %v5735 = vunpack.c.h.b16 %v5575
        %v5736 = vunpack.c.l.b16 %v5576
        %v5737 = vunpack.c.h.b16 %v5576
        %v5738 = vunpack.c.l.b16 %v5577
        %v5739 = vunpack.c.h.b16 %v5577
        %v5740 = vunpack.c.l.b16 %v5578
        %v5741 = vunpack.c.h.b16 %v5578
        %v5742 = vunpack.c.l.b16 %v5579
        %v5743 = vunpack.c.h.b16 %v5579
        %v5744 = vunpack.c.l.b16 %v5580
        %v5745 = vunpack.c.h.b16 %v5580
        %v5746 = vunpack.c.l.b16 %v5581
        %v5747 = vunpack.c.h.b16 %v5581
        %v5748 = vunpack.c.l.b16 %v5582
        %v5749 = vunpack.c.h.b16 %v5582
        %v5750 = vunpack.c.l.b16 %v5583
        %v5751 = vunpack.c.h.b16 %v5583
        %v5752 = vunpack.c.l.b16 %v5584
        %v5753 = vunpack.c.h.b16 %v5584
        %v5754 = vunpack.c.l.b16 %v5585
        %v5755 = vunpack.c.h.b16 %v5585
        %v5756 = vunpack.c.l.b16 %v5586
        %v5757 = vunpack.c.h.b16 %v5586
        %v5758 = vunpack.c.l.b16 %v5587
        %v5759 = vunpack.c.h.b16 %v5587
        %v5760 = vunpack.c.l.b16 %v5588
        %v5761 = vunpack.c.h.b16 %v5588
        %v5762 = vunpack.c.l.b16 %v5589
        %v5763 = vunpack.c.h.b16 %v5589
        %v5764 = vunpack.c.l.b16 %v5590
        %v5765 = vunpack.c.h.b16 %v5590
        %v5766 = vunpack.c.l.b16 %v5591
        %v5767 = vunpack.c.h.b16 %v5591
        %v5768 = vunpack.c.l.b16 %v5592
        %v5769 = vunpack.c.h.b16 %v5592
        %v5770 = vunpack.c.l.b16 %v5593
        %v5771 = vunpack.c.h.b16 %v5593
        %v5772 = vunpack.c.l.b16 %v5594
        %v5773 = vunpack.c.h.b16 %v5594
        %v5774 = vunpack.c.l.b16 %v5595
        %v5775 = vunpack.c.h.b16 %v5595
        %v5776 = vunpack.c.l.b16 %v5596
        %v5777 = vunpack.c.h.b16 %v5596
        %v5778 = vunpack.c.l.b16 %v5597
        %v5779 = vunpack.c.h.b16 %v5597
        %v5780 = vunpack.c.l.b16 %v5598
        %v5781 = vunpack.c.h.b16 %v5598
        %v5782 = vunpack.c.l.b16 %v5599
        %v5783 = vunpack.c.h.b16 %v5599
        %v5784 = vunpack.c.l.b16 %v5600
        %v5785 = vunpack.c.h.b16 %v5600
        %v5786 = vunpack.c.l.b16 %v5601
        %v5787 = vunpack.c.h.b16 %v5601
        %v5788 = vunpack.c.l.b16 %v5602
        %v5789 = vunpack.c.h.b16 %v5602
        %v5790 = vunpack.c.l.b16 %v5603
        %v5791 = vunpack.c.h.b16 %v5603
        %v5792 = vunpack.c.l.b16 %v5604
        %v5793 = vunpack.c.h.b16 %v5604
        %v5794 = vunpack.c.l.b16 %v5605
        %v5795 = vunpack.c.h.b16 %v5605
        %v5796 = vunpack.c.l.b16 %v5606
        %v5797 = vunpack.c.h.b16 %v5606
        %v5798 = vunpack.c.l.b16 %v5607
        %v5799 = vunpack.c.h.b16 %v5607
        %v5800 = vunpack.c.l.b16 %v5608
        %v5801 = vunpack.c.h.b16 %v5608
        %v5802 = vunpack.c.l.b16 %v5609
        %v5803 = vunpack.c.h.b16 %v5609
        %v5804 = vunpack.c.l.b16 %v5610
        %v5805 = vunpack.c.h.b16 %v5610
        %v5806 = vunpack.c.l.b16 %v5611
        %v5807 = vunpack.c.h.b16 %v5611
        %v5808 = vunpack.c.l.b16 %v5612
        %v5809 = vunpack.c.h.b16 %v5612
        %v5810 = vunpack.c.l.b16 %v5613
        %v5811 = vunpack.c.h.b16 %v5613
        %v5812 = vunpack.c.l.b16 %v5614
        %v5813 = vunpack.c.h.b16 %v5614
        %v5814 = vunpack.c.l.b16 %v5615
        %v5815 = vunpack.c.h.b16 %v5615
        %v5816 = vunpack.c.l.b16 %v5616
        %v5817 = vunpack.c.h.b16 %v5616
        %v5818 = vunpack.c.l.b16 %v5617
        %v5819 = vunpack.c.h.b16 %v5617
        %v5820 = vunpack.c.l.b16 %v5618
        %v5821 = vunpack.c.h.b16 %v5618
        %v5822 = vunpack.c.l.b16 %v5619
        %v5823 = vunpack.c.h.b16 %v5619
        %v5824 = vpack.c.b16 %v5698, %v5696
        %v5825 = vpack.c.b16 %v5699, %v5697
        %v5826 = vpack.c.b16 %v5702, %v5700
        %v5827 = vpack.c.b16 %v5703, %v5701
        %v5828 = vpack.c.b16 %v5706, %v5704
        %v5829 = vpack.c.b16 %v5707, %v5705
        %v5830 = vpack.c.b16 %v5710, %v5708
        %v5831 = vpack.c.b16 %v5711, %v5709
        %v5832 = vpack.c.b16 %v5714, %v5712
        %v5833 = vpack.c.b16 %v5715, %v5713
        %v5834 = vpack.c.b16 %v5718, %v5716
        %v5835 = vpack.c.b16 %v5719, %v5717
        %v5836 = vpack.c.b16 %v5722, %v5720
        %v5837 = vpack.c.b16 %v5723, %v5721
        %v5838 = vpack.c.b16 %v5726, %v5724
        %v5839 = vpack.c.b16 %v5727, %v5725
        %v5840 = vpack.c.b16 %v5730, %v5728
        %v5841 = vpack.c.b16 %v5731, %v5729
        %v5842 = vpack.c.b16 %v5734, %v5732
        %v5843 = vpack.c.b16 %v5735, %v5733
        %v5844 = vpack.c.b16 %v5738, %v5736
        %v5845 = vpack.c.b16 %v5739, %v5737
        %v5846 = vpack.c.b16 %v5742, %v5740
        %v5847 = vpack.c.b16 %v5743, %v5741
        %v5848 = vpack.c.b16 %v5746, %v5744
        %v5849 = vpack.c.b16 %v5747, %v5745
        %v5850 = vpack.c.b16 %v5750, %v5748
        %v5851 = vpack.c.b16 %v5751, %v5749
        %v5852 = vpack.c.b16 %v5754, %v5752
        %v5853 = vpack.c.b16 %v5755, %v5753
        %v5854 = vpack.c.b16 %v5758, %v5756
        %v5855 = vpack.c.b16 %v5759, %v5757
        %v5856 = vpack.c.b16 %v5762, %v5760
        %v5857 = vpack.c.b16 %v5763, %v5761
        %v5858 = vpack.c.b16 %v5766, %v5764
        %v5859 = vpack.c.b16 %v5767, %v5765
        %v5860 = vpack.c.b16 %v5770, %v5768
        %v5861 = vpack.c.b16 %v5771, %v5769
        %v5862 = vpack.c.b16 %v5774, %v5772
        %v5863 = vpack.c.b16 %v5775, %v5773
        %v5864 = vpack.c.b16 %v5778, %v5776
        %v5865 = vpack.c.b16 %v5779, %v5777
        %v5866 = vpack.c.b16 %v5782, %v5780
        %v5867 = vpack.c.b16 %v5783, %v5781
        %v5868 = vpack.c.b16 %v5786, %v5784
        %v5869 = vpack.c.b16 %v5787, %v5785
        %v5870 = vpack.c.b16 %v5790, %v5788
        %v5871 = vpack.c.b16 %v5791, %v5789
        %v5872 = vpack.c.b16 %v5794, %v5792
        %v5873 = vpack.c.b16 %v5795, %v5793
        %v5874 = vpack.c.b16 %v5798, %v5796
        %v5875 = vpack.c.b16 %v5799, %v5797
        %v5876 = vpack.c.b16 %v5802, %v5800
        %v5877 = vpack.c.b16 %v5803, %v5801
        %v5878 = vpack.c.b16 %v5806, %v5804
        %v5879 = vpack.c.b16 %v5807, %v5805
        %v5880 = vpack.c.b16 %v5810, %v5808
        %v5881 = vpack.c.b16 %v5811, %v5809
        %v5882 = vpack.c.b16 %v5814, %v5812
        %v5883 = vpack.c.b16 %v5815, %v5813
        %v5884 = vpack.c.b16 %v5818, %v5816
        %v5885 = vpack.c.b16 %v5819, %v5817
        %v5886 = vpack.c.b16 %v5822, %v5820
        %v5887 = vpack.c.b16 %v5823, %v5821
        %5952 = vmatprep.subr.bf16.mxu0 %v5839
        %5953 = vmatpush1.bf16.msra.mxu0 %v5838
        %5954 = vmatprep.subr.bf16.mxu0 %v5837
        %5955 = vmatpush1.bf16.msra.mxu0 %v5836
        %5956 = vmatprep.subr.bf16.mxu0 %v5835
        %5957 = vmatpush1.bf16.msra.mxu0 %v5834
        %5958 = vmatprep.subr.bf16.mxu0 %v5833
        %5959 = vmatpush1.bf16.msra.mxu0 %v5832
        %5960 = vmatprep.subr.bf16.mxu0 %v5831
        %5961 = vmatpush1.bf16.msra.mxu0 %v5830
        %5962 = vmatprep.subr.bf16.mxu0 %v5829
        %5963 = vmatpush1.bf16.msra.mxu0 %v5828
        %5964 = vmatprep.subr.bf16.mxu0 %v5827
        %5965 = vmatpush1.bf16.msra.mxu0 %v5826
        %5966 = vmatprep.subr.bf16.mxu0 %v5825
        %5967 = vmatpush1.bf16.msra.mxu0 %v5824
        %5968 = vmatprep.subr.bf16.mxu0 %v5855
        %5969 = vmatpush2.bf16.msra.mxu0 %v5854
        %5970 = vmatprep.subr.bf16.mxu0 %v5853
        %5971 = vmatpush2.bf16.msra.mxu0 %v5852
        %5972 = vmatprep.subr.bf16.mxu0 %v5851
        %5973 = vmatpush2.bf16.msra.mxu0 %v5850
        %5974 = vmatprep.subr.bf16.mxu0 %v5849
        %5975 = vmatpush2.bf16.msra.mxu0 %v5848
        %5976 = vmatprep.subr.bf16.mxu0 %v5847
        %5977 = vmatpush2.bf16.msra.mxu0 %v5846
        %5978 = vmatprep.subr.bf16.mxu0 %v5845
        %5979 = vmatpush2.bf16.msra.mxu0 %v5844
        %5980 = vmatprep.subr.bf16.mxu0 %v5843
        %5981 = vmatpush2.bf16.msra.mxu0 %v5842
        %5982 = vmatprep.subr.bf16.mxu0 %v5841
        %5983 = vmatpush2.bf16.msra.mxu0 %v5840
        %5984 = vmatprep.mubr.bf16.mxu0 %v5553
        %5985 = vmatmul.mubr.bf16.gmra.mxu0 %v5552
        %v5986 = vpop.f32.mrf.mxu0
        %v5987 = vadd.f32 %v5625, %v5986
        %v5988 = vpop.f32.mrf.mxu0
        %v5989 = vadd.f32 %v5629, %v5988
        %v5990 = vpop.f32.mrf.mxu0
        %v5991 = vadd.f32 %v5625, %v5990
        %v5992 = vpop.f32.mrf.mxu0
        %v5993 = vadd.f32 %v5629, %v5992
        %5994 = vdwg.mxu0
        %5995 = vmatprep.subr.bf16.mxu0 %v5871
        %5996 = vmatpush1.bf16.msra.mxu0 %v5870
        %5997 = vmatprep.subr.bf16.mxu0 %v5869
        %5998 = vmatpush1.bf16.msra.mxu0 %v5868
        %5999 = vmatprep.subr.bf16.mxu0 %v5867
        %6000 = vmatpush1.bf16.msra.mxu0 %v5866
        %6001 = vmatprep.subr.bf16.mxu0 %v5865
        %6002 = vmatpush1.bf16.msra.mxu0 %v5864
        %6003 = vmatprep.subr.bf16.mxu0 %v5863
        %6004 = vmatpush1.bf16.msra.mxu0 %v5862
        %6005 = vmatprep.subr.bf16.mxu0 %v5861
        %6006 = vmatpush1.bf16.msra.mxu0 %v5860
        %6007 = vmatprep.subr.bf16.mxu0 %v5859
        %6008 = vmatpush1.bf16.msra.mxu0 %v5858
        %6009 = vmatprep.subr.bf16.mxu0 %v5857
        %6010 = vmatpush1.bf16.msra.mxu0 %v5856
        %6011 = vmatprep.subr.bf16.mxu0 %v5887
        %6012 = vmatpush2.bf16.msra.mxu0 %v5886
        %6013 = vmatprep.subr.bf16.mxu0 %v5885
        %6014 = vmatpush2.bf16.msra.mxu0 %v5884
        %6015 = vmatprep.subr.bf16.mxu0 %v5883
        %6016 = vmatpush2.bf16.msra.mxu0 %v5882
        %6017 = vmatprep.subr.bf16.mxu0 %v5881
        %6018 = vmatpush2.bf16.msra.mxu0 %v5880
        %6019 = vmatprep.subr.bf16.mxu0 %v5879
        %6020 = vmatpush2.bf16.msra.mxu0 %v5878
        %6021 = vmatprep.subr.bf16.mxu0 %v5877
        %6022 = vmatpush2.bf16.msra.mxu0 %v5876
        %6023 = vmatprep.subr.bf16.mxu0 %v5875
        %6024 = vmatpush2.bf16.msra.mxu0 %v5874
        %6025 = vmatprep.subr.bf16.mxu0 %v5873
        %6026 = vmatpush2.bf16.msra.mxu0 %v5872
        %6027 = vmatprep.mubr.bf16.mxu0 %v5555
        %6028 = vmatmul.mubr.bf16.gmra.mxu0 %v5554
        %v6029 = vpop.f32.mrf.mxu0
        %v6030 = vadd.f32 %v5987, %v6029
        %v6031 = vpop.f32.mrf.mxu0
        %v6032 = vadd.f32 %v5989, %v6031
        %v6033 = vpop.f32.mrf.mxu0
        %v6034 = vadd.f32 %v5991, %v6033
        %v6035 = vpop.f32.mrf.mxu0
        %v6036 = vadd.f32 %v5993, %v6035
        %6037 = vdwg.mxu0
        %vm6038 = vcmp.gt.f32.partialorder %v6030, 0.0
        %vm6039 = vcmp.gt.f32.partialorder %v6032, 0.0
        %vm6040 = vcmp.gt.f32.partialorder %v6034, 0.0
        %vm6041 = vcmp.gt.f32.partialorder %v6036, 0.0
        %v6042 = vmul.f32 %v6030, 0.2
        %v6043 = vmul.f32 %v6032, 0.2
        %v6044 = vmul.f32 %v6034, 0.2
        %v6045 = vmul.f32 %v6036, 0.2
        %v6046 = vsel %vm6038, %v6030, %v6042
        %v6047 = vsel %vm6039, %v6032, %v6043
        %v6048 = vsel %vm6040, %v6034, %v6044
        %v6049 = vsel %vm6041, %v6036, %v6045
        %v6050 = vpack.c.bf16 %v6048, %v6046
        %v6051 = vpack.c.bf16 %v6049, %v6047
        %v6052 = vld [vmem:[#allocation14] sm:$0xf]
        %v6053 = vld [vmem:[#allocation14 + $0x4] sm:$0xf]
        %v6054 = vld [vmem:[#allocation14 + $0x8] sm:$0xf]
        %v6055 = vld [vmem:[#allocation14 + $0xc] sm:$0xf]
        %v6056 = vld [vmem:[#allocation14 + $0x10] sm:$0xf]
        %v6057 = vld [vmem:[#allocation14 + $0x14] sm:$0xf]
        %v6058 = vld [vmem:[#allocation14 + $0x18] sm:$0xf]
        %v6059 = vld [vmem:[#allocation14 + $0x1c] sm:$0xf]
        %v6060 = vld [vmem:[#allocation14 + $0x20] sm:$0xf]
        %v6061 = vld [vmem:[#allocation14 + $0x24] sm:$0xf]
        %v6062 = vld [vmem:[#allocation14 + $0x28] sm:$0xf]
        %v6063 = vld [vmem:[#allocation14 + $0x2c] sm:$0xf]
        %v6064 = vld [vmem:[#allocation14 + $0x30] sm:$0xf]
        %v6065 = vld [vmem:[#allocation14 + $0x34] sm:$0xf]
        %v6066 = vld [vmem:[#allocation14 + $0x38] sm:$0xf]
        %v6067 = vld [vmem:[#allocation14 + $0x3c] sm:$0xf]
        %v6068 = vld [vmem:[#allocation14 + $0x40] sm:$0xf]
        %v6069 = vld [vmem:[#allocation14 + $0x44] sm:$0xf]
        %v6070 = vld [vmem:[#allocation14 + $0x48] sm:$0xf]
        %v6071 = vld [vmem:[#allocation14 + $0x4c] sm:$0xf]
        %v6072 = vld [vmem:[#allocation14 + $0x50] sm:$0xf]
        %v6073 = vld [vmem:[#allocation14 + $0x54] sm:$0xf]
        %v6074 = vld [vmem:[#allocation14 + $0x58] sm:$0xf]
        %v6075 = vld [vmem:[#allocation14 + $0x5c] sm:$0xf]
        %v6076 = vld [vmem:[#allocation14 + $0x60] sm:$0xf]
        %v6077 = vld [vmem:[#allocation14 + $0x64] sm:$0xf]
        %v6078 = vld [vmem:[#allocation14 + $0x68] sm:$0xf]
        %v6079 = vld [vmem:[#allocation14 + $0x6c] sm:$0xf]
        %v6080 = vld [vmem:[#allocation14 + $0x70] sm:$0xf]
        %v6081 = vld [vmem:[#allocation14 + $0x74] sm:$0xf]
        %v6082 = vld [vmem:[#allocation14 + $0x78] sm:$0xf]
        %v6083 = vld [vmem:[#allocation14 + $0x7c] sm:$0xf]
        %v6084 = vld [vmem:[#allocation16] sm:$0x1]
        %v6086 = vlaneseq
        %v6087 = vshrl.u32 %v6086, 7
        %v6088 = vsub.s32 0, %v6087
        %v6089 = vrot.slane %v6084, %v6088
        %v6123 = vunpack.c.l.b16 %v6052
        %v6124 = vunpack.c.l.b16 %v6053
        %v6125 = vunpack.c.l.b16 %v6054
        %v6126 = vunpack.c.l.b16 %v6055
        %v6127 = vunpack.c.l.b16 %v6056
        %v6128 = vunpack.c.l.b16 %v6057
        %v6129 = vunpack.c.l.b16 %v6058
        %v6130 = vunpack.c.l.b16 %v6059
        %v6131 = vunpack.c.l.b16 %v6060
        %v6132 = vunpack.c.l.b16 %v6061
        %v6133 = vunpack.c.l.b16 %v6062
        %v6134 = vunpack.c.l.b16 %v6063
        %v6135 = vunpack.c.l.b16 %v6064
        %v6136 = vunpack.c.l.b16 %v6065
        %v6137 = vunpack.c.l.b16 %v6066
        %v6138 = vunpack.c.l.b16 %v6067
        %v6139 = vunpack.c.l.b16 %v6068
        %v6140 = vunpack.c.l.b16 %v6069
        %v6141 = vunpack.c.l.b16 %v6070
        %v6142 = vunpack.c.l.b16 %v6071
        %v6143 = vunpack.c.l.b16 %v6072
        %v6144 = vunpack.c.l.b16 %v6073
        %v6145 = vunpack.c.l.b16 %v6074
        %v6146 = vunpack.c.l.b16 %v6075
        %v6147 = vunpack.c.l.b16 %v6076
        %v6148 = vunpack.c.l.b16 %v6077
        %v6149 = vunpack.c.l.b16 %v6078
        %v6150 = vunpack.c.l.b16 %v6079
        %v6151 = vunpack.c.l.b16 %v6080
        %v6152 = vunpack.c.l.b16 %v6081
        %v6153 = vunpack.c.l.b16 %v6082
        %v6154 = vunpack.c.l.b16 %v6083
        %v6155 = vpack.c.b16 %v6124, %v6123
        %v6156 = vpack.c.b16 %v6126, %v6125
        %v6157 = vpack.c.b16 %v6128, %v6127
        %v6158 = vpack.c.b16 %v6130, %v6129
        %v6159 = vpack.c.b16 %v6132, %v6131
        %v6160 = vpack.c.b16 %v6134, %v6133
        %v6161 = vpack.c.b16 %v6136, %v6135
        %v6162 = vpack.c.b16 %v6138, %v6137
        %v6163 = vpack.c.b16 %v6140, %v6139
        %v6164 = vpack.c.b16 %v6142, %v6141
        %v6165 = vpack.c.b16 %v6144, %v6143
        %v6166 = vpack.c.b16 %v6146, %v6145
        %v6167 = vpack.c.b16 %v6148, %v6147
        %v6168 = vpack.c.b16 %v6150, %v6149
        %v6169 = vpack.c.b16 %v6152, %v6151
        %v6170 = vpack.c.b16 %v6154, %v6153
        %6187 = vmatprep.subr.bf16.mxu0 0
        %6188 = vmatpush1.bf16.msra.mxu0 %v6162
        %6189 = vmatprep.subr.bf16.mxu0 0
        %6190 = vmatpush1.bf16.msra.mxu0 %v6161
        %6191 = vmatprep.subr.bf16.mxu0 0
        %6192 = vmatpush1.bf16.msra.mxu0 %v6160
        %6193 = vmatprep.subr.bf16.mxu0 0
        %6194 = vmatpush1.bf16.msra.mxu0 %v6159
        %6195 = vmatprep.subr.bf16.mxu0 0
        %6196 = vmatpush1.bf16.msra.mxu0 %v6158
        %6197 = vmatprep.subr.bf16.mxu0 0
        %6198 = vmatpush1.bf16.msra.mxu0 %v6157
        %6199 = vmatprep.subr.bf16.mxu0 0
        %6200 = vmatpush1.bf16.msra.mxu0 %v6156
        %6201 = vmatprep.subr.bf16.mxu0 0
        %6202 = vmatpush1.bf16.msra.mxu0 %v6155
        %6203 = vmatprep.subr.bf16.mxu0 0
        %6204 = vmatpush2.bf16.msra.mxu0 %v6170
        %6205 = vmatprep.subr.bf16.mxu0 0
        %6206 = vmatpush2.bf16.msra.mxu0 %v6169
        %6207 = vmatprep.subr.bf16.mxu0 0
        %6208 = vmatpush2.bf16.msra.mxu0 %v6168
        %6209 = vmatprep.subr.bf16.mxu0 0
        %6210 = vmatpush2.bf16.msra.mxu0 %v6167
        %6211 = vmatprep.subr.bf16.mxu0 0
        %6212 = vmatpush2.bf16.msra.mxu0 %v6166
        %6213 = vmatprep.subr.bf16.mxu0 0
        %6214 = vmatpush2.bf16.msra.mxu0 %v6165
        %6215 = vmatprep.subr.bf16.mxu0 0
        %6216 = vmatpush2.bf16.msra.mxu0 %v6164
        %6217 = vmatprep.subr.bf16.mxu0 0
        %6218 = vmatpush2.bf16.msra.mxu0 %v6163
        %6219 = vmatprep.mubr.bf16.mxu0 %v6051
        %6220 = vmatmul.mubr.bf16.gmra.mxu0 %v6050
        %v6221 = vpop.f32.mrf.mxu0
        %v6222 = vadd.f32 %v6089, %v6221
        %v6223 = vpop.f32.mrf.mxu0
        %v6224 = vpop.f32.mrf.mxu0
        %v6225 = vadd.f32 %v6089, %v6224
        %v6226 = vpop.f32.mrf.mxu0
        %6227 = vdwg.mxu0
        %v6228 = vsub.f32 0.0, %v6222
        %v6229 = vsub.f32 0.0, %v6225
        %v6230 = vmul.f32 %v6228, 1.442695
        %v6231 = vpow.pop %v6230
        %v6232 = vmul.f32 %v6229, 1.442695
        %v6233 = vpow.pop %v6232
        %v6234 = vadd.f32 %v6231, 1.0
        %v6235 = vadd.f32 %v6233, 1.0
        %v6236 = vrcp.pop %v6234
        %v6237 = vrcp.pop %v6235
        %v6238 = vpack.c.bf16 %v6237, %v6236
        %v6240 = vunpack.c.l.b16 %v6238
        %v6241 = vunpack.c.h.b16 %v6238
        %v6242 = vpack.c.b16 %v6240, %v6240
        %v6243 = vpack.c.b16 %v6241, %v6241
        %6246 = vst [vmem:[%s459] sm:$0xf] %v6242
        %6247 = vst [vmem:[%s459 + $0x4] sm:$0xf] %v6243
        %s6248 = sand.u32 %s232, 1
        %s6249 = scalar_lea.sflag [#allocation4], %s6248
        %s6250 = sand.u32 %s232, 1
        %s6251 = smul.addr %s6250, 8
        %s6252 = scalar_lea.vmem [#allocation17], %s6251
        // Predicated region
        $region93: #{tpu_custom_call.1} parent=55 // pred_check
          %p6253 = pneg %p242
        $region94: #{tpu_custom_call.1} parent=55 // pred_check_branch
          %6255 = sbr.rel (%p6253) target = $region96
        $region95: #{tpu_custom_call.1} parent=55 // pred_region
          %s6256 = smul.u32 2, %s30
          %s6258 = ssub.s32 128, 128
          %6259 = vsyncadd %s6249, %s6258
          %s6260 = smul.addr %s6256, 64
          %s6261 = scalar_lea.hbm %s9, %s6260
          %s6262 = sshll.u32 %s6252, 4
          %s6263 = int_to_ptr.vmem [resolvable:$true] %s6262
          %6268 = dma.vmem_to_hbm [thread:$0]  %s6263, 128, %s6261, %s6249, 64, 64, 4
        $region96: #{tpu_custom_call.1} parent=55 // pred_fallthru
          _
      $region56: #{tpu_custom_call.1} parent=5 // pred_fallthru
        _
      %p6269 = scmp.le.s32.totalorder 2, %s25
      // Predicated region
      $region97: #{tpu_custom_call.1} parent=5 // pred_check
        %p6270 = pneg %p6269
      $region98: #{tpu_custom_call.1} parent=5 // pred_check_branch
        %6272 = sbr.rel (%p6270) target = $region100
      $region99: #{tpu_custom_call.1} parent=5 // pred_region
        %s6273 = ssub.s32 %s25, 2
        // Predicated region
        $region101: #{tpu_custom_call.1} parent=99 // pred_check
          %p6274 = pneg %p248
        $region102: #{tpu_custom_call.1} parent=99 // pred_check_branch
          %6276 = sbr.rel (%p6274) target = $region104
        $region103: #{tpu_custom_call.1} parent=99 // pred_region
          %s6277 = sand.u32 %s233, 1
          %s6278 = scalar_lea.sflag [#allocation4], %s6277
          %s6279 = sand.u32 %s233, 1
          %s6280 = smul.addr %s6279, 8
          %s6281 = scalar_lea.vmem [#allocation17], %s6280
          %6282 = dma.done %s6278, 128
        $region104: #{tpu_custom_call.1} parent=99 // pred_fallthru
          _
      $region100: #{tpu_custom_call.1} parent=5 // pred_fallthru
        _
    $region6: #{tpu_custom_call.1} parent=1 // loop_footer
      %s29 = sadd.s32 1, %s25
    $region7: #{tpu_custom_call.1} parent=1 // loop_footer_branch
      %24 = sbr.rel target = $region3
    $region8: #{tpu_custom_call.1} parent=1 // loop_exit
      _
    %6283 = vsyncpa [#allocation3], 1
    %s6284 = scalar_lea.sflag [#allocation3], 1
    %6285 = vsyncpa %s6284, 1
    %6286 = vsyncpa [#allocation6], 1
    %6287 = vsyncpa [#allocation9], 1
    %6288 = vsyncpa [#allocation12], 1
    %6289 = vsyncpa [#allocation15], 1
    %6290 = vsyncpa [#allocation4], 1
    %s6291 = scalar_lea.sflag [#allocation4], 1
    %6292 = vsyncpa %s6291, 1

</llo_original>
